<compile_context>
chip_gen: v6e
topology: v6e:2x2x1
jax: 0.10.0
libtpu: 0.0.40
codegen_flags: <defaults>
</compile_context>

<pallas_src>
import jax
import jax.numpy as jnp
from jax import lax
from jax.experimental import pallas as pl
from jax.experimental.pallas import tpu as pltpu


# ---------------------------------------------------------------------------
# Fused kernel
# ---------------------------------------------------------------------------
def _make_fused_block_kernel(W, L1, Lout, C1, K2, Kd):
    """W: row pitch of the flattened spatial (lane) axis.
    L1 / Lout: 'wide' lengths of the intermediate / final activations
    (row pitch W; trailing columns of each row are don't-care).
    C1: channels of the conv1 output (top rows of the stacked accumulator)."""

    def kernel(x_ref, w1d_ref, b1d_ref, w2_ref, b2_ref, o_ref):
        # x_ref:   (1, Cin, Lx)            f32
        # w1d_ref: (Kd*Kd, C1+C2, Cin)     bf16   conv1+downsample taps, BN folded
        # b1d_ref: (C1+C2, 1)              f32    [bn1 bias ; bn_ds bias]
        # w2_ref:  (K2*K2, C2, C1)         bf16   conv2 taps, BN folded
        # b2_ref:  (C2, 1)                 f32
        # o_ref:   (1, C2, Lout)           f32
        xb = x_ref[0].astype(jnp.bfloat16)               # cast once for the MXU

        # --- fused conv1 (3x3) + downsample conv (5x5), stacked output rows ---
        #   acc[:, p] += w[kh,kw] @ x[:, p + kh*W + kw]     (shifted-accumulate)
        ctot = w1d_ref.shape[1]
        acc = jnp.zeros((ctot, L1), jnp.float32)
        for kh in range(Kd):
            for kw in range(Kd):
                s = kh * W + kw
                xs = xb[:, s:s + L1]                      # contiguous lane slice
                acc = acc + jnp.dot(w1d_ref[kh * Kd + kw], xs,
                                    preferred_element_type=jnp.float32)
        acc = acc + b1d_ref[...]                          # bn1 + bn_ds biases

        h = jnp.maximum(acc[:C1], 0.0)                    # act1 (main path)
        res = acc[C1:, :Lout]                             # residual path (no relu)
        hb = h.astype(jnp.bfloat16)

        # --- conv2 (3x3) + bn2 ---
        c2 = w2_ref.shape[1]
        y = jnp.zeros((c2, Lout), jnp.float32)
        for kh in range(K2):
            for kw in range(K2):
                s = kh * W + kw
                y = y + jnp.dot(w2_ref[kh * K2 + kw], hb[:, s:s + Lout],
                                preferred_element_type=jnp.float32)
        y = y + b2_ref[...]

        # --- residual add + act2, single lane-dense store ---
        o_ref[0] = jnp.maximum(y + res, 0.0).astype(o_ref.dtype)

    return kernel


# ---------------------------------------------------------------------------
# Parameter prep (BN folding) and wrapper
# ---------------------------------------------------------------------------
def fold_bn(gamma, beta, mean, var, eps=1e-5):
    scale = gamma / jnp.sqrt(var + eps)
    bias = beta - mean * scale
    return scale, bias


def _prep_conv(w_oihw, gamma, beta, mean, var, eps=1e-5):
    """PyTorch OIHW conv weight + BN params ->
       (taps (K, K, Cout, Cin) f32 with BN scale folded in, bias (Cout, 1) f32)."""
    scale, bias = fold_bn(gamma, beta, mean, var, eps)
    cout, cin, kh, kw = w_oihw.shape
    w = w_oihw.astype(jnp.float32) * scale[:, None, None, None]
    taps = jnp.transpose(w, (2, 3, 0, 1))                # (K, K, Cout, Cin)
    return taps, bias.reshape(cout, 1).astype(jnp.float32)


def basic_block_forward(x_nchw, p, stride=1, eps=1e-5):
    if stride != 1:
        raise NotImplementedError("only stride=1 residual geometry is wired up")

    N, Cin, H, W = x_nchw.shape
    C1, K1 = p["w1"].shape[0], p["w1"].shape[-1]
    C2, K2 = p["w2"].shape[0], p["w2"].shape[-1]
    Kd = p["w_ds"].shape[-1]
    assert Kd >= K1, "fused tap loop assumes the downsample kernel covers conv1's"

    OH1, OW1 = H - K1 + 1, W - K1 + 1
    OH2, OW2 = OH1 - K2 + 1, OW1 - K2 + 1
    assert H - Kd + 1 == OH2 and W - Kd + 1 == OW2, "downsample must match main path"

    # "Wide" layout lengths: every conv just takes contiguous lane slices of its
    # input, so each stage needs (K-1)*(W+1) extra trailing columns of slack.
    # Lout is rounded up to a multiple of 128 for unmasked lane-dense stores.
    Lout = pl.cdiv(OH2 * W, 128) * 128            # final activations (valid cols < OW2)
    L1 = Lout + (K2 - 1) * (W + 1)                # intermediate h / residual accumulator
    Lx = L1 + (Kd - 1) * (W + 1)                  # padded flattened input

    # --- fold BN, stack conv1 into the 5x5 downsample tap grid ---
    w1t, b1 = _prep_conv(p["w1"], *p["bn1"], eps)        # (K1,K1,C1,Cin)
    w2t, b2 = _prep_conv(p["w2"], *p["bn2"], eps)        # (K2,K2,C2,C1)
    wdt, bd = _prep_conv(p["w_ds"], *p["bn_ds"], eps)    # (Kd,Kd,C2,Cin)

    w1_full = jnp.zeros((Kd, Kd, C1, Cin), jnp.float32).at[:K1, :K1].set(w1t)
    w1d = jnp.concatenate([w1_full, wdt], axis=2)        # (Kd,Kd,C1+C2,Cin)
    w1d = w1d.reshape(Kd * Kd, C1 + C2, Cin).astype(jnp.bfloat16)
    b1d = jnp.concatenate([b1, bd], axis=0)              # (C1+C2, 1)
    w2 = w2t.reshape(K2 * K2, C2, C1).astype(jnp.bfloat16)

    x_flat = x_nchw.astype(jnp.float32).reshape(N, Cin, H * W)   # free reshape (NCHW)
    x_wide = jnp.pad(x_flat, ((0, 0), (0, 0), (0, Lx - H * W)))  # tiny pad (slack cols)

    kernel = _make_fused_block_kernel(W, L1, Lout, C1, K2, Kd)

    flops = 2 * N * (Kd * Kd * (C1 + C2) * Cin * L1 + K2 * K2 * C1 * C2 * Lout)
    bytes_accessed = ((x_wide.size + N * C2 * Lout) * 4
                      + (w1d.size + w2.size) * 2 + (b1d.size + b2.size) * 4)

    out_wide = pl.pallas_call(
        kernel,
        out_shape=jax.ShapeDtypeStruct((N, C2, Lout), jnp.float32),
        grid_spec=pltpu.PrefetchScalarGridSpec(
            num_scalar_prefetch=0,
            grid=(N,),
            in_specs=[
                pl.BlockSpec((1, Cin, Lx), lambda n: (n, 0, 0)),
                pl.BlockSpec((Kd * Kd, C1 + C2, Cin), lambda n: (0, 0, 0)),
                pl.BlockSpec((C1 + C2, 1), lambda n: (0, 0)),
                pl.BlockSpec((K2 * K2, C2, C1), lambda n: (0, 0, 0)),
                pl.BlockSpec((C2, 1), lambda n: (0, 0)),
            ],
            out_specs=pl.BlockSpec((1, C2, Lout), lambda n: (n, 0, 0)),
        ),
        compiler_params=pltpu.CompilerParams(dimension_semantics=("parallel",)),
        cost_estimate=pl.CostEstimate(flops=flops, transcendentals=0,
                                      bytes_accessed=bytes_accessed),
    )(x_wide, w1d, b1d, w2, b2)

    # Drop pitch/lane slack: (N,C2,Lout) -> (N,C2,OH2,W) -> (N,C2,OH2,OW2). All free/tiny.
    return out_wide[:, :, :OH2 * W].reshape(N, C2, OH2, W)[:, :, :, :OW2]


# ---------------------------------------------------------------------------
# Pure-JAX reference (mirrors the kernel's numerics: bf16 MXU operands with BN
# scale folded into the weights, f32 accumulation, f32 bias/ReLU).
# ---------------------------------------------------------------------------
def basic_block_reference(x_nchw, p, stride=1, eps=1e-5):
    def conv(z_bf16, w_oihw_scaled, s):
        w_hwio = jnp.transpose(w_oihw_scaled, (2, 3, 1, 0)).astype(jnp.bfloat16)
        return lax.conv_general_dilated(
            z_bf16, w_hwio, (s, s), "VALID",
            dimension_numbers=("NCHW", "HWIO", "NCHW"),
            preferred_element_type=jnp.float32)

    def prep(w, gamma, beta, mean, var):
        scale, bias = fold_bn(gamma, beta, mean, var, eps)
        return w.astype(jnp.float32) * scale[:, None, None, None], bias[None, :, None, None]

    w1s, b1 = prep(p["w1"], *p["bn1"])
    w2s, b2 = prep(p["w2"], *p["bn2"])
    wds, bd = prep(p["w_ds"], *p["bn_ds"])

    xb = x_nchw.astype(jnp.bfloat16)
    res = conv(xb, wds, 1) + bd
    h = jnp.maximum(conv(xb, w1s, stride) + b1, 0.0)
    y = conv(h.astype(jnp.bfloat16), w2s, 1) + b2
    return jnp.maximum(y + res, 0.0)


# ---------------------------------------------------------------------------
if __name__ == "__main__":
    N, inplanes, H, W = 2, 4, 16, 16
    planes, stride = 4, 1
    outplanes = planes * 1  # expansion = 1

    key = jax.random.PRNGKey(0)
    keys = jax.random.split(key, 16)

    # Conv weights in PyTorch OIHW layout.
    w1 = 0.2 * jax.random.normal(keys[0], (planes, inplanes, 3, 3), jnp.float32)
    w2 = 0.2 * jax.random.normal(keys[1], (outplanes, planes, 3, 3), jnp.float32)
    wds = 0.2 * jax.random.normal(keys[2], (outplanes, inplanes, 5, 5), jnp.float32)

    def bn_params(kg, kb, km, kv, c):
        gamma = 1.0 + 0.1 * jax.random.normal(kg, (c,), jnp.float32)
        beta = 0.1 * jax.random.normal(kb, (c,), jnp.float32)
        mean = 0.1 * jax.random.normal(km, (c,), jnp.float32)
        var = 1.0 + 0.1 * jnp.abs(jax.random.normal(kv, (c,), jnp.float32))
        return (gamma, beta, mean, var)

    params = {
        "w1": w1,
        "w2": w2,
        "w_ds": wds,
        "bn1": bn_params(keys[3], keys[4], keys[5], keys[6], planes),
        "bn2": bn_params(keys[7], keys[8], keys[9], keys[10], outplanes),
        "bn_ds": bn_params(keys[11], keys[12], keys[13], keys[14], outplanes),
    }

    x = jax.random.normal(keys[15], (N, inplanes, H, W), jnp.float32)

    out = jax.block_until_ready(basic_block_forward(x, params, stride=stride))
    ref = basic_block_reference(x, params, stride=stride)

    assert out.shape == (N, outplanes, H - 4, W - 4), out.shape
    max_err = float(jnp.max(jnp.abs(out - ref)))
    # bf16 MXU operands in both kernel and reference; only accumulation order differs.
    assert jnp.allclose(out, ref, atol=2e-2, rtol=2e-2), f"max_err={max_err}"

    print("KERNEL_OK")
</pallas_src>

<mosaic_0001>
module attributes {stable_mosaic.version = 11 : i64} {
  func.func @kernel(%arg0: i32, %arg1: memref<1x4x358xf32, #tpu.memory_space<vmem>>, %arg2: memref<25x8x4xbf16, #tpu.memory_space<vmem>>, %arg3: memref<8x1xf32, #tpu.memory_space<vmem>>, %arg4: memref<9x4x4xbf16, #tpu.memory_space<vmem>>, %arg5: memref<4x1xf32, #tpu.memory_space<vmem>>, %arg6: memref<1x4x256xf32, #tpu.memory_space<vmem>>) attributes {dimension_semantics = [#tpu.dimension_semantics<parallel>], iteration_bounds = array<i64: 2>, scalar_prefetch = 0 : i64, scratch_operands = 0 : i64, tpu.core_type = #tpu.core_type<tc>, window_params = [{transform_indices = @transform_0, window_bounds = array<i64: 1, 4, 358>}, {pipeline_mode = #tpu.pipeline_mode<synchronous>, transform_indices = @transform_1, window_bounds = array<i64: 25, 8, 4>}, {pipeline_mode = #tpu.pipeline_mode<synchronous>, transform_indices = @transform_2, window_bounds = array<i64: 8, 1>}, {pipeline_mode = #tpu.pipeline_mode<synchronous>, transform_indices = @transform_3, window_bounds = array<i64: 9, 4, 4>}, {pipeline_mode = #tpu.pipeline_mode<synchronous>, transform_indices = @transform_4, window_bounds = array<i64: 4, 1>}, {transform_indices = @transform_5, window_bounds = array<i64: 1, 4, 256>}]} {
    %c0 = arith.constant 0 : index
    %c0_0 = arith.constant 0 : index
    %c0_1 = arith.constant 0 : index
    %0 = vector.load %arg1[%c0, %c0_0, %c0_1] : memref<1x4x358xf32, #tpu.memory_space<vmem>>, vector<1x4x358xf32>
    %1 = vector.shape_cast %0 : vector<1x4x358xf32> to vector<4x358xf32>
    %2 = arith.truncf %1 : vector<4x358xf32> to vector<4x358xbf16>
    %cst = arith.constant 0.000000e+00 : f32
    %3 = vector.broadcast %cst : f32 to vector<8x290xf32>
    %4 = vector.extract_strided_slice %2 {offsets = [0, 0], sizes = [4, 290], strides = [1, 1]} : vector<4x358xbf16> to vector<4x290xbf16>
    %c0_2 = arith.constant 0 : index
    %c0_3 = arith.constant 0 : index
    %c0_4 = arith.constant 0 : index
    %5 = vector.load %arg2[%c0_2, %c0_3, %c0_4] : memref<25x8x4xbf16, #tpu.memory_space<vmem>>, vector<1x8x4xbf16>
    %6 = vector.shape_cast %5 : vector<1x8x4xbf16> to vector<8x4xbf16>
    %cst_5 = arith.constant dense<0.000000e+00> : vector<8x290xf32>
    %7 = tpu.matmul %6, %4, %cst_5 {dimension_numbers = #tpu.dot_dimension_numbers<[1], [0], [0], [1], [0, 0, 1, 1], [], []>} : vector<8x4xbf16>, vector<4x290xbf16>, vector<8x290xf32> -> vector<8x290xf32>
    %8 = arith.addf %3, %7 : vector<8x290xf32>
    %9 = vector.extract_strided_slice %2 {offsets = [0, 1], sizes = [4, 290], strides = [1, 1]} : vector<4x358xbf16> to vector<4x290xbf16>
    %c1 = arith.constant 1 : index
    %c0_6 = arith.constant 0 : index
    %c0_7 = arith.constant 0 : index
    %10 = vector.load %arg2[%c1, %c0_6, %c0_7] : memref<25x8x4xbf16, #tpu.memory_space<vmem>>, vector<1x8x4xbf16>
    %11 = vector.shape_cast %10 : vector<1x8x4xbf16> to vector<8x4xbf16>
    %cst_8 = arith.constant dense<0.000000e+00> : vector<8x290xf32>
    %12 = tpu.matmul %11, %9, %cst_8 {dimension_numbers = #tpu.dot_dimension_numbers<[1], [0], [0], [1], [0, 0, 1, 1], [], []>} : vector<8x4xbf16>, vector<4x290xbf16>, vector<8x290xf32> -> vector<8x290xf32>
    %13 = arith.addf %8, %12 : vector<8x290xf32>
    %14 = vector.extract_strided_slice %2 {offsets = [0, 2], sizes = [4, 290], strides = [1, 1]} : vector<4x358xbf16> to vector<4x290xbf16>
    %c2 = arith.constant 2 : index
    %c0_9 = arith.constant 0 : index
    %c0_10 = arith.constant 0 : index
    %15 = vector.load %arg2[%c2, %c0_9, %c0_10] : memref<25x8x4xbf16, #tpu.memory_space<vmem>>, vector<1x8x4xbf16>
    %16 = vector.shape_cast %15 : vector<1x8x4xbf16> to vector<8x4xbf16>
    %cst_11 = arith.constant dense<0.000000e+00> : vector<8x290xf32>
    %17 = tpu.matmul %16, %14, %cst_11 {dimension_numbers = #tpu.dot_dimension_numbers<[1], [0], [0], [1], [0, 0, 1, 1], [], []>} : vector<8x4xbf16>, vector<4x290xbf16>, vector<8x290xf32> -> vector<8x290xf32>
    %18 = arith.addf %13, %17 : vector<8x290xf32>
    %19 = vector.extract_strided_slice %2 {offsets = [0, 3], sizes = [4, 290], strides = [1, 1]} : vector<4x358xbf16> to vector<4x290xbf16>
    %c3 = arith.constant 3 : index
    %c0_12 = arith.constant 0 : index
    %c0_13 = arith.constant 0 : index
    %20 = vector.load %arg2[%c3, %c0_12, %c0_13] : memref<25x8x4xbf16, #tpu.memory_space<vmem>>, vector<1x8x4xbf16>
    %21 = vector.shape_cast %20 : vector<1x8x4xbf16> to vector<8x4xbf16>
    %cst_14 = arith.constant dense<0.000000e+00> : vector<8x290xf32>
    %22 = tpu.matmul %21, %19, %cst_14 {dimension_numbers = #tpu.dot_dimension_numbers<[1], [0], [0], [1], [0, 0, 1, 1], [], []>} : vector<8x4xbf16>, vector<4x290xbf16>, vector<8x290xf32> -> vector<8x290xf32>
    %23 = arith.addf %18, %22 : vector<8x290xf32>
    %24 = vector.extract_strided_slice %2 {offsets = [0, 4], sizes = [4, 290], strides = [1, 1]} : vector<4x358xbf16> to vector<4x290xbf16>
    %c4 = arith.constant 4 : index
    %c0_15 = arith.constant 0 : index
    %c0_16 = arith.constant 0 : index
    %25 = vector.load %arg2[%c4, %c0_15, %c0_16] : memref<25x8x4xbf16, #tpu.memory_space<vmem>>, vector<1x8x4xbf16>
    %26 = vector.shape_cast %25 : vector<1x8x4xbf16> to vector<8x4xbf16>
    %cst_17 = arith.constant dense<0.000000e+00> : vector<8x290xf32>
    %27 = tpu.matmul %26, %24, %cst_17 {dimension_numbers = #tpu.dot_dimension_numbers<[1], [0], [0], [1], [0, 0, 1, 1], [], []>} : vector<8x4xbf16>, vector<4x290xbf16>, vector<8x290xf32> -> vector<8x290xf32>
    %28 = arith.addf %23, %27 : vector<8x290xf32>
    %29 = vector.extract_strided_slice %2 {offsets = [0, 16], sizes = [4, 290], strides = [1, 1]} : vector<4x358xbf16> to vector<4x290xbf16>
    %c5 = arith.constant 5 : index
    %c0_18 = arith.constant 0 : index
    %c0_19 = arith.constant 0 : index
    %30 = vector.load %arg2[%c5, %c0_18, %c0_19] : memref<25x8x4xbf16, #tpu.memory_space<vmem>>, vector<1x8x4xbf16>
    %31 = vector.shape_cast %30 : vector<1x8x4xbf16> to vector<8x4xbf16>
    %cst_20 = arith.constant dense<0.000000e+00> : vector<8x290xf32>
    %32 = tpu.matmul %31, %29, %cst_20 {dimension_numbers = #tpu.dot_dimension_numbers<[1], [0], [0], [1], [0, 0, 1, 1], [], []>} : vector<8x4xbf16>, vector<4x290xbf16>, vector<8x290xf32> -> vector<8x290xf32>
    %33 = arith.addf %28, %32 : vector<8x290xf32>
    %34 = vector.extract_strided_slice %2 {offsets = [0, 17], sizes = [4, 290], strides = [1, 1]} : vector<4x358xbf16> to vector<4x290xbf16>
    %c6 = arith.constant 6 : index
    %c0_21 = arith.constant 0 : index
    %c0_22 = arith.constant 0 : index
    %35 = vector.load %arg2[%c6, %c0_21, %c0_22] : memref<25x8x4xbf16, #tpu.memory_space<vmem>>, vector<1x8x4xbf16>
    %36 = vector.shape_cast %35 : vector<1x8x4xbf16> to vector<8x4xbf16>
    %cst_23 = arith.constant dense<0.000000e+00> : vector<8x290xf32>
    %37 = tpu.matmul %36, %34, %cst_23 {dimension_numbers = #tpu.dot_dimension_numbers<[1], [0], [0], [1], [0, 0, 1, 1], [], []>} : vector<8x4xbf16>, vector<4x290xbf16>, vector<8x290xf32> -> vector<8x290xf32>
    %38 = arith.addf %33, %37 : vector<8x290xf32>
    %39 = vector.extract_strided_slice %2 {offsets = [0, 18], sizes = [4, 290], strides = [1, 1]} : vector<4x358xbf16> to vector<4x290xbf16>
    %c7 = arith.constant 7 : index
    %c0_24 = arith.constant 0 : index
    %c0_25 = arith.constant 0 : index
    %40 = vector.load %arg2[%c7, %c0_24, %c0_25] : memref<25x8x4xbf16, #tpu.memory_space<vmem>>, vector<1x8x4xbf16>
    %41 = vector.shape_cast %40 : vector<1x8x4xbf16> to vector<8x4xbf16>
    %cst_26 = arith.constant dense<0.000000e+00> : vector<8x290xf32>
    %42 = tpu.matmul %41, %39, %cst_26 {dimension_numbers = #tpu.dot_dimension_numbers<[1], [0], [0], [1], [0, 0, 1, 1], [], []>} : vector<8x4xbf16>, vector<4x290xbf16>, vector<8x290xf32> -> vector<8x290xf32>
    %43 = arith.addf %38, %42 : vector<8x290xf32>
    %44 = vector.extract_strided_slice %2 {offsets = [0, 19], sizes = [4, 290], strides = [1, 1]} : vector<4x358xbf16> to vector<4x290xbf16>
    %c8 = arith.constant 8 : index
    %c0_27 = arith.constant 0 : index
    %c0_28 = arith.constant 0 : index
    %45 = vector.load %arg2[%c8, %c0_27, %c0_28] : memref<25x8x4xbf16, #tpu.memory_space<vmem>>, vector<1x8x4xbf16>
    %46 = vector.shape_cast %45 : vector<1x8x4xbf16> to vector<8x4xbf16>
    %cst_29 = arith.constant dense<0.000000e+00> : vector<8x290xf32>
    %47 = tpu.matmul %46, %44, %cst_29 {dimension_numbers = #tpu.dot_dimension_numbers<[1], [0], [0], [1], [0, 0, 1, 1], [], []>} : vector<8x4xbf16>, vector<4x290xbf16>, vector<8x290xf32> -> vector<8x290xf32>
    %48 = arith.addf %43, %47 : vector<8x290xf32>
    %49 = vector.extract_strided_slice %2 {offsets = [0, 20], sizes = [4, 290], strides = [1, 1]} : vector<4x358xbf16> to vector<4x290xbf16>
    %c9 = arith.constant 9 : index
    %c0_30 = arith.constant 0 : index
    %c0_31 = arith.constant 0 : index
    %50 = vector.load %arg2[%c9, %c0_30, %c0_31] : memref<25x8x4xbf16, #tpu.memory_space<vmem>>, vector<1x8x4xbf16>
    %51 = vector.shape_cast %50 : vector<1x8x4xbf16> to vector<8x4xbf16>
    %cst_32 = arith.constant dense<0.000000e+00> : vector<8x290xf32>
    %52 = tpu.matmul %51, %49, %cst_32 {dimension_numbers = #tpu.dot_dimension_numbers<[1], [0], [0], [1], [0, 0, 1, 1], [], []>} : vector<8x4xbf16>, vector<4x290xbf16>, vector<8x290xf32> -> vector<8x290xf32>
    %53 = arith.addf %48, %52 : vector<8x290xf32>
    %54 = vector.extract_strided_slice %2 {offsets = [0, 32], sizes = [4, 290], strides = [1, 1]} : vector<4x358xbf16> to vector<4x290xbf16>
    %c10 = arith.constant 10 : index
    %c0_33 = arith.constant 0 : index
    %c0_34 = arith.constant 0 : index
    %55 = vector.load %arg2[%c10, %c0_33, %c0_34] : memref<25x8x4xbf16, #tpu.memory_space<vmem>>, vector<1x8x4xbf16>
    %56 = vector.shape_cast %55 : vector<1x8x4xbf16> to vector<8x4xbf16>
    %cst_35 = arith.constant dense<0.000000e+00> : vector<8x290xf32>
    %57 = tpu.matmul %56, %54, %cst_35 {dimension_numbers = #tpu.dot_dimension_numbers<[1], [0], [0], [1], [0, 0, 1, 1], [], []>} : vector<8x4xbf16>, vector<4x290xbf16>, vector<8x290xf32> -> vector<8x290xf32>
    %58 = arith.addf %53, %57 : vector<8x290xf32>
    %59 = vector.extract_strided_slice %2 {offsets = [0, 33], sizes = [4, 290], strides = [1, 1]} : vector<4x358xbf16> to vector<4x290xbf16>
    %c11 = arith.constant 11 : index
    %c0_36 = arith.constant 0 : index
    %c0_37 = arith.constant 0 : index
    %60 = vector.load %arg2[%c11, %c0_36, %c0_37] : memref<25x8x4xbf16, #tpu.memory_space<vmem>>, vector<1x8x4xbf16>
    %61 = vector.shape_cast %60 : vector<1x8x4xbf16> to vector<8x4xbf16>
    %cst_38 = arith.constant dense<0.000000e+00> : vector<8x290xf32>
    %62 = tpu.matmul %61, %59, %cst_38 {dimension_numbers = #tpu.dot_dimension_numbers<[1], [0], [0], [1], [0, 0, 1, 1], [], []>} : vector<8x4xbf16>, vector<4x290xbf16>, vector<8x290xf32> -> vector<8x290xf32>
    %63 = arith.addf %58, %62 : vector<8x290xf32>
    %64 = vector.extract_strided_slice %2 {offsets = [0, 34], sizes = [4, 290], strides = [1, 1]} : vector<4x358xbf16> to vector<4x290xbf16>
    %c12 = arith.constant 12 : index
    %c0_39 = arith.constant 0 : index
    %c0_40 = arith.constant 0 : index
    %65 = vector.load %arg2[%c12, %c0_39, %c0_40] : memref<25x8x4xbf16, #tpu.memory_space<vmem>>, vector<1x8x4xbf16>
    %66 = vector.shape_cast %65 : vector<1x8x4xbf16> to vector<8x4xbf16>
    %cst_41 = arith.constant dense<0.000000e+00> : vector<8x290xf32>
    %67 = tpu.matmul %66, %64, %cst_41 {dimension_numbers = #tpu.dot_dimension_numbers<[1], [0], [0], [1], [0, 0, 1, 1], [], []>} : vector<8x4xbf16>, vector<4x290xbf16>, vector<8x290xf32> -> vector<8x290xf32>
    %68 = arith.addf %63, %67 : vector<8x290xf32>
    %69 = vector.extract_strided_slice %2 {offsets = [0, 35], sizes = [4, 290], strides = [1, 1]} : vector<4x358xbf16> to vector<4x290xbf16>
    %c13 = arith.constant 13 : index
    %c0_42 = arith.constant 0 : index
    %c0_43 = arith.constant 0 : index
    %70 = vector.load %arg2[%c13, %c0_42, %c0_43] : memref<25x8x4xbf16, #tpu.memory_space<vmem>>, vector<1x8x4xbf16>
    %71 = vector.shape_cast %70 : vector<1x8x4xbf16> to vector<8x4xbf16>
    %cst_44 = arith.constant dense<0.000000e+00> : vector<8x290xf32>
    %72 = tpu.matmul %71, %69, %cst_44 {dimension_numbers = #tpu.dot_dimension_numbers<[1], [0], [0], [1], [0, 0, 1, 1], [], []>} : vector<8x4xbf16>, vector<4x290xbf16>, vector<8x290xf32> -> vector<8x290xf32>
    %73 = arith.addf %68, %72 : vector<8x290xf32>
    %74 = vector.extract_strided_slice %2 {offsets = [0, 36], sizes = [4, 290], strides = [1, 1]} : vector<4x358xbf16> to vector<4x290xbf16>
    %c14 = arith.constant 14 : index
    %c0_45 = arith.constant 0 : index
    %c0_46 = arith.constant 0 : index
    %75 = vector.load %arg2[%c14, %c0_45, %c0_46] : memref<25x8x4xbf16, #tpu.memory_space<vmem>>, vector<1x8x4xbf16>
    %76 = vector.shape_cast %75 : vector<1x8x4xbf16> to vector<8x4xbf16>
    %cst_47 = arith.constant dense<0.000000e+00> : vector<8x290xf32>
    %77 = tpu.matmul %76, %74, %cst_47 {dimension_numbers = #tpu.dot_dimension_numbers<[1], [0], [0], [1], [0, 0, 1, 1], [], []>} : vector<8x4xbf16>, vector<4x290xbf16>, vector<8x290xf32> -> vector<8x290xf32>
    %78 = arith.addf %73, %77 : vector<8x290xf32>
    %79 = vector.extract_strided_slice %2 {offsets = [0, 48], sizes = [4, 290], strides = [1, 1]} : vector<4x358xbf16> to vector<4x290xbf16>
    %c15 = arith.constant 15 : index
    %c0_48 = arith.constant 0 : index
    %c0_49 = arith.constant 0 : index
    %80 = vector.load %arg2[%c15, %c0_48, %c0_49] : memref<25x8x4xbf16, #tpu.memory_space<vmem>>, vector<1x8x4xbf16>
    %81 = vector.shape_cast %80 : vector<1x8x4xbf16> to vector<8x4xbf16>
    %cst_50 = arith.constant dense<0.000000e+00> : vector<8x290xf32>
    %82 = tpu.matmul %81, %79, %cst_50 {dimension_numbers = #tpu.dot_dimension_numbers<[1], [0], [0], [1], [0, 0, 1, 1], [], []>} : vector<8x4xbf16>, vector<4x290xbf16>, vector<8x290xf32> -> vector<8x290xf32>
    %83 = arith.addf %78, %82 : vector<8x290xf32>
    %84 = vector.extract_strided_slice %2 {offsets = [0, 49], sizes = [4, 290], strides = [1, 1]} : vector<4x358xbf16> to vector<4x290xbf16>
    %c16 = arith.constant 16 : index
    %c0_51 = arith.constant 0 : index
    %c0_52 = arith.constant 0 : index
    %85 = vector.load %arg2[%c16, %c0_51, %c0_52] : memref<25x8x4xbf16, #tpu.memory_space<vmem>>, vector<1x8x4xbf16>
    %86 = vector.shape_cast %85 : vector<1x8x4xbf16> to vector<8x4xbf16>
    %cst_53 = arith.constant dense<0.000000e+00> : vector<8x290xf32>
    %87 = tpu.matmul %86, %84, %cst_53 {dimension_numbers = #tpu.dot_dimension_numbers<[1], [0], [0], [1], [0, 0, 1, 1], [], []>} : vector<8x4xbf16>, vector<4x290xbf16>, vector<8x290xf32> -> vector<8x290xf32>
    %88 = arith.addf %83, %87 : vector<8x290xf32>
    %89 = vector.extract_strided_slice %2 {offsets = [0, 50], sizes = [4, 290], strides = [1, 1]} : vector<4x358xbf16> to vector<4x290xbf16>
    %c17 = arith.constant 17 : index
    %c0_54 = arith.constant 0 : index
    %c0_55 = arith.constant 0 : index
    %90 = vector.load %arg2[%c17, %c0_54, %c0_55] : memref<25x8x4xbf16, #tpu.memory_space<vmem>>, vector<1x8x4xbf16>
    %91 = vector.shape_cast %90 : vector<1x8x4xbf16> to vector<8x4xbf16>
    %cst_56 = arith.constant dense<0.000000e+00> : vector<8x290xf32>
    %92 = tpu.matmul %91, %89, %cst_56 {dimension_numbers = #tpu.dot_dimension_numbers<[1], [0], [0], [1], [0, 0, 1, 1], [], []>} : vector<8x4xbf16>, vector<4x290xbf16>, vector<8x290xf32> -> vector<8x290xf32>
    %93 = arith.addf %88, %92 : vector<8x290xf32>
    %94 = vector.extract_strided_slice %2 {offsets = [0, 51], sizes = [4, 290], strides = [1, 1]} : vector<4x358xbf16> to vector<4x290xbf16>
    %c18 = arith.constant 18 : index
    %c0_57 = arith.constant 0 : index
    %c0_58 = arith.constant 0 : index
    %95 = vector.load %arg2[%c18, %c0_57, %c0_58] : memref<25x8x4xbf16, #tpu.memory_space<vmem>>, vector<1x8x4xbf16>
    %96 = vector.shape_cast %95 : vector<1x8x4xbf16> to vector<8x4xbf16>
    %cst_59 = arith.constant dense<0.000000e+00> : vector<8x290xf32>
    %97 = tpu.matmul %96, %94, %cst_59 {dimension_numbers = #tpu.dot_dimension_numbers<[1], [0], [0], [1], [0, 0, 1, 1], [], []>} : vector<8x4xbf16>, vector<4x290xbf16>, vector<8x290xf32> -> vector<8x290xf32>
    %98 = arith.addf %93, %97 : vector<8x290xf32>
    %99 = vector.extract_strided_slice %2 {offsets = [0, 52], sizes = [4, 290], strides = [1, 1]} : vector<4x358xbf16> to vector<4x290xbf16>
    %c19 = arith.constant 19 : index
    %c0_60 = arith.constant 0 : index
    %c0_61 = arith.constant 0 : index
    %100 = vector.load %arg2[%c19, %c0_60, %c0_61] : memref<25x8x4xbf16, #tpu.memory_space<vmem>>, vector<1x8x4xbf16>
    %101 = vector.shape_cast %100 : vector<1x8x4xbf16> to vector<8x4xbf16>
    %cst_62 = arith.constant dense<0.000000e+00> : vector<8x290xf32>
    %102 = tpu.matmul %101, %99, %cst_62 {dimension_numbers = #tpu.dot_dimension_numbers<[1], [0], [0], [1], [0, 0, 1, 1], [], []>} : vector<8x4xbf16>, vector<4x290xbf16>, vector<8x290xf32> -> vector<8x290xf32>
    %103 = arith.addf %98, %102 : vector<8x290xf32>
    %104 = vector.extract_strided_slice %2 {offsets = [0, 64], sizes = [4, 290], strides = [1, 1]} : vector<4x358xbf16> to vector<4x290xbf16>
    %c20 = arith.constant 20 : index
    %c0_63 = arith.constant 0 : index
    %c0_64 = arith.constant 0 : index
    %105 = vector.load %arg2[%c20, %c0_63, %c0_64] : memref<25x8x4xbf16, #tpu.memory_space<vmem>>, vector<1x8x4xbf16>
    %106 = vector.shape_cast %105 : vector<1x8x4xbf16> to vector<8x4xbf16>
    %cst_65 = arith.constant dense<0.000000e+00> : vector<8x290xf32>
    %107 = tpu.matmul %106, %104, %cst_65 {dimension_numbers = #tpu.dot_dimension_numbers<[1], [0], [0], [1], [0, 0, 1, 1], [], []>} : vector<8x4xbf16>, vector<4x290xbf16>, vector<8x290xf32> -> vector<8x290xf32>
    %108 = arith.addf %103, %107 : vector<8x290xf32>
    %109 = vector.extract_strided_slice %2 {offsets = [0, 65], sizes = [4, 290], strides = [1, 1]} : vector<4x358xbf16> to vector<4x290xbf16>
    %c21 = arith.constant 21 : index
    %c0_66 = arith.constant 0 : index
    %c0_67 = arith.constant 0 : index
    %110 = vector.load %arg2[%c21, %c0_66, %c0_67] : memref<25x8x4xbf16, #tpu.memory_space<vmem>>, vector<1x8x4xbf16>
    %111 = vector.shape_cast %110 : vector<1x8x4xbf16> to vector<8x4xbf16>
    %cst_68 = arith.constant dense<0.000000e+00> : vector<8x290xf32>
    %112 = tpu.matmul %111, %109, %cst_68 {dimension_numbers = #tpu.dot_dimension_numbers<[1], [0], [0], [1], [0, 0, 1, 1], [], []>} : vector<8x4xbf16>, vector<4x290xbf16>, vector<8x290xf32> -> vector<8x290xf32>
    %113 = arith.addf %108, %112 : vector<8x290xf32>
    %114 = vector.extract_strided_slice %2 {offsets = [0, 66], sizes = [4, 290], strides = [1, 1]} : vector<4x358xbf16> to vector<4x290xbf16>
    %c22 = arith.constant 22 : index
    %c0_69 = arith.constant 0 : index
    %c0_70 = arith.constant 0 : index
    %115 = vector.load %arg2[%c22, %c0_69, %c0_70] : memref<25x8x4xbf16, #tpu.memory_space<vmem>>, vector<1x8x4xbf16>
    %116 = vector.shape_cast %115 : vector<1x8x4xbf16> to vector<8x4xbf16>
    %cst_71 = arith.constant dense<0.000000e+00> : vector<8x290xf32>
    %117 = tpu.matmul %116, %114, %cst_71 {dimension_numbers = #tpu.dot_dimension_numbers<[1], [0], [0], [1], [0, 0, 1, 1], [], []>} : vector<8x4xbf16>, vector<4x290xbf16>, vector<8x290xf32> -> vector<8x290xf32>
    %118 = arith.addf %113, %117 : vector<8x290xf32>
    %119 = vector.extract_strided_slice %2 {offsets = [0, 67], sizes = [4, 290], strides = [1, 1]} : vector<4x358xbf16> to vector<4x290xbf16>
    %c23 = arith.constant 23 : index
    %c0_72 = arith.constant 0 : index
    %c0_73 = arith.constant 0 : index
    %120 = vector.load %arg2[%c23, %c0_72, %c0_73] : memref<25x8x4xbf16, #tpu.memory_space<vmem>>, vector<1x8x4xbf16>
    %121 = vector.shape_cast %120 : vector<1x8x4xbf16> to vector<8x4xbf16>
    %cst_74 = arith.constant dense<0.000000e+00> : vector<8x290xf32>
    %122 = tpu.matmul %121, %119, %cst_74 {dimension_numbers = #tpu.dot_dimension_numbers<[1], [0], [0], [1], [0, 0, 1, 1], [], []>} : vector<8x4xbf16>, vector<4x290xbf16>, vector<8x290xf32> -> vector<8x290xf32>
    %123 = arith.addf %118, %122 : vector<8x290xf32>
    %124 = vector.extract_strided_slice %2 {offsets = [0, 68], sizes = [4, 290], strides = [1, 1]} : vector<4x358xbf16> to vector<4x290xbf16>
    %c24 = arith.constant 24 : index
    %c0_75 = arith.constant 0 : index
    %c0_76 = arith.constant 0 : index
    %125 = vector.load %arg2[%c24, %c0_75, %c0_76] : memref<25x8x4xbf16, #tpu.memory_space<vmem>>, vector<1x8x4xbf16>
    %126 = vector.shape_cast %125 : vector<1x8x4xbf16> to vector<8x4xbf16>
    %cst_77 = arith.constant dense<0.000000e+00> : vector<8x290xf32>
    %127 = tpu.matmul %126, %124, %cst_77 {dimension_numbers = #tpu.dot_dimension_numbers<[1], [0], [0], [1], [0, 0, 1, 1], [], []>} : vector<8x4xbf16>, vector<4x290xbf16>, vector<8x290xf32> -> vector<8x290xf32>
    %128 = arith.addf %123, %127 : vector<8x290xf32>
    %c0_78 = arith.constant 0 : index
    %c0_79 = arith.constant 0 : index
    %129 = vector.load %arg3[%c0_78, %c0_79] : memref<8x1xf32, #tpu.memory_space<vmem>>, vector<8x1xf32>
    %130 = vector.broadcast %129 : vector<8x1xf32> to vector<8x290xf32>
    %131 = arith.addf %128, %130 : vector<8x290xf32>
    %132 = vector.extract_strided_slice %131 {offsets = [0, 0], sizes = [4, 290], strides = [1, 1]} : vector<8x290xf32> to vector<4x290xf32>
    %cst_80 = arith.constant 0.000000e+00 : f32
    %133 = vector.broadcast %cst_80 : f32 to vector<4x290xf32>
    %134 = arith.maximumf %132, %133 : vector<4x290xf32>
    %135 = vector.extract_strided_slice %131 {offsets = [4, 0], sizes = [4, 256], strides = [1, 1]} : vector<8x290xf32> to vector<4x256xf32>
    %136 = arith.truncf %134 : vector<4x290xf32> to vector<4x290xbf16>
    %cst_81 = arith.constant 0.000000e+00 : f32
    %137 = vector.broadcast %cst_81 : f32 to vector<4x256xf32>
    %c0_82 = arith.constant 0 : index
    %c0_83 = arith.constant 0 : index
    %c0_84 = arith.constant 0 : index
    %138 = vector.load %arg4[%c0_82, %c0_83, %c0_84] : memref<9x4x4xbf16, #tpu.memory_space<vmem>>, vector<1x4x4xbf16>
    %139 = vector.shape_cast %138 : vector<1x4x4xbf16> to vector<4x4xbf16>
    %140 = vector.extract_strided_slice %136 {offsets = [0, 0], sizes = [4, 256], strides = [1, 1]} : vector<4x290xbf16> to vector<4x256xbf16>
    %cst_85 = arith.constant dense<0.000000e+00> : vector<4x256xf32>
    %141 = tpu.matmul %139, %140, %cst_85 {dimension_numbers = #tpu.dot_dimension_numbers<[1], [0], [0], [1], [0, 0, 1, 1], [], []>} : vector<4x4xbf16>, vector<4x256xbf16>, vector<4x256xf32> -> vector<4x256xf32>
    %142 = arith.addf %137, %141 : vector<4x256xf32>
    %c1_86 = arith.constant 1 : index
    %c0_87 = arith.constant 0 : index
    %c0_88 = arith.constant 0 : index
    %143 = vector.load %arg4[%c1_86, %c0_87, %c0_88] : memref<9x4x4xbf16, #tpu.memory_space<vmem>>, vector<1x4x4xbf16>
    %144 = vector.shape_cast %143 : vector<1x4x4xbf16> to vector<4x4xbf16>
    %145 = vector.extract_strided_slice %136 {offsets = [0, 1], sizes = [4, 256], strides = [1, 1]} : vector<4x290xbf16> to vector<4x256xbf16>
    %cst_89 = arith.constant dense<0.000000e+00> : vector<4x256xf32>
    %146 = tpu.matmul %144, %145, %cst_89 {dimension_numbers = #tpu.dot_dimension_numbers<[1], [0], [0], [1], [0, 0, 1, 1], [], []>} : vector<4x4xbf16>, vector<4x256xbf16>, vector<4x256xf32> -> vector<4x256xf32>
    %147 = arith.addf %142, %146 : vector<4x256xf32>
    %c2_90 = arith.constant 2 : index
    %c0_91 = arith.constant 0 : index
    %c0_92 = arith.constant 0 : index
    %148 = vector.load %arg4[%c2_90, %c0_91, %c0_92] : memref<9x4x4xbf16, #tpu.memory_space<vmem>>, vector<1x4x4xbf16>
    %149 = vector.shape_cast %148 : vector<1x4x4xbf16> to vector<4x4xbf16>
    %150 = vector.extract_strided_slice %136 {offsets = [0, 2], sizes = [4, 256], strides = [1, 1]} : vector<4x290xbf16> to vector<4x256xbf16>
    %cst_93 = arith.constant dense<0.000000e+00> : vector<4x256xf32>
    %151 = tpu.matmul %149, %150, %cst_93 {dimension_numbers = #tpu.dot_dimension_numbers<[1], [0], [0], [1], [0, 0, 1, 1], [], []>} : vector<4x4xbf16>, vector<4x256xbf16>, vector<4x256xf32> -> vector<4x256xf32>
    %152 = arith.addf %147, %151 : vector<4x256xf32>
    %c3_94 = arith.constant 3 : index
    %c0_95 = arith.constant 0 : index
    %c0_96 = arith.constant 0 : index
    %153 = vector.load %arg4[%c3_94, %c0_95, %c0_96] : memref<9x4x4xbf16, #tpu.memory_space<vmem>>, vector<1x4x4xbf16>
    %154 = vector.shape_cast %153 : vector<1x4x4xbf16> to vector<4x4xbf16>
    %155 = vector.extract_strided_slice %136 {offsets = [0, 16], sizes = [4, 256], strides = [1, 1]} : vector<4x290xbf16> to vector<4x256xbf16>
    %cst_97 = arith.constant dense<0.000000e+00> : vector<4x256xf32>
    %156 = tpu.matmul %154, %155, %cst_97 {dimension_numbers = #tpu.dot_dimension_numbers<[1], [0], [0], [1], [0, 0, 1, 1], [], []>} : vector<4x4xbf16>, vector<4x256xbf16>, vector<4x256xf32> -> vector<4x256xf32>
    %157 = arith.addf %152, %156 : vector<4x256xf32>
    %c4_98 = arith.constant 4 : index
    %c0_99 = arith.constant 0 : index
    %c0_100 = arith.constant 0 : index
    %158 = vector.load %arg4[%c4_98, %c0_99, %c0_100] : memref<9x4x4xbf16, #tpu.memory_space<vmem>>, vector<1x4x4xbf16>
    %159 = vector.shape_cast %158 : vector<1x4x4xbf16> to vector<4x4xbf16>
    %160 = vector.extract_strided_slice %136 {offsets = [0, 17], sizes = [4, 256], strides = [1, 1]} : vector<4x290xbf16> to vector<4x256xbf16>
    %cst_101 = arith.constant dense<0.000000e+00> : vector<4x256xf32>
    %161 = tpu.matmul %159, %160, %cst_101 {dimension_numbers = #tpu.dot_dimension_numbers<[1], [0], [0], [1], [0, 0, 1, 1], [], []>} : vector<4x4xbf16>, vector<4x256xbf16>, vector<4x256xf32> -> vector<4x256xf32>
    %162 = arith.addf %157, %161 : vector<4x256xf32>
    %c5_102 = arith.constant 5 : index
    %c0_103 = arith.constant 0 : index
    %c0_104 = arith.constant 0 : index
    %163 = vector.load %arg4[%c5_102, %c0_103, %c0_104] : memref<9x4x4xbf16, #tpu.memory_space<vmem>>, vector<1x4x4xbf16>
    %164 = vector.shape_cast %163 : vector<1x4x4xbf16> to vector<4x4xbf16>
    %165 = vector.extract_strided_slice %136 {offsets = [0, 18], sizes = [4, 256], strides = [1, 1]} : vector<4x290xbf16> to vector<4x256xbf16>
    %cst_105 = arith.constant dense<0.000000e+00> : vector<4x256xf32>
    %166 = tpu.matmul %164, %165, %cst_105 {dimension_numbers = #tpu.dot_dimension_numbers<[1], [0], [0], [1], [0, 0, 1, 1], [], []>} : vector<4x4xbf16>, vector<4x256xbf16>, vector<4x256xf32> -> vector<4x256xf32>
    %167 = arith.addf %162, %166 : vector<4x256xf32>
    %c6_106 = arith.constant 6 : index
    %c0_107 = arith.constant 0 : index
    %c0_108 = arith.constant 0 : index
    %168 = vector.load %arg4[%c6_106, %c0_107, %c0_108] : memref<9x4x4xbf16, #tpu.memory_space<vmem>>, vector<1x4x4xbf16>
    %169 = vector.shape_cast %168 : vector<1x4x4xbf16> to vector<4x4xbf16>
    %170 = vector.extract_strided_slice %136 {offsets = [0, 32], sizes = [4, 256], strides = [1, 1]} : vector<4x290xbf16> to vector<4x256xbf16>
    %cst_109 = arith.constant dense<0.000000e+00> : vector<4x256xf32>
    %171 = tpu.matmul %169, %170, %cst_109 {dimension_numbers = #tpu.dot_dimension_numbers<[1], [0], [0], [1], [0, 0, 1, 1], [], []>} : vector<4x4xbf16>, vector<4x256xbf16>, vector<4x256xf32> -> vector<4x256xf32>
    %172 = arith.addf %167, %171 : vector<4x256xf32>
    %c7_110 = arith.constant 7 : index
    %c0_111 = arith.constant 0 : index
    %c0_112 = arith.constant 0 : index
    %173 = vector.load %arg4[%c7_110, %c0_111, %c0_112] : memref<9x4x4xbf16, #tpu.memory_space<vmem>>, vector<1x4x4xbf16>
    %174 = vector.shape_cast %173 : vector<1x4x4xbf16> to vector<4x4xbf16>
    %175 = vector.extract_strided_slice %136 {offsets = [0, 33], sizes = [4, 256], strides = [1, 1]} : vector<4x290xbf16> to vector<4x256xbf16>
    %cst_113 = arith.constant dense<0.000000e+00> : vector<4x256xf32>
    %176 = tpu.matmul %174, %175, %cst_113 {dimension_numbers = #tpu.dot_dimension_numbers<[1], [0], [0], [1], [0, 0, 1, 1], [], []>} : vector<4x4xbf16>, vector<4x256xbf16>, vector<4x256xf32> -> vector<4x256xf32>
    %177 = arith.addf %172, %176 : vector<4x256xf32>
    %c8_114 = arith.constant 8 : index
    %c0_115 = arith.constant 0 : index
    %c0_116 = arith.constant 0 : index
    %178 = vector.load %arg4[%c8_114, %c0_115, %c0_116] : memref<9x4x4xbf16, #tpu.memory_space<vmem>>, vector<1x4x4xbf16>
    %179 = vector.shape_cast %178 : vector<1x4x4xbf16> to vector<4x4xbf16>
    %180 = vector.extract_strided_slice %136 {offsets = [0, 34], sizes = [4, 256], strides = [1, 1]} : vector<4x290xbf16> to vector<4x256xbf16>
    %cst_117 = arith.constant dense<0.000000e+00> : vector<4x256xf32>
    %181 = tpu.matmul %179, %180, %cst_117 {dimension_numbers = #tpu.dot_dimension_numbers<[1], [0], [0], [1], [0, 0, 1, 1], [], []>} : vector<4x4xbf16>, vector<4x256xbf16>, vector<4x256xf32> -> vector<4x256xf32>
    %182 = arith.addf %177, %181 : vector<4x256xf32>
    %c0_118 = arith.constant 0 : index
    %c0_119 = arith.constant 0 : index
    %183 = vector.load %arg5[%c0_118, %c0_119] : memref<4x1xf32, #tpu.memory_space<vmem>>, vector<4x1xf32>
    %184 = vector.broadcast %183 : vector<4x1xf32> to vector<4x256xf32>
    %185 = arith.addf %182, %184 : vector<4x256xf32>
    %186 = arith.addf %185, %135 : vector<4x256xf32>
    %cst_120 = arith.constant 0.000000e+00 : f32
    %187 = vector.broadcast %cst_120 : f32 to vector<4x256xf32>
    %188 = arith.maximumf %186, %187 : vector<4x256xf32>
    %c0_121 = arith.constant 0 : index
    %c0_122 = arith.constant 0 : index
    %c0_123 = arith.constant 0 : index
    %189 = vector.load %arg6[%c0_121, %c0_122, %c0_123] : memref<1x4x256xf32, #tpu.memory_space<vmem>>, vector<1x4x256xf32>
    %190 = vector.shape_cast %189 : vector<1x4x256xf32> to vector<4x256xf32>
    %191 = vector.shape_cast %188 : vector<4x256xf32> to vector<1x4x256xf32>
    tpu.vector_store %arg6[%c0_121, %c0_122, %c0_123], %191 {strides = array<i32>} : memref<1x4x256xf32, #tpu.memory_space<vmem>>, vector<1x4x256xf32>,
    return
  }
  func.func @transform_0(%arg0: i32) -> (i32, i32, i32) {
    %c0_i32 = arith.constant 0 : i32
    %c0_i32_0 = arith.constant 0 : i32
    %c0_i32_1 = arith.constant 0 : i32
    return %arg0, %c0_i32, %c0_i32_0 : i32, i32, i32
  }
  func.func @transform_1(%arg0: i32) -> (i32, i32, i32) {
    %c0_i32 = arith.constant 0 : i32
    %c0_i32_0 = arith.constant 0 : i32
    %c0_i32_1 = arith.constant 0 : i32
    %c0_i32_2 = arith.constant 0 : i32
    return %c0_i32, %c0_i32_0, %c0_i32_1 : i32, i32, i32
  }
  func.func @transform_2(%arg0: i32) -> (i32, i32) {
    %c0_i32 = arith.constant 0 : i32
    %c0_i32_0 = arith.constant 0 : i32
    %c0_i32_1 = arith.constant 0 : i32
    return %c0_i32, %c0_i32_0 : i32, i32
  }
  func.func @transform_3(%arg0: i32) -> (i32, i32, i32) {
    %c0_i32 = arith.constant 0 : i32
    %c0_i32_0 = arith.constant 0 : i32
    %c0_i32_1 = arith.constant 0 : i32
    %c0_i32_2 = arith.constant 0 : i32
    return %c0_i32, %c0_i32_0, %c0_i32_1 : i32, i32, i32
  }
  func.func @transform_4(%arg0: i32) -> (i32, i32) {
    %c0_i32 = arith.constant 0 : i32
    %c0_i32_0 = arith.constant 0 : i32
    %c0_i32_1 = arith.constant 0 : i32
    return %c0_i32, %c0_i32_0 : i32, i32
  }
  func.func @transform_5(%arg0: i32) -> (i32, i32, i32) {
    %c0_i32 = arith.constant 0 : i32
    %c0_i32_0 = arith.constant 0 : i32
    %c0_i32_1 = arith.constant 0 : i32
    return %arg0, %c0_i32, %c0_i32_0 : i32, i32, i32
  }
}

</mosaic_0001>

<llo_original>
// kernel: tpu_custom_call.1
$region0: #{tpu_custom_call.1}
  #allocation0 [shape = 'u32[]', space=smem, size = 0x4, offset = 0x4, fixed_abs, tag = 'smem constant byte address 0x4 - core index']
  #allocation1 [shape = 'u32[144,128]{1,0:T(1,128)}', space=vmem, size = 0x12000, scoped, tag = 'internal scratch']
  %s0 = inlined_call_operand.vmem [shape: f32[2,4,358], index: 0, kind: input, shape index: {}]
  %s1 = inlined_call_operand.vmem [shape: bf16[25,8,4], index: 1, kind: input, shape index: {}]
  %s2 = inlined_call_operand.vmem [shape: f32[8,1], index: 2, kind: input, shape index: {}]
  %s3 = inlined_call_operand.vmem [shape: bf16[9,4,4], index: 3, kind: input, shape index: {}]
  %s4 = inlined_call_operand.vmem [shape: f32[4,1], index: 4, kind: input, shape index: {}]
  %s5 = inlined_call_operand.hbm [shape: f32[2,4,256], index: 5, kind: output, shape index: {}]
  %s6 = sld [smem:[#allocation0]]
  $region53: #{tpu_custom_call.1} parent=0
    _
  %s8 = ssub.s32 1, %s6
  %s9 = scalar_select 0, %s8, %s6
  $region1: #{tpu_custom_call.1} parent=0
    #allocation2 [shape = 'u8[8192]{0}', space=vmem, size = 0x2000, scoped, tag = 'output window, operand 0']
    #allocation3 [shape = 's32[2]{0}', space=sflag, size = 0x8, scoped, tag = 'scoped memory for tpu_custom_call.1']
    %10 = vsyncpa [#allocation3], 0
    %s11 = scalar_lea.sflag [#allocation3], 1
    %12 = vsyncpa %s11, 0
    loop: start=0, step=1, limit=4
    $region2: #{tpu_custom_call.1} parent=1 // loop_pre_header
      _
    $region3: #{tpu_custom_call.1} parent=1 // loop_header
      %s14 = sphi 0, %s18
      %p15 = scmp.ge.s32.totalorder %s14, 4
      %s24 = sphi 0, %s26
      %s27 = sphi 0, %s24
      %s28 = sphi 0, %s27
      %s44 = sphi 0, %s28
      %s48 = sphi 0, %s48
      %s50 = sphi 0, %s48
      %s51 = sphi 0, %s50
      %s65 = sphi 0, %s51
      %s69 = sphi 0, %s69
      %s71 = sphi 0, %s69
      %s72 = sphi 0, %s71
      %s86 = sphi 0, %s72
      %s90 = sphi 0, %s90
      %s92 = sphi 0, %s90
      %s93 = sphi 0, %s92
      %s107 = sphi 0, %s93
      %s111 = sphi 0, %s111
      %s113 = sphi 0, %s111
      %s114 = sphi 0, %s113
      %s128 = sphi 0, %s114
      %s134 = sphi 0, %s136
      %s137 = sphi 0, %s134
      %s138 = sphi 0, %s137
      %s154 = sphi 0, %s138
    $region4: #{tpu_custom_call.1} parent=1 // loop_header_branch
      %17 = sbr.rel (%p15) target = $region8
    $region5: #{tpu_custom_call.1} parent=1 // loop_body
      %s19 = ssub.s32 %s14, 1
      %s20 = ssub.s32 %s14, 2
      %s21 = sadd.s32 %s14, 1
      %s22 = ssub.s32 %s14, %s21
      %p23 = scmp.eq.s32.totalorder %s22, 0
      %s25 = sadd.s32 %s24, 1
      %s26 = scalar_select %p23, %s24, %s25
      %p29 = pneg %p23
      %p30 = scmp.eq.s32.totalorder %s14, 1
      %p31 = por %p29, %p30
      %p32 = scmp.ne.s32.totalorder %s24, %s27
      %p33 = scmp.eq.s32.totalorder %s14, 0
      %p34 = por %p32, %p33
      %p35 = scmp.ne.s32.totalorder %s24, %s27
      %p36 = scmp.eq.s32.totalorder %s19, 1
      %p37 = por %p35, %p36
      %p38 = scmp.ne.s32.totalorder %s27, %s28
      %p39 = scmp.eq.s32.totalorder %s19, 0
      %p40 = por %p38, %p39
      %p41 = scmp.ne.s32.totalorder %s27, %s28
      %p42 = scmp.eq.s32.totalorder %s20, 1
      %p43 = por %p41, %p42
      %p45 = scmp.ne.s32.totalorder %s28, %s44
      %p46 = scmp.eq.s32.totalorder %s20, 0
      %p47 = por %p45, %p46
      %s49 = sadd.s32 %s48, 1
      %p52 = scmp.eq.s32.totalorder %s14, 1
      %p53 = scmp.ne.s32.totalorder %s48, %s50
      %p54 = scmp.eq.s32.totalorder %s14, 0
      %p55 = por %p53, %p54
      %p56 = scmp.ne.s32.totalorder %s48, %s50
      %p57 = scmp.eq.s32.totalorder %s19, 1
      %p58 = por %p56, %p57
      %p59 = scmp.ne.s32.totalorder %s50, %s51
      %p60 = scmp.eq.s32.totalorder %s19, 0
      %p61 = por %p59, %p60
      %p62 = scmp.ne.s32.totalorder %s50, %s51
      %p63 = scmp.eq.s32.totalorder %s20, 1
      %p64 = por %p62, %p63
      %p66 = scmp.ne.s32.totalorder %s51, %s65
      %p67 = scmp.eq.s32.totalorder %s20, 0
      %p68 = por %p66, %p67
      %s70 = sadd.s32 %s69, 1
      %p73 = scmp.eq.s32.totalorder %s14, 1
      %p74 = scmp.ne.s32.totalorder %s69, %s71
      %p75 = scmp.eq.s32.totalorder %s14, 0
      %p76 = por %p74, %p75
      %p77 = scmp.ne.s32.totalorder %s69, %s71
      %p78 = scmp.eq.s32.totalorder %s19, 1
      %p79 = por %p77, %p78
      %p80 = scmp.ne.s32.totalorder %s71, %s72
      %p81 = scmp.eq.s32.totalorder %s19, 0
      %p82 = por %p80, %p81
      %p83 = scmp.ne.s32.totalorder %s71, %s72
      %p84 = scmp.eq.s32.totalorder %s20, 1
      %p85 = por %p83, %p84
      %p87 = scmp.ne.s32.totalorder %s72, %s86
      %p88 = scmp.eq.s32.totalorder %s20, 0
      %p89 = por %p87, %p88
      %s91 = sadd.s32 %s90, 1
      %p94 = scmp.eq.s32.totalorder %s14, 1
      %p95 = scmp.ne.s32.totalorder %s90, %s92
      %p96 = scmp.eq.s32.totalorder %s14, 0
      %p97 = por %p95, %p96
      %p98 = scmp.ne.s32.totalorder %s90, %s92
      %p99 = scmp.eq.s32.totalorder %s19, 1
      %p100 = por %p98, %p99
      %p101 = scmp.ne.s32.totalorder %s92, %s93
      %p102 = scmp.eq.s32.totalorder %s19, 0
      %p103 = por %p101, %p102
      %p104 = scmp.ne.s32.totalorder %s92, %s93
      %p105 = scmp.eq.s32.totalorder %s20, 1
      %p106 = por %p104, %p105
      %p108 = scmp.ne.s32.totalorder %s93, %s107
      %p109 = scmp.eq.s32.totalorder %s20, 0
      %p110 = por %p108, %p109
      %s112 = sadd.s32 %s111, 1
      %p115 = scmp.eq.s32.totalorder %s14, 1
      %p116 = scmp.ne.s32.totalorder %s111, %s113
      %p117 = scmp.eq.s32.totalorder %s14, 0
      %p118 = por %p116, %p117
      %p119 = scmp.ne.s32.totalorder %s111, %s113
      %p120 = scmp.eq.s32.totalorder %s19, 1
      %p121 = por %p119, %p120
      %p122 = scmp.ne.s32.totalorder %s113, %s114
      %p123 = scmp.eq.s32.totalorder %s19, 0
      %p124 = por %p122, %p123
      %p125 = scmp.ne.s32.totalorder %s113, %s114
      %p126 = scmp.eq.s32.totalorder %s20, 1
      %p127 = por %p125, %p126
      %p129 = scmp.ne.s32.totalorder %s114, %s128
      %p130 = scmp.eq.s32.totalorder %s20, 0
      %p131 = por %p129, %p130
      %s132 = ssub.s32 %s14, %s21
      %p133 = scmp.eq.s32.totalorder %s132, 0
      %s135 = sadd.s32 %s134, 1
      %s136 = scalar_select %p133, %s134, %s135
      %p139 = pneg %p133
      %p140 = scmp.eq.s32.totalorder %s14, 1
      %p141 = por %p139, %p140
      %p142 = scmp.ne.s32.totalorder %s134, %s137
      %p143 = scmp.eq.s32.totalorder %s14, 0
      %p144 = por %p142, %p143
      %p145 = scmp.ne.s32.totalorder %s134, %s137
      %p146 = scmp.eq.s32.totalorder %s19, 1
      %p147 = por %p145, %p146
      %p148 = scmp.ne.s32.totalorder %s137, %s138
      %p149 = scmp.eq.s32.totalorder %s19, 0
      %p150 = por %p148, %p149
      %p151 = scmp.ne.s32.totalorder %s137, %s138
      %p152 = scmp.eq.s32.totalorder %s20, 1
      %p153 = por %p151, %p152
      %p155 = scmp.ne.s32.totalorder %s138, %s154
      %p156 = scmp.eq.s32.totalorder %s20, 0
      %p157 = por %p155, %p156
      %p158 = scmp.le.s32.totalorder 1, %s14
      %p159 = scmp.lt.s32.totalorder %s14, 3
      %p160 = pnand %p158, %p159
      %p161 = pneg %p160
      // Predicated region
      $region9: #{tpu_custom_call.1} parent=5 // pred_check
        _
      $region10: #{tpu_custom_call.1} parent=5 // pred_check_branch
        %163 = sbr.rel (%p160) target = $region12
      $region11: #{tpu_custom_call.1} parent=5 // pred_region
        %s164 = ssub.s32 %s14, 1
        // Predicated region
        $region13: #{tpu_custom_call.1} parent=11 // pred_check
          %p165 = pneg %p61
        $region14: #{tpu_custom_call.1} parent=11 // pred_check_branch
          %167 = sbr.rel (%p165) target = $region16
        $region15: #{tpu_custom_call.1} parent=11 // pred_region
          _
        $region16: #{tpu_custom_call.1} parent=11 // pred_fallthru
          _
        // Predicated region
        $region17: #{tpu_custom_call.1} parent=11 // pred_check
          %p168 = pneg %p82
        $region18: #{tpu_custom_call.1} parent=11 // pred_check_branch
          %170 = sbr.rel (%p168) target = $region20
        $region19: #{tpu_custom_call.1} parent=11 // pred_region
          _
        $region20: #{tpu_custom_call.1} parent=11 // pred_fallthru
          _
        // Predicated region
        $region21: #{tpu_custom_call.1} parent=11 // pred_check
          %p171 = pneg %p103
        $region22: #{tpu_custom_call.1} parent=11 // pred_check_branch
          %173 = sbr.rel (%p171) target = $region24
        $region23: #{tpu_custom_call.1} parent=11 // pred_region
          _
        $region24: #{tpu_custom_call.1} parent=11 // pred_fallthru
          _
        // Predicated region
        $region25: #{tpu_custom_call.1} parent=11 // pred_check
          %p174 = pneg %p124
        $region26: #{tpu_custom_call.1} parent=11 // pred_check_branch
          %176 = sbr.rel (%p174) target = $region28
        $region27: #{tpu_custom_call.1} parent=11 // pred_region
          _
        $region28: #{tpu_custom_call.1} parent=11 // pred_fallthru
          _
      $region12: #{tpu_custom_call.1} parent=5 // pred_fallthru
        _
      %p177 = scmp.lt.s32.totalorder %s14, 2
      // Predicated region
      $region29: #{tpu_custom_call.1} parent=5 // pred_check
        %p178 = pneg %p177
      $region30: #{tpu_custom_call.1} parent=5 // pred_check_branch
        %180 = sbr.rel (%p178) target = $region32
      $region31: #{tpu_custom_call.1} parent=5 // pred_region
        // Predicated region
        $region33: #{tpu_custom_call.1} parent=31 // pred_check
          %p181 = pneg %p34
        $region34: #{tpu_custom_call.1} parent=31 // pred_check_branch
          %183 = sbr.rel (%p181) target = $region36
        $region35: #{tpu_custom_call.1} parent=31 // pred_region
          %p184 = scmp.lt.s32.totalorder %s14, 1
          %s185 = scalar_select %p184, %s14, 1
          %s186 = smul.addr %s185, 3
          %s187 = smul.addr %s186, 4
          %s188 = scalar_lea.vmem %s0, %s187
        $region36: #{tpu_custom_call.1} parent=31 // pred_fallthru
          _
      $region32: #{tpu_custom_call.1} parent=5 // pred_fallthru
        _
      %p189 = scmp.le.s32.totalorder 1, %s14
      %p190 = scmp.lt.s32.totalorder %s14, 3
      %p191 = pnand %p189, %p190
      %p192 = pneg %p191
      // Predicated region
      $region37: #{tpu_custom_call.1} parent=5 // pred_check
        _
      $region38: #{tpu_custom_call.1} parent=5 // pred_check_branch
        %194 = sbr.rel (%p191) target = $region40
      $region39: #{tpu_custom_call.1} parent=5 // pred_region
        %s195 = ssub.s32 %s14, 1
        %p196 = scmp.lt.s32.totalorder %s19, 1
        %s197 = scalar_select %p196, %s19, 1
        %s198 = smul.addr %s197, 3
        %s199 = smul.addr %s198, 4
        %s200 = scalar_lea.vmem %s0, %s199
        %p201 = pneg %p40
        %p202 = pneg %p37
        %p203 = pneg %p61
        %p204 = pneg %p58
        %p205 = pneg %p82
        %p206 = pneg %p79
        %p207 = pneg %p103
        %p208 = pneg %p100
        %p209 = pneg %p124
        %p210 = pneg %p121
        %p211 = pneg %p150
        %p212 = pneg %p147
        %s213 = sand.u32 %s137, 1
        %s214 = scalar_lea.sflag [#allocation3], %s213
        %s215 = sand.u32 %s137, 1
        %s216 = smul.addr %s215, 8
        %s217 = scalar_lea.vmem [#allocation2], %s216
        %p218 = scmp.lt.s32.totalorder %s19, 1
        %s219 = scalar_select %p218, %s19, 1
        %s220 = smul.addr %s219, 3
        %s221 = smul.addr %s220, 4
        %s222 = scalar_lea.vmem %s0, %s221
        %v224 = vld [vmem:[%s222] sm:$0xff]
        %v225 = vld [vmem:[%s222 + $0x8] sm:$0xf]
        %v227 = vcombine.high %v224, %v224
        %v229 = vpack.c.bf16 %v224, %v224
        %v230 = vpack.c.bf16 %v227, %v227
        %v231 = vpack.c.bf16 %v225, %v225
        %v232 = vld [vmem:[%s1] sm:$0xf]
        %s233 = scalar_lea.vmem %s1, 4
        %v234 = vld [vmem:[%s233] sm:$0xf]
        %238 = vrot.lane.b32.xlu0 %v229, 127
        %v239 = vpop.permute.xlu0 %238
        %240 = vrot.lane.b32.xlu0 %v230, 127
        %v241 = vpop.permute.xlu0 %240
        %242 = vrot.lane.b32.xlu0 %v231, 127
        %v243 = vpop.permute.xlu0 %242
        %vm244 = vcmask 1039360
        %v245 = vsel %vm244, %v239, %v241
        %v246 = vsel %vm244, %v241, %v243
        %vm247 = vcmask 31744
        %v249 = vsel %vm247, %v234, 0
        %vm251 = vcmask 1041408
        %v253 = vsel %vm251, %v245, 0
        %v256 = vsel %vm251, %v246, 0
        %v259 = vsel %vm251, %v243, 0
        %261 = vmatprep.subr.bf16.mxu0 0
        %262 = vmatpush1.bf16.msra.mxu0 0
        %263 = vmatprep.subr.bf16.mxu0 0
        %264 = vmatpush1.bf16.msra.mxu0 0
        %265 = vmatprep.subr.bf16.mxu0 0
        %266 = vmatpush1.bf16.msra.mxu0 0
        %267 = vmatprep.subr.bf16.mxu0 0
        %268 = vmatpush1.bf16.msra.mxu0 0
        %269 = vmatprep.subr.bf16.mxu0 0
        %270 = vmatpush1.bf16.msra.mxu0 0
        %271 = vmatprep.subr.bf16.mxu0 0
        %272 = vmatpush1.bf16.msra.mxu0 0
        %273 = vmatprep.subr.bf16.mxu0 0
        %274 = vmatpush1.bf16.msra.mxu0 0
        %275 = vmatprep.subr.bf16.mxu0 %v256
        %276 = vmatpush1.bf16.msra.mxu0 %v253
        %277 = vmatprep.subr.bf16.mxu0 0
        %278 = vmatpush2.bf16.msra.mxu0 0
        %279 = vmatprep.subr.bf16.mxu0 0
        %280 = vmatpush2.bf16.msra.mxu0 0
        %281 = vmatprep.subr.bf16.mxu0 0
        %282 = vmatpush2.bf16.msra.mxu0 0
        %283 = vmatprep.subr.bf16.mxu0 0
        %284 = vmatpush2.bf16.msra.mxu0 0
        %285 = vmatprep.subr.bf16.mxu0 0
        %286 = vmatpush2.bf16.msra.mxu0 0
        %287 = vmatprep.subr.bf16.mxu0 0
        %288 = vmatpush2.bf16.msra.mxu0 0
        %289 = vmatprep.subr.bf16.mxu0 0
        %290 = vmatpush2.bf16.msra.mxu0 0
        %291 = vmatprep.subr.bf16.mxu0 0
        %292 = vmatpush2.bf16.msra.mxu0 0
        %293 = vmatprep.mubr.bf16.mxu0 0
        %294 = vmatmul.mubr.bf16.gmra.mxu0 %v249
        %v295 = vpop.f32.mrf.mxu0
        %v296 = vadd.f32 0.0, %v295
        %v297 = vpop.f32.mrf.mxu0
        %v298 = vadd.f32 0.0, %v297
        %v299 = vpop.f32.mrf.mxu0
        %v300 = vpop.f32.mrf.mxu0
        %301 = vdwg.mxu0
        %302 = vmatprep.subr.bf16.mxu0 0
        %303 = vmatpush1.bf16.msra.mxu0 0
        %304 = vmatprep.subr.bf16.mxu0 0
        %305 = vmatpush1.bf16.msra.mxu0 0
        %306 = vmatprep.subr.bf16.mxu0 0
        %307 = vmatpush1.bf16.msra.mxu0 0
        %308 = vmatprep.subr.bf16.mxu0 0
        %309 = vmatpush1.bf16.msra.mxu0 0
        %310 = vmatprep.subr.bf16.mxu0 0
        %311 = vmatpush1.bf16.msra.mxu0 0
        %312 = vmatprep.subr.bf16.mxu0 0
        %313 = vmatpush1.bf16.msra.mxu0 0
        %314 = vmatprep.subr.bf16.mxu0 0
        %315 = vmatpush1.bf16.msra.mxu0 0
        %316 = vmatprep.subr.bf16.mxu0 0
        %317 = vmatpush1.bf16.msra.mxu0 %v259
        %318 = vmatprep.subr.bf16.mxu0 0
        %319 = vmatpush2.bf16.msra.mxu0 0
        %320 = vmatprep.subr.bf16.mxu0 0
        %321 = vmatpush2.bf16.msra.mxu0 0
        %322 = vmatprep.subr.bf16.mxu0 0
        %323 = vmatpush2.bf16.msra.mxu0 0
        %324 = vmatprep.subr.bf16.mxu0 0
        %325 = vmatpush2.bf16.msra.mxu0 0
        %326 = vmatprep.subr.bf16.mxu0 0
        %327 = vmatpush2.bf16.msra.mxu0 0
        %328 = vmatprep.subr.bf16.mxu0 0
        %329 = vmatpush2.bf16.msra.mxu0 0
        %330 = vmatprep.subr.bf16.mxu0 0
        %331 = vmatpush2.bf16.msra.mxu0 0
        %332 = vmatprep.subr.bf16.mxu0 0
        %333 = vmatpush2.bf16.msra.mxu0 0
        %334 = vmatprep.mubr.bf16.mxu0 0
        %335 = vmatmul.mubr.bf16.gmra.mxu0 %v249
        %v336 = vpop.f32.mrf.mxu0
        %v337 = vadd.f32 0.0, %v336
        %v338 = vpop.f32.mrf.mxu0
        %v339 = vpop.f32.mrf.mxu0
        %v340 = vpop.f32.mrf.mxu0
        %341 = vdwg.mxu0
        %v343 = vsel %vm247, %v232, 0
        %v346 = vsel %vm251, %v229, 0
        %v349 = vsel %vm251, %v230, 0
        %v352 = vsel %vm251, %v231, 0
        %354 = vmatprep.subr.bf16.mxu0 0
        %355 = vmatpush1.bf16.msra.mxu0 0
        %356 = vmatprep.subr.bf16.mxu0 0
        %357 = vmatpush1.bf16.msra.mxu0 0
        %358 = vmatprep.subr.bf16.mxu0 0
        %359 = vmatpush1.bf16.msra.mxu0 0
        %360 = vmatprep.subr.bf16.mxu0 0
        %361 = vmatpush1.bf16.msra.mxu0 0
        %362 = vmatprep.subr.bf16.mxu0 0
        %363 = vmatpush1.bf16.msra.mxu0 0
        %364 = vmatprep.subr.bf16.mxu0 0
        %365 = vmatpush1.bf16.msra.mxu0 0
        %366 = vmatprep.subr.bf16.mxu0 0
        %367 = vmatpush1.bf16.msra.mxu0 0
        %368 = vmatprep.subr.bf16.mxu0 %v349
        %369 = vmatpush1.bf16.msra.mxu0 %v346
        %370 = vmatprep.subr.bf16.mxu0 0
        %371 = vmatpush2.bf16.msra.mxu0 0
        %372 = vmatprep.subr.bf16.mxu0 0
        %373 = vmatpush2.bf16.msra.mxu0 0
        %374 = vmatprep.subr.bf16.mxu0 0
        %375 = vmatpush2.bf16.msra.mxu0 0
        %376 = vmatprep.subr.bf16.mxu0 0
        %377 = vmatpush2.bf16.msra.mxu0 0
        %378 = vmatprep.subr.bf16.mxu0 0
        %379 = vmatpush2.bf16.msra.mxu0 0
        %380 = vmatprep.subr.bf16.mxu0 0
        %381 = vmatpush2.bf16.msra.mxu0 0
        %382 = vmatprep.subr.bf16.mxu0 0
        %383 = vmatpush2.bf16.msra.mxu0 0
        %384 = vmatprep.subr.bf16.mxu0 0
        %385 = vmatpush2.bf16.msra.mxu0 0
        %386 = vmatprep.mubr.bf16.mxu0 0
        %387 = vmatmul.mubr.bf16.gmra.mxu0 %v343
        %v388 = vpop.f32.mrf.mxu0
        %v389 = vadd.f32 %v296, %v388
        %v390 = vpop.f32.mrf.mxu0
        %v391 = vadd.f32 %v298, %v390
        %v392 = vpop.f32.mrf.mxu0
        %v393 = vpop.f32.mrf.mxu0
        %394 = vdwg.mxu0
        %395 = vmatprep.subr.bf16.mxu0 0
        %396 = vmatpush1.bf16.msra.mxu0 0
        %397 = vmatprep.subr.bf16.mxu0 0
        %398 = vmatpush1.bf16.msra.mxu0 0
        %399 = vmatprep.subr.bf16.mxu0 0
        %400 = vmatpush1.bf16.msra.mxu0 0
        %401 = vmatprep.subr.bf16.mxu0 0
        %402 = vmatpush1.bf16.msra.mxu0 0
        %403 = vmatprep.subr.bf16.mxu0 0
        %404 = vmatpush1.bf16.msra.mxu0 0
        %405 = vmatprep.subr.bf16.mxu0 0
        %406 = vmatpush1.bf16.msra.mxu0 0
        %407 = vmatprep.subr.bf16.mxu0 0
        %408 = vmatpush1.bf16.msra.mxu0 0
        %409 = vmatprep.subr.bf16.mxu0 0
        %410 = vmatpush1.bf16.msra.mxu0 %v352
        %411 = vmatprep.subr.bf16.mxu0 0
        %412 = vmatpush2.bf16.msra.mxu0 0
        %413 = vmatprep.subr.bf16.mxu0 0
        %414 = vmatpush2.bf16.msra.mxu0 0
        %415 = vmatprep.subr.bf16.mxu0 0
        %416 = vmatpush2.bf16.msra.mxu0 0
        %417 = vmatprep.subr.bf16.mxu0 0
        %418 = vmatpush2.bf16.msra.mxu0 0
        %419 = vmatprep.subr.bf16.mxu0 0
        %420 = vmatpush2.bf16.msra.mxu0 0
        %421 = vmatprep.subr.bf16.mxu0 0
        %422 = vmatpush2.bf16.msra.mxu0 0
        %423 = vmatprep.subr.bf16.mxu0 0
        %424 = vmatpush2.bf16.msra.mxu0 0
        %425 = vmatprep.subr.bf16.mxu0 0
        %426 = vmatpush2.bf16.msra.mxu0 0
        %427 = vmatprep.mubr.bf16.mxu0 0
        %428 = vmatmul.mubr.bf16.gmra.mxu0 %v343
        %v429 = vpop.f32.mrf.mxu0
        %v430 = vadd.f32 %v337, %v429
        %v431 = vpop.f32.mrf.mxu0
        %v432 = vpop.f32.mrf.mxu0
        %v433 = vpop.f32.mrf.mxu0
        %434 = vdwg.mxu0
        %s435 = scalar_lea.vmem %s1, 8
        %v436 = vld [vmem:[%s435] sm:$0xf]
        %437 = vrot.lane.b32.xlu0 %v229, 126
        %v438 = vpop.permute.xlu0 %437
        %439 = vrot.lane.b32.xlu0 %v230, 126
        %v440 = vpop.permute.xlu0 %439
        %441 = vrot.lane.b32.xlu0 %v231, 126
        %v442 = vpop.permute.xlu0 %441
        %vm443 = vcmask 1031168
        %v444 = vsel %vm443, %v438, %v440
        %v445 = vsel %vm443, %v440, %v442
        %v447 = vsel %vm247, %v436, 0
        %v450 = vsel %vm251, %v444, 0
        %v453 = vsel %vm251, %v445, 0
        %v456 = vsel %vm251, %v442, 0
        %458 = vmatprep.subr.bf16.mxu0 0
        %459 = vmatpush1.bf16.msra.mxu0 0
        %460 = vmatprep.subr.bf16.mxu0 0
        %461 = vmatpush1.bf16.msra.mxu0 0
        %462 = vmatprep.subr.bf16.mxu0 0
        %463 = vmatpush1.bf16.msra.mxu0 0
        %464 = vmatprep.subr.bf16.mxu0 0
        %465 = vmatpush1.bf16.msra.mxu0 0
        %466 = vmatprep.subr.bf16.mxu0 0
        %467 = vmatpush1.bf16.msra.mxu0 0
        %468 = vmatprep.subr.bf16.mxu0 0
        %469 = vmatpush1.bf16.msra.mxu0 0
        %470 = vmatprep.subr.bf16.mxu0 0
        %471 = vmatpush1.bf16.msra.mxu0 0
        %472 = vmatprep.subr.bf16.mxu0 %v453
        %473 = vmatpush1.bf16.msra.mxu0 %v450
        %474 = vmatprep.subr.bf16.mxu0 0
        %475 = vmatpush2.bf16.msra.mxu0 0
        %476 = vmatprep.subr.bf16.mxu0 0
        %477 = vmatpush2.bf16.msra.mxu0 0
        %478 = vmatprep.subr.bf16.mxu0 0
        %479 = vmatpush2.bf16.msra.mxu0 0
        %480 = vmatprep.subr.bf16.mxu0 0
        %481 = vmatpush2.bf16.msra.mxu0 0
        %482 = vmatprep.subr.bf16.mxu0 0
        %483 = vmatpush2.bf16.msra.mxu0 0
        %484 = vmatprep.subr.bf16.mxu0 0
        %485 = vmatpush2.bf16.msra.mxu0 0
        %486 = vmatprep.subr.bf16.mxu0 0
        %487 = vmatpush2.bf16.msra.mxu0 0
        %488 = vmatprep.subr.bf16.mxu0 0
        %489 = vmatpush2.bf16.msra.mxu0 0
        %490 = vmatprep.mubr.bf16.mxu0 0
        %491 = vmatmul.mubr.bf16.gmra.mxu0 %v447
        %v492 = vpop.f32.mrf.mxu0
        %v493 = vadd.f32 0.0, %v492
        %v494 = vpop.f32.mrf.mxu0
        %v495 = vadd.f32 0.0, %v494
        %v496 = vpop.f32.mrf.mxu0
        %v497 = vpop.f32.mrf.mxu0
        %498 = vdwg.mxu0
        %499 = vmatprep.subr.bf16.mxu0 0
        %500 = vmatpush1.bf16.msra.mxu0 0
        %501 = vmatprep.subr.bf16.mxu0 0
        %502 = vmatpush1.bf16.msra.mxu0 0
        %503 = vmatprep.subr.bf16.mxu0 0
        %504 = vmatpush1.bf16.msra.mxu0 0
        %505 = vmatprep.subr.bf16.mxu0 0
        %506 = vmatpush1.bf16.msra.mxu0 0
        %507 = vmatprep.subr.bf16.mxu0 0
        %508 = vmatpush1.bf16.msra.mxu0 0
        %509 = vmatprep.subr.bf16.mxu0 0
        %510 = vmatpush1.bf16.msra.mxu0 0
        %511 = vmatprep.subr.bf16.mxu0 0
        %512 = vmatpush1.bf16.msra.mxu0 0
        %513 = vmatprep.subr.bf16.mxu0 0
        %514 = vmatpush1.bf16.msra.mxu0 %v456
        %515 = vmatprep.subr.bf16.mxu0 0
        %516 = vmatpush2.bf16.msra.mxu0 0
        %517 = vmatprep.subr.bf16.mxu0 0
        %518 = vmatpush2.bf16.msra.mxu0 0
        %519 = vmatprep.subr.bf16.mxu0 0
        %520 = vmatpush2.bf16.msra.mxu0 0
        %521 = vmatprep.subr.bf16.mxu0 0
        %522 = vmatpush2.bf16.msra.mxu0 0
        %523 = vmatprep.subr.bf16.mxu0 0
        %524 = vmatpush2.bf16.msra.mxu0 0
        %525 = vmatprep.subr.bf16.mxu0 0
        %526 = vmatpush2.bf16.msra.mxu0 0
        %527 = vmatprep.subr.bf16.mxu0 0
        %528 = vmatpush2.bf16.msra.mxu0 0
        %529 = vmatprep.subr.bf16.mxu0 0
        %530 = vmatpush2.bf16.msra.mxu0 0
        %531 = vmatprep.mubr.bf16.mxu0 0
        %532 = vmatmul.mubr.bf16.gmra.mxu0 %v447
        %v533 = vpop.f32.mrf.mxu0
        %v534 = vadd.f32 0.0, %v533
        %v535 = vpop.f32.mrf.mxu0
        %v536 = vpop.f32.mrf.mxu0
        %v537 = vpop.f32.mrf.mxu0
        %538 = vdwg.mxu0
        %v539 = vadd.f32 %v389, %v493
        %v540 = vadd.f32 %v391, %v495
        %v541 = vadd.f32 %v430, %v534
        %s542 = scalar_lea.vmem %s1, 12
        %v543 = vld [vmem:[%s542] sm:$0xf]
        %544 = vrot.lane.b32.xlu0 %v229, 125
        %v545 = vpop.permute.xlu0 %544
        %546 = vrot.lane.b32.xlu0 %v230, 125
        %v547 = vpop.permute.xlu0 %546
        %548 = vrot.lane.b32.xlu0 %v231, 125
        %v549 = vpop.permute.xlu0 %548
        %vm550 = vcmask 1022976
        %v551 = vsel %vm550, %v545, %v547
        %v552 = vsel %vm550, %v547, %v549
        %v554 = vsel %vm247, %v543, 0
        %v557 = vsel %vm251, %v551, 0
        %v560 = vsel %vm251, %v552, 0
        %v563 = vsel %vm251, %v549, 0
        %565 = vmatprep.subr.bf16.mxu0 0
        %566 = vmatpush1.bf16.msra.mxu0 0
        %567 = vmatprep.subr.bf16.mxu0 0
        %568 = vmatpush1.bf16.msra.mxu0 0
        %569 = vmatprep.subr.bf16.mxu0 0
        %570 = vmatpush1.bf16.msra.mxu0 0
        %571 = vmatprep.subr.bf16.mxu0 0
        %572 = vmatpush1.bf16.msra.mxu0 0
        %573 = vmatprep.subr.bf16.mxu0 0
        %574 = vmatpush1.bf16.msra.mxu0 0
        %575 = vmatprep.subr.bf16.mxu0 0
        %576 = vmatpush1.bf16.msra.mxu0 0
        %577 = vmatprep.subr.bf16.mxu0 0
        %578 = vmatpush1.bf16.msra.mxu0 0
        %579 = vmatprep.subr.bf16.mxu0 %v560
        %580 = vmatpush1.bf16.msra.mxu0 %v557
        %581 = vmatprep.subr.bf16.mxu0 0
        %582 = vmatpush2.bf16.msra.mxu0 0
        %583 = vmatprep.subr.bf16.mxu0 0
        %584 = vmatpush2.bf16.msra.mxu0 0
        %585 = vmatprep.subr.bf16.mxu0 0
        %586 = vmatpush2.bf16.msra.mxu0 0
        %587 = vmatprep.subr.bf16.mxu0 0
        %588 = vmatpush2.bf16.msra.mxu0 0
        %589 = vmatprep.subr.bf16.mxu0 0
        %590 = vmatpush2.bf16.msra.mxu0 0
        %591 = vmatprep.subr.bf16.mxu0 0
        %592 = vmatpush2.bf16.msra.mxu0 0
        %593 = vmatprep.subr.bf16.mxu0 0
        %594 = vmatpush2.bf16.msra.mxu0 0
        %595 = vmatprep.subr.bf16.mxu0 0
        %596 = vmatpush2.bf16.msra.mxu0 0
        %597 = vmatprep.mubr.bf16.mxu0 0
        %598 = vmatmul.mubr.bf16.gmra.mxu0 %v554
        %v599 = vpop.f32.mrf.mxu0
        %v600 = vadd.f32 0.0, %v599
        %v601 = vpop.f32.mrf.mxu0
        %v602 = vadd.f32 0.0, %v601
        %v603 = vpop.f32.mrf.mxu0
        %v604 = vpop.f32.mrf.mxu0
        %605 = vdwg.mxu0
        %606 = vmatprep.subr.bf16.mxu0 0
        %607 = vmatpush1.bf16.msra.mxu0 0
        %608 = vmatprep.subr.bf16.mxu0 0
        %609 = vmatpush1.bf16.msra.mxu0 0
        %610 = vmatprep.subr.bf16.mxu0 0
        %611 = vmatpush1.bf16.msra.mxu0 0
        %612 = vmatprep.subr.bf16.mxu0 0
        %613 = vmatpush1.bf16.msra.mxu0 0
        %614 = vmatprep.subr.bf16.mxu0 0
        %615 = vmatpush1.bf16.msra.mxu0 0
        %616 = vmatprep.subr.bf16.mxu0 0
        %617 = vmatpush1.bf16.msra.mxu0 0
        %618 = vmatprep.subr.bf16.mxu0 0
        %619 = vmatpush1.bf16.msra.mxu0 0
        %620 = vmatprep.subr.bf16.mxu0 0
        %621 = vmatpush1.bf16.msra.mxu0 %v563
        %622 = vmatprep.subr.bf16.mxu0 0
        %623 = vmatpush2.bf16.msra.mxu0 0
        %624 = vmatprep.subr.bf16.mxu0 0
        %625 = vmatpush2.bf16.msra.mxu0 0
        %626 = vmatprep.subr.bf16.mxu0 0
        %627 = vmatpush2.bf16.msra.mxu0 0
        %628 = vmatprep.subr.bf16.mxu0 0
        %629 = vmatpush2.bf16.msra.mxu0 0
        %630 = vmatprep.subr.bf16.mxu0 0
        %631 = vmatpush2.bf16.msra.mxu0 0
        %632 = vmatprep.subr.bf16.mxu0 0
        %633 = vmatpush2.bf16.msra.mxu0 0
        %634 = vmatprep.subr.bf16.mxu0 0
        %635 = vmatpush2.bf16.msra.mxu0 0
        %636 = vmatprep.subr.bf16.mxu0 0
        %637 = vmatpush2.bf16.msra.mxu0 0
        %638 = vmatprep.mubr.bf16.mxu0 0
        %639 = vmatmul.mubr.bf16.gmra.mxu0 %v554
        %v640 = vpop.f32.mrf.mxu0
        %v641 = vadd.f32 0.0, %v640
        %v642 = vpop.f32.mrf.mxu0
        %v643 = vpop.f32.mrf.mxu0
        %v644 = vpop.f32.mrf.mxu0
        %645 = vdwg.mxu0
        %v646 = vadd.f32 %v539, %v600
        %v647 = vadd.f32 %v540, %v602
        %v648 = vadd.f32 %v541, %v641
        %s649 = scalar_lea.vmem %s1, 16
        %v650 = vld [vmem:[%s649] sm:$0xf]
        %651 = vrot.lane.b32.xlu0 %v229, 124
        %v652 = vpop.permute.xlu0 %651
        %653 = vrot.lane.b32.xlu0 %v230, 124
        %v654 = vpop.permute.xlu0 %653
        %655 = vrot.lane.b32.xlu0 %v231, 124
        %v656 = vpop.permute.xlu0 %655
        %vm657 = vcmask 1014784
        %v658 = vsel %vm657, %v652, %v654
        %v659 = vsel %vm657, %v654, %v656
        %v661 = vsel %vm247, %v650, 0
        %v664 = vsel %vm251, %v658, 0
        %v667 = vsel %vm251, %v659, 0
        %v670 = vsel %vm251, %v656, 0
        %672 = vmatprep.subr.bf16.mxu0 0
        %673 = vmatpush1.bf16.msra.mxu0 0
        %674 = vmatprep.subr.bf16.mxu0 0
        %675 = vmatpush1.bf16.msra.mxu0 0
        %676 = vmatprep.subr.bf16.mxu0 0
        %677 = vmatpush1.bf16.msra.mxu0 0
        %678 = vmatprep.subr.bf16.mxu0 0
        %679 = vmatpush1.bf16.msra.mxu0 0
        %680 = vmatprep.subr.bf16.mxu0 0
        %681 = vmatpush1.bf16.msra.mxu0 0
        %682 = vmatprep.subr.bf16.mxu0 0
        %683 = vmatpush1.bf16.msra.mxu0 0
        %684 = vmatprep.subr.bf16.mxu0 0
        %685 = vmatpush1.bf16.msra.mxu0 0
        %686 = vmatprep.subr.bf16.mxu0 %v667
        %687 = vmatpush1.bf16.msra.mxu0 %v664
        %688 = vmatprep.subr.bf16.mxu0 0
        %689 = vmatpush2.bf16.msra.mxu0 0
        %690 = vmatprep.subr.bf16.mxu0 0
        %691 = vmatpush2.bf16.msra.mxu0 0
        %692 = vmatprep.subr.bf16.mxu0 0
        %693 = vmatpush2.bf16.msra.mxu0 0
        %694 = vmatprep.subr.bf16.mxu0 0
        %695 = vmatpush2.bf16.msra.mxu0 0
        %696 = vmatprep.subr.bf16.mxu0 0
        %697 = vmatpush2.bf16.msra.mxu0 0
        %698 = vmatprep.subr.bf16.mxu0 0
        %699 = vmatpush2.bf16.msra.mxu0 0
        %700 = vmatprep.subr.bf16.mxu0 0
        %701 = vmatpush2.bf16.msra.mxu0 0
        %702 = vmatprep.subr.bf16.mxu0 0
        %703 = vmatpush2.bf16.msra.mxu0 0
        %704 = vmatprep.mubr.bf16.mxu0 0
        %705 = vmatmul.mubr.bf16.gmra.mxu0 %v661
        %v706 = vpop.f32.mrf.mxu0
        %v707 = vadd.f32 0.0, %v706
        %v708 = vpop.f32.mrf.mxu0
        %v709 = vadd.f32 0.0, %v708
        %v710 = vpop.f32.mrf.mxu0
        %v711 = vpop.f32.mrf.mxu0
        %712 = vdwg.mxu0
        %713 = vmatprep.subr.bf16.mxu0 0
        %714 = vmatpush1.bf16.msra.mxu0 0
        %715 = vmatprep.subr.bf16.mxu0 0
        %716 = vmatpush1.bf16.msra.mxu0 0
        %717 = vmatprep.subr.bf16.mxu0 0
        %718 = vmatpush1.bf16.msra.mxu0 0
        %719 = vmatprep.subr.bf16.mxu0 0
        %720 = vmatpush1.bf16.msra.mxu0 0
        %721 = vmatprep.subr.bf16.mxu0 0
        %722 = vmatpush1.bf16.msra.mxu0 0
        %723 = vmatprep.subr.bf16.mxu0 0
        %724 = vmatpush1.bf16.msra.mxu0 0
        %725 = vmatprep.subr.bf16.mxu0 0
        %726 = vmatpush1.bf16.msra.mxu0 0
        %727 = vmatprep.subr.bf16.mxu0 0
        %728 = vmatpush1.bf16.msra.mxu0 %v670
        %729 = vmatprep.subr.bf16.mxu0 0
        %730 = vmatpush2.bf16.msra.mxu0 0
        %731 = vmatprep.subr.bf16.mxu0 0
        %732 = vmatpush2.bf16.msra.mxu0 0
        %733 = vmatprep.subr.bf16.mxu0 0
        %734 = vmatpush2.bf16.msra.mxu0 0
        %735 = vmatprep.subr.bf16.mxu0 0
        %736 = vmatpush2.bf16.msra.mxu0 0
        %737 = vmatprep.subr.bf16.mxu0 0
        %738 = vmatpush2.bf16.msra.mxu0 0
        %739 = vmatprep.subr.bf16.mxu0 0
        %740 = vmatpush2.bf16.msra.mxu0 0
        %741 = vmatprep.subr.bf16.mxu0 0
        %742 = vmatpush2.bf16.msra.mxu0 0
        %743 = vmatprep.subr.bf16.mxu0 0
        %744 = vmatpush2.bf16.msra.mxu0 0
        %745 = vmatprep.mubr.bf16.mxu0 0
        %746 = vmatmul.mubr.bf16.gmra.mxu0 %v661
        %v747 = vpop.f32.mrf.mxu0
        %v748 = vadd.f32 0.0, %v747
        %v749 = vpop.f32.mrf.mxu0
        %v750 = vpop.f32.mrf.mxu0
        %v751 = vpop.f32.mrf.mxu0
        %752 = vdwg.mxu0
        %v753 = vadd.f32 %v646, %v707
        %v754 = vadd.f32 %v647, %v709
        %v755 = vadd.f32 %v648, %v748
        %s756 = scalar_lea.vmem %s1, 20
        %v757 = vld [vmem:[%s756] sm:$0xf]
        %758 = vrot.lane.b32.xlu0 %v229, 112
        %v759 = vpop.permute.xlu0 %758
        %760 = vrot.lane.b32.xlu0 %v230, 112
        %v761 = vpop.permute.xlu0 %760
        %762 = vrot.lane.b32.xlu0 %v231, 112
        %v763 = vpop.permute.xlu0 %762
        %vm764 = vcmask 916480
        %v765 = vsel %vm764, %v759, %v761
        %v766 = vsel %vm764, %v761, %v763
        %v768 = vsel %vm247, %v757, 0
        %v771 = vsel %vm251, %v765, 0
        %v774 = vsel %vm251, %v766, 0
        %v777 = vsel %vm251, %v763, 0
        %779 = vmatprep.subr.bf16.mxu0 0
        %780 = vmatpush1.bf16.msra.mxu0 0
        %781 = vmatprep.subr.bf16.mxu0 0
        %782 = vmatpush1.bf16.msra.mxu0 0
        %783 = vmatprep.subr.bf16.mxu0 0
        %784 = vmatpush1.bf16.msra.mxu0 0
        %785 = vmatprep.subr.bf16.mxu0 0
        %786 = vmatpush1.bf16.msra.mxu0 0
        %787 = vmatprep.subr.bf16.mxu0 0
        %788 = vmatpush1.bf16.msra.mxu0 0
        %789 = vmatprep.subr.bf16.mxu0 0
        %790 = vmatpush1.bf16.msra.mxu0 0
        %791 = vmatprep.subr.bf16.mxu0 0
        %792 = vmatpush1.bf16.msra.mxu0 0
        %793 = vmatprep.subr.bf16.mxu0 %v774
        %794 = vmatpush1.bf16.msra.mxu0 %v771
        %795 = vmatprep.subr.bf16.mxu0 0
        %796 = vmatpush2.bf16.msra.mxu0 0
        %797 = vmatprep.subr.bf16.mxu0 0
        %798 = vmatpush2.bf16.msra.mxu0 0
        %799 = vmatprep.subr.bf16.mxu0 0
        %800 = vmatpush2.bf16.msra.mxu0 0
        %801 = vmatprep.subr.bf16.mxu0 0
        %802 = vmatpush2.bf16.msra.mxu0 0
        %803 = vmatprep.subr.bf16.mxu0 0
        %804 = vmatpush2.bf16.msra.mxu0 0
        %805 = vmatprep.subr.bf16.mxu0 0
        %806 = vmatpush2.bf16.msra.mxu0 0
        %807 = vmatprep.subr.bf16.mxu0 0
        %808 = vmatpush2.bf16.msra.mxu0 0
        %809 = vmatprep.subr.bf16.mxu0 0
        %810 = vmatpush2.bf16.msra.mxu0 0
        %811 = vmatprep.mubr.bf16.mxu0 0
        %812 = vmatmul.mubr.bf16.gmra.mxu0 %v768
        %v813 = vpop.f32.mrf.mxu0
        %v814 = vadd.f32 0.0, %v813
        %v815 = vpop.f32.mrf.mxu0
        %v816 = vadd.f32 0.0, %v815
        %v817 = vpop.f32.mrf.mxu0
        %v818 = vpop.f32.mrf.mxu0
        %819 = vdwg.mxu0
        %820 = vmatprep.subr.bf16.mxu0 0
        %821 = vmatpush1.bf16.msra.mxu0 0
        %822 = vmatprep.subr.bf16.mxu0 0
        %823 = vmatpush1.bf16.msra.mxu0 0
        %824 = vmatprep.subr.bf16.mxu0 0
        %825 = vmatpush1.bf16.msra.mxu0 0
        %826 = vmatprep.subr.bf16.mxu0 0
        %827 = vmatpush1.bf16.msra.mxu0 0
        %828 = vmatprep.subr.bf16.mxu0 0
        %829 = vmatpush1.bf16.msra.mxu0 0
        %830 = vmatprep.subr.bf16.mxu0 0
        %831 = vmatpush1.bf16.msra.mxu0 0
        %832 = vmatprep.subr.bf16.mxu0 0
        %833 = vmatpush1.bf16.msra.mxu0 0
        %834 = vmatprep.subr.bf16.mxu0 0
        %835 = vmatpush1.bf16.msra.mxu0 %v777
        %836 = vmatprep.subr.bf16.mxu0 0
        %837 = vmatpush2.bf16.msra.mxu0 0
        %838 = vmatprep.subr.bf16.mxu0 0
        %839 = vmatpush2.bf16.msra.mxu0 0
        %840 = vmatprep.subr.bf16.mxu0 0
        %841 = vmatpush2.bf16.msra.mxu0 0
        %842 = vmatprep.subr.bf16.mxu0 0
        %843 = vmatpush2.bf16.msra.mxu0 0
        %844 = vmatprep.subr.bf16.mxu0 0
        %845 = vmatpush2.bf16.msra.mxu0 0
        %846 = vmatprep.subr.bf16.mxu0 0
        %847 = vmatpush2.bf16.msra.mxu0 0
        %848 = vmatprep.subr.bf16.mxu0 0
        %849 = vmatpush2.bf16.msra.mxu0 0
        %850 = vmatprep.subr.bf16.mxu0 0
        %851 = vmatpush2.bf16.msra.mxu0 0
        %852 = vmatprep.mubr.bf16.mxu0 0
        %853 = vmatmul.mubr.bf16.gmra.mxu0 %v768
        %v854 = vpop.f32.mrf.mxu0
        %v855 = vadd.f32 0.0, %v854
        %v856 = vpop.f32.mrf.mxu0
        %v857 = vpop.f32.mrf.mxu0
        %v858 = vpop.f32.mrf.mxu0
        %859 = vdwg.mxu0
        %v860 = vadd.f32 %v753, %v814
        %v861 = vadd.f32 %v754, %v816
        %v862 = vadd.f32 %v755, %v855
        %s863 = scalar_lea.vmem %s1, 24
        %v864 = vld [vmem:[%s863] sm:$0xf]
        %865 = vrot.lane.b32.xlu0 %v229, 111
        %v866 = vpop.permute.xlu0 %865
        %867 = vrot.lane.b32.xlu0 %v230, 111
        %v868 = vpop.permute.xlu0 %867
        %869 = vrot.lane.b32.xlu0 %v231, 111
        %v870 = vpop.permute.xlu0 %869
        %vm871 = vcmask 908288
        %v872 = vsel %vm871, %v866, %v868
        %v873 = vsel %vm871, %v868, %v870
        %v875 = vsel %vm247, %v864, 0
        %v878 = vsel %vm251, %v872, 0
        %v881 = vsel %vm251, %v873, 0
        %v884 = vsel %vm251, %v870, 0
        %886 = vmatprep.subr.bf16.mxu0 0
        %887 = vmatpush1.bf16.msra.mxu0 0
        %888 = vmatprep.subr.bf16.mxu0 0
        %889 = vmatpush1.bf16.msra.mxu0 0
        %890 = vmatprep.subr.bf16.mxu0 0
        %891 = vmatpush1.bf16.msra.mxu0 0
        %892 = vmatprep.subr.bf16.mxu0 0
        %893 = vmatpush1.bf16.msra.mxu0 0
        %894 = vmatprep.subr.bf16.mxu0 0
        %895 = vmatpush1.bf16.msra.mxu0 0
        %896 = vmatprep.subr.bf16.mxu0 0
        %897 = vmatpush1.bf16.msra.mxu0 0
        %898 = vmatprep.subr.bf16.mxu0 0
        %899 = vmatpush1.bf16.msra.mxu0 0
        %900 = vmatprep.subr.bf16.mxu0 %v881
        %901 = vmatpush1.bf16.msra.mxu0 %v878
        %902 = vmatprep.subr.bf16.mxu0 0
        %903 = vmatpush2.bf16.msra.mxu0 0
        %904 = vmatprep.subr.bf16.mxu0 0
        %905 = vmatpush2.bf16.msra.mxu0 0
        %906 = vmatprep.subr.bf16.mxu0 0
        %907 = vmatpush2.bf16.msra.mxu0 0
        %908 = vmatprep.subr.bf16.mxu0 0
        %909 = vmatpush2.bf16.msra.mxu0 0
        %910 = vmatprep.subr.bf16.mxu0 0
        %911 = vmatpush2.bf16.msra.mxu0 0
        %912 = vmatprep.subr.bf16.mxu0 0
        %913 = vmatpush2.bf16.msra.mxu0 0
        %914 = vmatprep.subr.bf16.mxu0 0
        %915 = vmatpush2.bf16.msra.mxu0 0
        %916 = vmatprep.subr.bf16.mxu0 0
        %917 = vmatpush2.bf16.msra.mxu0 0
        %918 = vmatprep.mubr.bf16.mxu0 0
        %919 = vmatmul.mubr.bf16.gmra.mxu0 %v875
        %v920 = vpop.f32.mrf.mxu0
        %v921 = vadd.f32 0.0, %v920
        %v922 = vpop.f32.mrf.mxu0
        %v923 = vadd.f32 0.0, %v922
        %v924 = vpop.f32.mrf.mxu0
        %v925 = vpop.f32.mrf.mxu0
        %926 = vdwg.mxu0
        %927 = vmatprep.subr.bf16.mxu0 0
        %928 = vmatpush1.bf16.msra.mxu0 0
        %929 = vmatprep.subr.bf16.mxu0 0
        %930 = vmatpush1.bf16.msra.mxu0 0
        %931 = vmatprep.subr.bf16.mxu0 0
        %932 = vmatpush1.bf16.msra.mxu0 0
        %933 = vmatprep.subr.bf16.mxu0 0
        %934 = vmatpush1.bf16.msra.mxu0 0
        %935 = vmatprep.subr.bf16.mxu0 0
        %936 = vmatpush1.bf16.msra.mxu0 0
        %937 = vmatprep.subr.bf16.mxu0 0
        %938 = vmatpush1.bf16.msra.mxu0 0
        %939 = vmatprep.subr.bf16.mxu0 0
        %940 = vmatpush1.bf16.msra.mxu0 0
        %941 = vmatprep.subr.bf16.mxu0 0
        %942 = vmatpush1.bf16.msra.mxu0 %v884
        %943 = vmatprep.subr.bf16.mxu0 0
        %944 = vmatpush2.bf16.msra.mxu0 0
        %945 = vmatprep.subr.bf16.mxu0 0
        %946 = vmatpush2.bf16.msra.mxu0 0
        %947 = vmatprep.subr.bf16.mxu0 0
        %948 = vmatpush2.bf16.msra.mxu0 0
        %949 = vmatprep.subr.bf16.mxu0 0
        %950 = vmatpush2.bf16.msra.mxu0 0
        %951 = vmatprep.subr.bf16.mxu0 0
        %952 = vmatpush2.bf16.msra.mxu0 0
        %953 = vmatprep.subr.bf16.mxu0 0
        %954 = vmatpush2.bf16.msra.mxu0 0
        %955 = vmatprep.subr.bf16.mxu0 0
        %956 = vmatpush2.bf16.msra.mxu0 0
        %957 = vmatprep.subr.bf16.mxu0 0
        %958 = vmatpush2.bf16.msra.mxu0 0
        %959 = vmatprep.mubr.bf16.mxu0 0
        %960 = vmatmul.mubr.bf16.gmra.mxu0 %v875
        %v961 = vpop.f32.mrf.mxu0
        %v962 = vadd.f32 0.0, %v961
        %v963 = vpop.f32.mrf.mxu0
        %v964 = vpop.f32.mrf.mxu0
        %v965 = vpop.f32.mrf.mxu0
        %966 = vdwg.mxu0
        %v967 = vadd.f32 %v860, %v921
        %v968 = vadd.f32 %v861, %v923
        %v969 = vadd.f32 %v862, %v962
        %s970 = scalar_lea.vmem %s1, 28
        %v971 = vld [vmem:[%s970] sm:$0xf]
        %972 = vrot.lane.b32.xlu0 %v229, 110
        %v973 = vpop.permute.xlu0 %972
        %974 = vrot.lane.b32.xlu0 %v230, 110
        %v975 = vpop.permute.xlu0 %974
        %976 = vrot.lane.b32.xlu0 %v231, 110
        %v977 = vpop.permute.xlu0 %976
        %vm978 = vcmask 900096
        %v979 = vsel %vm978, %v973, %v975
        %v980 = vsel %vm978, %v975, %v977
        %v982 = vsel %vm247, %v971, 0
        %v985 = vsel %vm251, %v979, 0
        %v988 = vsel %vm251, %v980, 0
        %v991 = vsel %vm251, %v977, 0
        %993 = vmatprep.subr.bf16.mxu0 0
        %994 = vmatpush1.bf16.msra.mxu0 0
        %995 = vmatprep.subr.bf16.mxu0 0
        %996 = vmatpush1.bf16.msra.mxu0 0
        %997 = vmatprep.subr.bf16.mxu0 0
        %998 = vmatpush1.bf16.msra.mxu0 0
        %999 = vmatprep.subr.bf16.mxu0 0
        %1000 = vmatpush1.bf16.msra.mxu0 0
        %1001 = vmatprep.subr.bf16.mxu0 0
        %1002 = vmatpush1.bf16.msra.mxu0 0
        %1003 = vmatprep.subr.bf16.mxu0 0
        %1004 = vmatpush1.bf16.msra.mxu0 0
        %1005 = vmatprep.subr.bf16.mxu0 0
        %1006 = vmatpush1.bf16.msra.mxu0 0
        %1007 = vmatprep.subr.bf16.mxu0 %v988
        %1008 = vmatpush1.bf16.msra.mxu0 %v985
        %1009 = vmatprep.subr.bf16.mxu0 0
        %1010 = vmatpush2.bf16.msra.mxu0 0
        %1011 = vmatprep.subr.bf16.mxu0 0
        %1012 = vmatpush2.bf16.msra.mxu0 0
        %1013 = vmatprep.subr.bf16.mxu0 0
        %1014 = vmatpush2.bf16.msra.mxu0 0
        %1015 = vmatprep.subr.bf16.mxu0 0
        %1016 = vmatpush2.bf16.msra.mxu0 0
        %1017 = vmatprep.subr.bf16.mxu0 0
        %1018 = vmatpush2.bf16.msra.mxu0 0
        %1019 = vmatprep.subr.bf16.mxu0 0
        %1020 = vmatpush2.bf16.msra.mxu0 0
        %1021 = vmatprep.subr.bf16.mxu0 0
        %1022 = vmatpush2.bf16.msra.mxu0 0
        %1023 = vmatprep.subr.bf16.mxu0 0
        %1024 = vmatpush2.bf16.msra.mxu0 0
        %1025 = vmatprep.mubr.bf16.mxu0 0
        %1026 = vmatmul.mubr.bf16.gmra.mxu0 %v982
        %v1027 = vpop.f32.mrf.mxu0
        %v1028 = vadd.f32 0.0, %v1027
        %v1029 = vpop.f32.mrf.mxu0
        %v1030 = vadd.f32 0.0, %v1029
        %v1031 = vpop.f32.mrf.mxu0
        %v1032 = vpop.f32.mrf.mxu0
        %1033 = vdwg.mxu0
        %1034 = vmatprep.subr.bf16.mxu0 0
        %1035 = vmatpush1.bf16.msra.mxu0 0
        %1036 = vmatprep.subr.bf16.mxu0 0
        %1037 = vmatpush1.bf16.msra.mxu0 0
        %1038 = vmatprep.subr.bf16.mxu0 0
        %1039 = vmatpush1.bf16.msra.mxu0 0
        %1040 = vmatprep.subr.bf16.mxu0 0
        %1041 = vmatpush1.bf16.msra.mxu0 0
        %1042 = vmatprep.subr.bf16.mxu0 0
        %1043 = vmatpush1.bf16.msra.mxu0 0
        %1044 = vmatprep.subr.bf16.mxu0 0
        %1045 = vmatpush1.bf16.msra.mxu0 0
        %1046 = vmatprep.subr.bf16.mxu0 0
        %1047 = vmatpush1.bf16.msra.mxu0 0
        %1048 = vmatprep.subr.bf16.mxu0 0
        %1049 = vmatpush1.bf16.msra.mxu0 %v991
        %1050 = vmatprep.subr.bf16.mxu0 0
        %1051 = vmatpush2.bf16.msra.mxu0 0
        %1052 = vmatprep.subr.bf16.mxu0 0
        %1053 = vmatpush2.bf16.msra.mxu0 0
        %1054 = vmatprep.subr.bf16.mxu0 0
        %1055 = vmatpush2.bf16.msra.mxu0 0
        %1056 = vmatprep.subr.bf16.mxu0 0
        %1057 = vmatpush2.bf16.msra.mxu0 0
        %1058 = vmatprep.subr.bf16.mxu0 0
        %1059 = vmatpush2.bf16.msra.mxu0 0
        %1060 = vmatprep.subr.bf16.mxu0 0
        %1061 = vmatpush2.bf16.msra.mxu0 0
        %1062 = vmatprep.subr.bf16.mxu0 0
        %1063 = vmatpush2.bf16.msra.mxu0 0
        %1064 = vmatprep.subr.bf16.mxu0 0
        %1065 = vmatpush2.bf16.msra.mxu0 0
        %1066 = vmatprep.mubr.bf16.mxu0 0
        %1067 = vmatmul.mubr.bf16.gmra.mxu0 %v982
        %v1068 = vpop.f32.mrf.mxu0
        %v1069 = vadd.f32 0.0, %v1068
        %v1070 = vpop.f32.mrf.mxu0
        %v1071 = vpop.f32.mrf.mxu0
        %v1072 = vpop.f32.mrf.mxu0
        %1073 = vdwg.mxu0
        %v1074 = vadd.f32 %v967, %v1028
        %v1075 = vadd.f32 %v968, %v1030
        %v1076 = vadd.f32 %v969, %v1069
        %s1077 = scalar_lea.vmem %s1, 32
        %v1078 = vld [vmem:[%s1077] sm:$0xf]
        %1079 = vrot.lane.b32.xlu0 %v229, 109
        %v1080 = vpop.permute.xlu0 %1079
        %1081 = vrot.lane.b32.xlu0 %v230, 109
        %v1082 = vpop.permute.xlu0 %1081
        %1083 = vrot.lane.b32.xlu0 %v231, 109
        %v1084 = vpop.permute.xlu0 %1083
        %vm1085 = vcmask 891904
        %v1086 = vsel %vm1085, %v1080, %v1082
        %v1087 = vsel %vm1085, %v1082, %v1084
        %v1089 = vsel %vm247, %v1078, 0
        %v1092 = vsel %vm251, %v1086, 0
        %v1095 = vsel %vm251, %v1087, 0
        %v1098 = vsel %vm251, %v1084, 0
        %1100 = vmatprep.subr.bf16.mxu0 0
        %1101 = vmatpush1.bf16.msra.mxu0 0
        %1102 = vmatprep.subr.bf16.mxu0 0
        %1103 = vmatpush1.bf16.msra.mxu0 0
        %1104 = vmatprep.subr.bf16.mxu0 0
        %1105 = vmatpush1.bf16.msra.mxu0 0
        %1106 = vmatprep.subr.bf16.mxu0 0
        %1107 = vmatpush1.bf16.msra.mxu0 0
        %1108 = vmatprep.subr.bf16.mxu0 0
        %1109 = vmatpush1.bf16.msra.mxu0 0
        %1110 = vmatprep.subr.bf16.mxu0 0
        %1111 = vmatpush1.bf16.msra.mxu0 0
        %1112 = vmatprep.subr.bf16.mxu0 0
        %1113 = vmatpush1.bf16.msra.mxu0 0
        %1114 = vmatprep.subr.bf16.mxu0 %v1095
        %1115 = vmatpush1.bf16.msra.mxu0 %v1092
        %1116 = vmatprep.subr.bf16.mxu0 0
        %1117 = vmatpush2.bf16.msra.mxu0 0
        %1118 = vmatprep.subr.bf16.mxu0 0
        %1119 = vmatpush2.bf16.msra.mxu0 0
        %1120 = vmatprep.subr.bf16.mxu0 0
        %1121 = vmatpush2.bf16.msra.mxu0 0
        %1122 = vmatprep.subr.bf16.mxu0 0
        %1123 = vmatpush2.bf16.msra.mxu0 0
        %1124 = vmatprep.subr.bf16.mxu0 0
        %1125 = vmatpush2.bf16.msra.mxu0 0
        %1126 = vmatprep.subr.bf16.mxu0 0
        %1127 = vmatpush2.bf16.msra.mxu0 0
        %1128 = vmatprep.subr.bf16.mxu0 0
        %1129 = vmatpush2.bf16.msra.mxu0 0
        %1130 = vmatprep.subr.bf16.mxu0 0
        %1131 = vmatpush2.bf16.msra.mxu0 0
        %1132 = vmatprep.mubr.bf16.mxu0 0
        %1133 = vmatmul.mubr.bf16.gmra.mxu0 %v1089
        %v1134 = vpop.f32.mrf.mxu0
        %v1135 = vadd.f32 0.0, %v1134
        %v1136 = vpop.f32.mrf.mxu0
        %v1137 = vadd.f32 0.0, %v1136
        %v1138 = vpop.f32.mrf.mxu0
        %v1139 = vpop.f32.mrf.mxu0
        %1140 = vdwg.mxu0
        %1141 = vmatprep.subr.bf16.mxu0 0
        %1142 = vmatpush1.bf16.msra.mxu0 0
        %1143 = vmatprep.subr.bf16.mxu0 0
        %1144 = vmatpush1.bf16.msra.mxu0 0
        %1145 = vmatprep.subr.bf16.mxu0 0
        %1146 = vmatpush1.bf16.msra.mxu0 0
        %1147 = vmatprep.subr.bf16.mxu0 0
        %1148 = vmatpush1.bf16.msra.mxu0 0
        %1149 = vmatprep.subr.bf16.mxu0 0
        %1150 = vmatpush1.bf16.msra.mxu0 0
        %1151 = vmatprep.subr.bf16.mxu0 0
        %1152 = vmatpush1.bf16.msra.mxu0 0
        %1153 = vmatprep.subr.bf16.mxu0 0
        %1154 = vmatpush1.bf16.msra.mxu0 0
        %1155 = vmatprep.subr.bf16.mxu0 0
        %1156 = vmatpush1.bf16.msra.mxu0 %v1098
        %1157 = vmatprep.subr.bf16.mxu0 0
        %1158 = vmatpush2.bf16.msra.mxu0 0
        %1159 = vmatprep.subr.bf16.mxu0 0
        %1160 = vmatpush2.bf16.msra.mxu0 0
        %1161 = vmatprep.subr.bf16.mxu0 0
        %1162 = vmatpush2.bf16.msra.mxu0 0
        %1163 = vmatprep.subr.bf16.mxu0 0
        %1164 = vmatpush2.bf16.msra.mxu0 0
        %1165 = vmatprep.subr.bf16.mxu0 0
        %1166 = vmatpush2.bf16.msra.mxu0 0
        %1167 = vmatprep.subr.bf16.mxu0 0
        %1168 = vmatpush2.bf16.msra.mxu0 0
        %1169 = vmatprep.subr.bf16.mxu0 0
        %1170 = vmatpush2.bf16.msra.mxu0 0
        %1171 = vmatprep.subr.bf16.mxu0 0
        %1172 = vmatpush2.bf16.msra.mxu0 0
        %1173 = vmatprep.mubr.bf16.mxu0 0
        %1174 = vmatmul.mubr.bf16.gmra.mxu0 %v1089
        %v1175 = vpop.f32.mrf.mxu0
        %v1176 = vadd.f32 0.0, %v1175
        %v1177 = vpop.f32.mrf.mxu0
        %v1178 = vpop.f32.mrf.mxu0
        %v1179 = vpop.f32.mrf.mxu0
        %1180 = vdwg.mxu0
        %v1181 = vadd.f32 %v1074, %v1135
        %v1182 = vadd.f32 %v1075, %v1137
        %v1183 = vadd.f32 %v1076, %v1176
        %s1184 = scalar_lea.vmem %s1, 36
        %v1185 = vld [vmem:[%s1184] sm:$0xf]
        %1186 = vrot.lane.b32.xlu0 %v229, 108
        %v1187 = vpop.permute.xlu0 %1186
        %1188 = vrot.lane.b32.xlu0 %v230, 108
        %v1189 = vpop.permute.xlu0 %1188
        %1190 = vrot.lane.b32.xlu0 %v231, 108
        %v1191 = vpop.permute.xlu0 %1190
        %vm1192 = vcmask 883712
        %v1193 = vsel %vm1192, %v1187, %v1189
        %v1194 = vsel %vm1192, %v1189, %v1191
        %v1196 = vsel %vm247, %v1185, 0
        %v1199 = vsel %vm251, %v1193, 0
        %v1202 = vsel %vm251, %v1194, 0
        %v1205 = vsel %vm251, %v1191, 0
        %1207 = vmatprep.subr.bf16.mxu0 0
        %1208 = vmatpush1.bf16.msra.mxu0 0
        %1209 = vmatprep.subr.bf16.mxu0 0
        %1210 = vmatpush1.bf16.msra.mxu0 0
        %1211 = vmatprep.subr.bf16.mxu0 0
        %1212 = vmatpush1.bf16.msra.mxu0 0
        %1213 = vmatprep.subr.bf16.mxu0 0
        %1214 = vmatpush1.bf16.msra.mxu0 0
        %1215 = vmatprep.subr.bf16.mxu0 0
        %1216 = vmatpush1.bf16.msra.mxu0 0
        %1217 = vmatprep.subr.bf16.mxu0 0
        %1218 = vmatpush1.bf16.msra.mxu0 0
        %1219 = vmatprep.subr.bf16.mxu0 0
        %1220 = vmatpush1.bf16.msra.mxu0 0
        %1221 = vmatprep.subr.bf16.mxu0 %v1202
        %1222 = vmatpush1.bf16.msra.mxu0 %v1199
        %1223 = vmatprep.subr.bf16.mxu0 0
        %1224 = vmatpush2.bf16.msra.mxu0 0
        %1225 = vmatprep.subr.bf16.mxu0 0
        %1226 = vmatpush2.bf16.msra.mxu0 0
        %1227 = vmatprep.subr.bf16.mxu0 0
        %1228 = vmatpush2.bf16.msra.mxu0 0
        %1229 = vmatprep.subr.bf16.mxu0 0
        %1230 = vmatpush2.bf16.msra.mxu0 0
        %1231 = vmatprep.subr.bf16.mxu0 0
        %1232 = vmatpush2.bf16.msra.mxu0 0
        %1233 = vmatprep.subr.bf16.mxu0 0
        %1234 = vmatpush2.bf16.msra.mxu0 0
        %1235 = vmatprep.subr.bf16.mxu0 0
        %1236 = vmatpush2.bf16.msra.mxu0 0
        %1237 = vmatprep.subr.bf16.mxu0 0
        %1238 = vmatpush2.bf16.msra.mxu0 0
        %1239 = vmatprep.mubr.bf16.mxu0 0
        %1240 = vmatmul.mubr.bf16.gmra.mxu0 %v1196
        %v1241 = vpop.f32.mrf.mxu0
        %v1242 = vadd.f32 0.0, %v1241
        %v1243 = vpop.f32.mrf.mxu0
        %v1244 = vadd.f32 0.0, %v1243
        %v1245 = vpop.f32.mrf.mxu0
        %v1246 = vpop.f32.mrf.mxu0
        %1247 = vdwg.mxu0
        %1248 = vmatprep.subr.bf16.mxu0 0
        %1249 = vmatpush1.bf16.msra.mxu0 0
        %1250 = vmatprep.subr.bf16.mxu0 0
        %1251 = vmatpush1.bf16.msra.mxu0 0
        %1252 = vmatprep.subr.bf16.mxu0 0
        %1253 = vmatpush1.bf16.msra.mxu0 0
        %1254 = vmatprep.subr.bf16.mxu0 0
        %1255 = vmatpush1.bf16.msra.mxu0 0
        %1256 = vmatprep.subr.bf16.mxu0 0
        %1257 = vmatpush1.bf16.msra.mxu0 0
        %1258 = vmatprep.subr.bf16.mxu0 0
        %1259 = vmatpush1.bf16.msra.mxu0 0
        %1260 = vmatprep.subr.bf16.mxu0 0
        %1261 = vmatpush1.bf16.msra.mxu0 0
        %1262 = vmatprep.subr.bf16.mxu0 0
        %1263 = vmatpush1.bf16.msra.mxu0 %v1205
        %1264 = vmatprep.subr.bf16.mxu0 0
        %1265 = vmatpush2.bf16.msra.mxu0 0
        %1266 = vmatprep.subr.bf16.mxu0 0
        %1267 = vmatpush2.bf16.msra.mxu0 0
        %1268 = vmatprep.subr.bf16.mxu0 0
        %1269 = vmatpush2.bf16.msra.mxu0 0
        %1270 = vmatprep.subr.bf16.mxu0 0
        %1271 = vmatpush2.bf16.msra.mxu0 0
        %1272 = vmatprep.subr.bf16.mxu0 0
        %1273 = vmatpush2.bf16.msra.mxu0 0
        %1274 = vmatprep.subr.bf16.mxu0 0
        %1275 = vmatpush2.bf16.msra.mxu0 0
        %1276 = vmatprep.subr.bf16.mxu0 0
        %1277 = vmatpush2.bf16.msra.mxu0 0
        %1278 = vmatprep.subr.bf16.mxu0 0
        %1279 = vmatpush2.bf16.msra.mxu0 0
        %1280 = vmatprep.mubr.bf16.mxu0 0
        %1281 = vmatmul.mubr.bf16.gmra.mxu0 %v1196
        %v1282 = vpop.f32.mrf.mxu0
        %v1283 = vadd.f32 0.0, %v1282
        %v1284 = vpop.f32.mrf.mxu0
        %v1285 = vpop.f32.mrf.mxu0
        %v1286 = vpop.f32.mrf.mxu0
        %1287 = vdwg.mxu0
        %v1288 = vadd.f32 %v1181, %v1242
        %v1289 = vadd.f32 %v1182, %v1244
        %v1290 = vadd.f32 %v1183, %v1283
        %s1291 = scalar_lea.vmem %s1, 40
        %v1292 = vld [vmem:[%s1291] sm:$0xf]
        %1293 = vrot.lane.b32.xlu0 %v229, 96
        %v1294 = vpop.permute.xlu0 %1293
        %1295 = vrot.lane.b32.xlu0 %v230, 96
        %v1296 = vpop.permute.xlu0 %1295
        %1297 = vrot.lane.b32.xlu0 %v231, 96
        %v1298 = vpop.permute.xlu0 %1297
        %vm1299 = vcmask 785408
        %v1300 = vsel %vm1299, %v1294, %v1296
        %v1301 = vsel %vm1299, %v1296, %v1298
        %v1303 = vsel %vm247, %v1292, 0
        %v1306 = vsel %vm251, %v1300, 0
        %v1309 = vsel %vm251, %v1301, 0
        %v1312 = vsel %vm251, %v1298, 0
        %1314 = vmatprep.subr.bf16.mxu0 0
        %1315 = vmatpush1.bf16.msra.mxu0 0
        %1316 = vmatprep.subr.bf16.mxu0 0
        %1317 = vmatpush1.bf16.msra.mxu0 0
        %1318 = vmatprep.subr.bf16.mxu0 0
        %1319 = vmatpush1.bf16.msra.mxu0 0
        %1320 = vmatprep.subr.bf16.mxu0 0
        %1321 = vmatpush1.bf16.msra.mxu0 0
        %1322 = vmatprep.subr.bf16.mxu0 0
        %1323 = vmatpush1.bf16.msra.mxu0 0
        %1324 = vmatprep.subr.bf16.mxu0 0
        %1325 = vmatpush1.bf16.msra.mxu0 0
        %1326 = vmatprep.subr.bf16.mxu0 0
        %1327 = vmatpush1.bf16.msra.mxu0 0
        %1328 = vmatprep.subr.bf16.mxu0 %v1309
        %1329 = vmatpush1.bf16.msra.mxu0 %v1306
        %1330 = vmatprep.subr.bf16.mxu0 0
        %1331 = vmatpush2.bf16.msra.mxu0 0
        %1332 = vmatprep.subr.bf16.mxu0 0
        %1333 = vmatpush2.bf16.msra.mxu0 0
        %1334 = vmatprep.subr.bf16.mxu0 0
        %1335 = vmatpush2.bf16.msra.mxu0 0
        %1336 = vmatprep.subr.bf16.mxu0 0
        %1337 = vmatpush2.bf16.msra.mxu0 0
        %1338 = vmatprep.subr.bf16.mxu0 0
        %1339 = vmatpush2.bf16.msra.mxu0 0
        %1340 = vmatprep.subr.bf16.mxu0 0
        %1341 = vmatpush2.bf16.msra.mxu0 0
        %1342 = vmatprep.subr.bf16.mxu0 0
        %1343 = vmatpush2.bf16.msra.mxu0 0
        %1344 = vmatprep.subr.bf16.mxu0 0
        %1345 = vmatpush2.bf16.msra.mxu0 0
        %1346 = vmatprep.mubr.bf16.mxu0 0
        %1347 = vmatmul.mubr.bf16.gmra.mxu0 %v1303
        %v1348 = vpop.f32.mrf.mxu0
        %v1349 = vadd.f32 0.0, %v1348
        %v1350 = vpop.f32.mrf.mxu0
        %v1351 = vadd.f32 0.0, %v1350
        %v1352 = vpop.f32.mrf.mxu0
        %v1353 = vpop.f32.mrf.mxu0
        %1354 = vdwg.mxu0
        %1355 = vmatprep.subr.bf16.mxu0 0
        %1356 = vmatpush1.bf16.msra.mxu0 0
        %1357 = vmatprep.subr.bf16.mxu0 0
        %1358 = vmatpush1.bf16.msra.mxu0 0
        %1359 = vmatprep.subr.bf16.mxu0 0
        %1360 = vmatpush1.bf16.msra.mxu0 0
        %1361 = vmatprep.subr.bf16.mxu0 0
        %1362 = vmatpush1.bf16.msra.mxu0 0
        %1363 = vmatprep.subr.bf16.mxu0 0
        %1364 = vmatpush1.bf16.msra.mxu0 0
        %1365 = vmatprep.subr.bf16.mxu0 0
        %1366 = vmatpush1.bf16.msra.mxu0 0
        %1367 = vmatprep.subr.bf16.mxu0 0
        %1368 = vmatpush1.bf16.msra.mxu0 0
        %1369 = vmatprep.subr.bf16.mxu0 0
        %1370 = vmatpush1.bf16.msra.mxu0 %v1312
        %1371 = vmatprep.subr.bf16.mxu0 0
        %1372 = vmatpush2.bf16.msra.mxu0 0
        %1373 = vmatprep.subr.bf16.mxu0 0
        %1374 = vmatpush2.bf16.msra.mxu0 0
        %1375 = vmatprep.subr.bf16.mxu0 0
        %1376 = vmatpush2.bf16.msra.mxu0 0
        %1377 = vmatprep.subr.bf16.mxu0 0
        %1378 = vmatpush2.bf16.msra.mxu0 0
        %1379 = vmatprep.subr.bf16.mxu0 0
        %1380 = vmatpush2.bf16.msra.mxu0 0
        %1381 = vmatprep.subr.bf16.mxu0 0
        %1382 = vmatpush2.bf16.msra.mxu0 0
        %1383 = vmatprep.subr.bf16.mxu0 0
        %1384 = vmatpush2.bf16.msra.mxu0 0
        %1385 = vmatprep.subr.bf16.mxu0 0
        %1386 = vmatpush2.bf16.msra.mxu0 0
        %1387 = vmatprep.mubr.bf16.mxu0 0
        %1388 = vmatmul.mubr.bf16.gmra.mxu0 %v1303
        %v1389 = vpop.f32.mrf.mxu0
        %v1390 = vadd.f32 0.0, %v1389
        %v1391 = vpop.f32.mrf.mxu0
        %v1392 = vpop.f32.mrf.mxu0
        %v1393 = vpop.f32.mrf.mxu0
        %1394 = vdwg.mxu0
        %v1395 = vadd.f32 %v1288, %v1349
        %v1396 = vadd.f32 %v1289, %v1351
        %v1397 = vadd.f32 %v1290, %v1390
        %s1398 = scalar_lea.vmem %s1, 44
        %v1399 = vld [vmem:[%s1398] sm:$0xf]
        %1400 = vrot.lane.b32.xlu0 %v229, 95
        %v1401 = vpop.permute.xlu0 %1400
        %1402 = vrot.lane.b32.xlu0 %v230, 95
        %v1403 = vpop.permute.xlu0 %1402
        %1404 = vrot.lane.b32.xlu0 %v231, 95
        %v1405 = vpop.permute.xlu0 %1404
        %vm1406 = vcmask 777216
        %v1407 = vsel %vm1406, %v1401, %v1403
        %v1408 = vsel %vm1406, %v1403, %v1405
        %v1410 = vsel %vm247, %v1399, 0
        %v1413 = vsel %vm251, %v1407, 0
        %v1416 = vsel %vm251, %v1408, 0
        %v1419 = vsel %vm251, %v1405, 0
        %1421 = vmatprep.subr.bf16.mxu0 0
        %1422 = vmatpush1.bf16.msra.mxu0 0
        %1423 = vmatprep.subr.bf16.mxu0 0
        %1424 = vmatpush1.bf16.msra.mxu0 0
        %1425 = vmatprep.subr.bf16.mxu0 0
        %1426 = vmatpush1.bf16.msra.mxu0 0
        %1427 = vmatprep.subr.bf16.mxu0 0
        %1428 = vmatpush1.bf16.msra.mxu0 0
        %1429 = vmatprep.subr.bf16.mxu0 0
        %1430 = vmatpush1.bf16.msra.mxu0 0
        %1431 = vmatprep.subr.bf16.mxu0 0
        %1432 = vmatpush1.bf16.msra.mxu0 0
        %1433 = vmatprep.subr.bf16.mxu0 0
        %1434 = vmatpush1.bf16.msra.mxu0 0
        %1435 = vmatprep.subr.bf16.mxu0 %v1416
        %1436 = vmatpush1.bf16.msra.mxu0 %v1413
        %1437 = vmatprep.subr.bf16.mxu0 0
        %1438 = vmatpush2.bf16.msra.mxu0 0
        %1439 = vmatprep.subr.bf16.mxu0 0
        %1440 = vmatpush2.bf16.msra.mxu0 0
        %1441 = vmatprep.subr.bf16.mxu0 0
        %1442 = vmatpush2.bf16.msra.mxu0 0
        %1443 = vmatprep.subr.bf16.mxu0 0
        %1444 = vmatpush2.bf16.msra.mxu0 0
        %1445 = vmatprep.subr.bf16.mxu0 0
        %1446 = vmatpush2.bf16.msra.mxu0 0
        %1447 = vmatprep.subr.bf16.mxu0 0
        %1448 = vmatpush2.bf16.msra.mxu0 0
        %1449 = vmatprep.subr.bf16.mxu0 0
        %1450 = vmatpush2.bf16.msra.mxu0 0
        %1451 = vmatprep.subr.bf16.mxu0 0
        %1452 = vmatpush2.bf16.msra.mxu0 0
        %1453 = vmatprep.mubr.bf16.mxu0 0
        %1454 = vmatmul.mubr.bf16.gmra.mxu0 %v1410
        %v1455 = vpop.f32.mrf.mxu0
        %v1456 = vadd.f32 0.0, %v1455
        %v1457 = vpop.f32.mrf.mxu0
        %v1458 = vadd.f32 0.0, %v1457
        %v1459 = vpop.f32.mrf.mxu0
        %v1460 = vpop.f32.mrf.mxu0
        %1461 = vdwg.mxu0
        %1462 = vmatprep.subr.bf16.mxu0 0
        %1463 = vmatpush1.bf16.msra.mxu0 0
        %1464 = vmatprep.subr.bf16.mxu0 0
        %1465 = vmatpush1.bf16.msra.mxu0 0
        %1466 = vmatprep.subr.bf16.mxu0 0
        %1467 = vmatpush1.bf16.msra.mxu0 0
        %1468 = vmatprep.subr.bf16.mxu0 0
        %1469 = vmatpush1.bf16.msra.mxu0 0
        %1470 = vmatprep.subr.bf16.mxu0 0
        %1471 = vmatpush1.bf16.msra.mxu0 0
        %1472 = vmatprep.subr.bf16.mxu0 0
        %1473 = vmatpush1.bf16.msra.mxu0 0
        %1474 = vmatprep.subr.bf16.mxu0 0
        %1475 = vmatpush1.bf16.msra.mxu0 0
        %1476 = vmatprep.subr.bf16.mxu0 0
        %1477 = vmatpush1.bf16.msra.mxu0 %v1419
        %1478 = vmatprep.subr.bf16.mxu0 0
        %1479 = vmatpush2.bf16.msra.mxu0 0
        %1480 = vmatprep.subr.bf16.mxu0 0
        %1481 = vmatpush2.bf16.msra.mxu0 0
        %1482 = vmatprep.subr.bf16.mxu0 0
        %1483 = vmatpush2.bf16.msra.mxu0 0
        %1484 = vmatprep.subr.bf16.mxu0 0
        %1485 = vmatpush2.bf16.msra.mxu0 0
        %1486 = vmatprep.subr.bf16.mxu0 0
        %1487 = vmatpush2.bf16.msra.mxu0 0
        %1488 = vmatprep.subr.bf16.mxu0 0
        %1489 = vmatpush2.bf16.msra.mxu0 0
        %1490 = vmatprep.subr.bf16.mxu0 0
        %1491 = vmatpush2.bf16.msra.mxu0 0
        %1492 = vmatprep.subr.bf16.mxu0 0
        %1493 = vmatpush2.bf16.msra.mxu0 0
        %1494 = vmatprep.mubr.bf16.mxu0 0
        %1495 = vmatmul.mubr.bf16.gmra.mxu0 %v1410
        %v1496 = vpop.f32.mrf.mxu0
        %v1497 = vadd.f32 0.0, %v1496
        %v1498 = vpop.f32.mrf.mxu0
        %v1499 = vpop.f32.mrf.mxu0
        %v1500 = vpop.f32.mrf.mxu0
        %1501 = vdwg.mxu0
        %v1502 = vadd.f32 %v1395, %v1456
        %v1503 = vadd.f32 %v1396, %v1458
        %v1504 = vadd.f32 %v1397, %v1497
        %s1505 = scalar_lea.vmem %s1, 48
        %v1506 = vld [vmem:[%s1505] sm:$0xf]
        %1507 = vrot.lane.b32.xlu0 %v229, 94
        %v1508 = vpop.permute.xlu0 %1507
        %1509 = vrot.lane.b32.xlu0 %v230, 94
        %v1510 = vpop.permute.xlu0 %1509
        %1511 = vrot.lane.b32.xlu0 %v231, 94
        %v1512 = vpop.permute.xlu0 %1511
        %vm1513 = vcmask 769024
        %v1514 = vsel %vm1513, %v1508, %v1510
        %v1515 = vsel %vm1513, %v1510, %v1512
        %v1517 = vsel %vm247, %v1506, 0
        %v1520 = vsel %vm251, %v1514, 0
        %v1523 = vsel %vm251, %v1515, 0
        %v1526 = vsel %vm251, %v1512, 0
        %1528 = vmatprep.subr.bf16.mxu0 0
        %1529 = vmatpush1.bf16.msra.mxu0 0
        %1530 = vmatprep.subr.bf16.mxu0 0
        %1531 = vmatpush1.bf16.msra.mxu0 0
        %1532 = vmatprep.subr.bf16.mxu0 0
        %1533 = vmatpush1.bf16.msra.mxu0 0
        %1534 = vmatprep.subr.bf16.mxu0 0
        %1535 = vmatpush1.bf16.msra.mxu0 0
        %1536 = vmatprep.subr.bf16.mxu0 0
        %1537 = vmatpush1.bf16.msra.mxu0 0
        %1538 = vmatprep.subr.bf16.mxu0 0
        %1539 = vmatpush1.bf16.msra.mxu0 0
        %1540 = vmatprep.subr.bf16.mxu0 0
        %1541 = vmatpush1.bf16.msra.mxu0 0
        %1542 = vmatprep.subr.bf16.mxu0 %v1523
        %1543 = vmatpush1.bf16.msra.mxu0 %v1520
        %1544 = vmatprep.subr.bf16.mxu0 0
        %1545 = vmatpush2.bf16.msra.mxu0 0
        %1546 = vmatprep.subr.bf16.mxu0 0
        %1547 = vmatpush2.bf16.msra.mxu0 0
        %1548 = vmatprep.subr.bf16.mxu0 0
        %1549 = vmatpush2.bf16.msra.mxu0 0
        %1550 = vmatprep.subr.bf16.mxu0 0
        %1551 = vmatpush2.bf16.msra.mxu0 0
        %1552 = vmatprep.subr.bf16.mxu0 0
        %1553 = vmatpush2.bf16.msra.mxu0 0
        %1554 = vmatprep.subr.bf16.mxu0 0
        %1555 = vmatpush2.bf16.msra.mxu0 0
        %1556 = vmatprep.subr.bf16.mxu0 0
        %1557 = vmatpush2.bf16.msra.mxu0 0
        %1558 = vmatprep.subr.bf16.mxu0 0
        %1559 = vmatpush2.bf16.msra.mxu0 0
        %1560 = vmatprep.mubr.bf16.mxu0 0
        %1561 = vmatmul.mubr.bf16.gmra.mxu0 %v1517
        %v1562 = vpop.f32.mrf.mxu0
        %v1563 = vadd.f32 0.0, %v1562
        %v1564 = vpop.f32.mrf.mxu0
        %v1565 = vadd.f32 0.0, %v1564
        %v1566 = vpop.f32.mrf.mxu0
        %v1567 = vpop.f32.mrf.mxu0
        %1568 = vdwg.mxu0
        %1569 = vmatprep.subr.bf16.mxu0 0
        %1570 = vmatpush1.bf16.msra.mxu0 0
        %1571 = vmatprep.subr.bf16.mxu0 0
        %1572 = vmatpush1.bf16.msra.mxu0 0
        %1573 = vmatprep.subr.bf16.mxu0 0
        %1574 = vmatpush1.bf16.msra.mxu0 0
        %1575 = vmatprep.subr.bf16.mxu0 0
        %1576 = vmatpush1.bf16.msra.mxu0 0
        %1577 = vmatprep.subr.bf16.mxu0 0
        %1578 = vmatpush1.bf16.msra.mxu0 0
        %1579 = vmatprep.subr.bf16.mxu0 0
        %1580 = vmatpush1.bf16.msra.mxu0 0
        %1581 = vmatprep.subr.bf16.mxu0 0
        %1582 = vmatpush1.bf16.msra.mxu0 0
        %1583 = vmatprep.subr.bf16.mxu0 0
        %1584 = vmatpush1.bf16.msra.mxu0 %v1526
        %1585 = vmatprep.subr.bf16.mxu0 0
        %1586 = vmatpush2.bf16.msra.mxu0 0
        %1587 = vmatprep.subr.bf16.mxu0 0
        %1588 = vmatpush2.bf16.msra.mxu0 0
        %1589 = vmatprep.subr.bf16.mxu0 0
        %1590 = vmatpush2.bf16.msra.mxu0 0
        %1591 = vmatprep.subr.bf16.mxu0 0
        %1592 = vmatpush2.bf16.msra.mxu0 0
        %1593 = vmatprep.subr.bf16.mxu0 0
        %1594 = vmatpush2.bf16.msra.mxu0 0
        %1595 = vmatprep.subr.bf16.mxu0 0
        %1596 = vmatpush2.bf16.msra.mxu0 0
        %1597 = vmatprep.subr.bf16.mxu0 0
        %1598 = vmatpush2.bf16.msra.mxu0 0
        %1599 = vmatprep.subr.bf16.mxu0 0
        %1600 = vmatpush2.bf16.msra.mxu0 0
        %1601 = vmatprep.mubr.bf16.mxu0 0
        %1602 = vmatmul.mubr.bf16.gmra.mxu0 %v1517
        %v1603 = vpop.f32.mrf.mxu0
        %v1604 = vadd.f32 0.0, %v1603
        %v1605 = vpop.f32.mrf.mxu0
        %v1606 = vpop.f32.mrf.mxu0
        %v1607 = vpop.f32.mrf.mxu0
        %1608 = vdwg.mxu0
        %v1609 = vadd.f32 %v1502, %v1563
        %v1610 = vadd.f32 %v1503, %v1565
        %v1611 = vadd.f32 %v1504, %v1604
        %s1612 = scalar_lea.vmem %s1, 52
        %v1613 = vld [vmem:[%s1612] sm:$0xf]
        %1614 = vrot.lane.b32.xlu0 %v229, 93
        %v1615 = vpop.permute.xlu0 %1614
        %1616 = vrot.lane.b32.xlu0 %v230, 93
        %v1617 = vpop.permute.xlu0 %1616
        %1618 = vrot.lane.b32.xlu0 %v231, 93
        %v1619 = vpop.permute.xlu0 %1618
        %vm1620 = vcmask 760832
        %v1621 = vsel %vm1620, %v1615, %v1617
        %v1622 = vsel %vm1620, %v1617, %v1619
        %v1624 = vsel %vm247, %v1613, 0
        %v1627 = vsel %vm251, %v1621, 0
        %v1630 = vsel %vm251, %v1622, 0
        %v1633 = vsel %vm251, %v1619, 0
        %1635 = vmatprep.subr.bf16.mxu0 0
        %1636 = vmatpush1.bf16.msra.mxu0 0
        %1637 = vmatprep.subr.bf16.mxu0 0
        %1638 = vmatpush1.bf16.msra.mxu0 0
        %1639 = vmatprep.subr.bf16.mxu0 0
        %1640 = vmatpush1.bf16.msra.mxu0 0
        %1641 = vmatprep.subr.bf16.mxu0 0
        %1642 = vmatpush1.bf16.msra.mxu0 0
        %1643 = vmatprep.subr.bf16.mxu0 0
        %1644 = vmatpush1.bf16.msra.mxu0 0
        %1645 = vmatprep.subr.bf16.mxu0 0
        %1646 = vmatpush1.bf16.msra.mxu0 0
        %1647 = vmatprep.subr.bf16.mxu0 0
        %1648 = vmatpush1.bf16.msra.mxu0 0
        %1649 = vmatprep.subr.bf16.mxu0 %v1630
        %1650 = vmatpush1.bf16.msra.mxu0 %v1627
        %1651 = vmatprep.subr.bf16.mxu0 0
        %1652 = vmatpush2.bf16.msra.mxu0 0
        %1653 = vmatprep.subr.bf16.mxu0 0
        %1654 = vmatpush2.bf16.msra.mxu0 0
        %1655 = vmatprep.subr.bf16.mxu0 0
        %1656 = vmatpush2.bf16.msra.mxu0 0
        %1657 = vmatprep.subr.bf16.mxu0 0
        %1658 = vmatpush2.bf16.msra.mxu0 0
        %1659 = vmatprep.subr.bf16.mxu0 0
        %1660 = vmatpush2.bf16.msra.mxu0 0
        %1661 = vmatprep.subr.bf16.mxu0 0
        %1662 = vmatpush2.bf16.msra.mxu0 0
        %1663 = vmatprep.subr.bf16.mxu0 0
        %1664 = vmatpush2.bf16.msra.mxu0 0
        %1665 = vmatprep.subr.bf16.mxu0 0
        %1666 = vmatpush2.bf16.msra.mxu0 0
        %1667 = vmatprep.mubr.bf16.mxu0 0
        %1668 = vmatmul.mubr.bf16.gmra.mxu0 %v1624
        %v1669 = vpop.f32.mrf.mxu0
        %v1670 = vadd.f32 0.0, %v1669
        %v1671 = vpop.f32.mrf.mxu0
        %v1672 = vadd.f32 0.0, %v1671
        %v1673 = vpop.f32.mrf.mxu0
        %v1674 = vpop.f32.mrf.mxu0
        %1675 = vdwg.mxu0
        %1676 = vmatprep.subr.bf16.mxu0 0
        %1677 = vmatpush1.bf16.msra.mxu0 0
        %1678 = vmatprep.subr.bf16.mxu0 0
        %1679 = vmatpush1.bf16.msra.mxu0 0
        %1680 = vmatprep.subr.bf16.mxu0 0
        %1681 = vmatpush1.bf16.msra.mxu0 0
        %1682 = vmatprep.subr.bf16.mxu0 0
        %1683 = vmatpush1.bf16.msra.mxu0 0
        %1684 = vmatprep.subr.bf16.mxu0 0
        %1685 = vmatpush1.bf16.msra.mxu0 0
        %1686 = vmatprep.subr.bf16.mxu0 0
        %1687 = vmatpush1.bf16.msra.mxu0 0
        %1688 = vmatprep.subr.bf16.mxu0 0
        %1689 = vmatpush1.bf16.msra.mxu0 0
        %1690 = vmatprep.subr.bf16.mxu0 0
        %1691 = vmatpush1.bf16.msra.mxu0 %v1633
        %1692 = vmatprep.subr.bf16.mxu0 0
        %1693 = vmatpush2.bf16.msra.mxu0 0
        %1694 = vmatprep.subr.bf16.mxu0 0
        %1695 = vmatpush2.bf16.msra.mxu0 0
        %1696 = vmatprep.subr.bf16.mxu0 0
        %1697 = vmatpush2.bf16.msra.mxu0 0
        %1698 = vmatprep.subr.bf16.mxu0 0
        %1699 = vmatpush2.bf16.msra.mxu0 0
        %1700 = vmatprep.subr.bf16.mxu0 0
        %1701 = vmatpush2.bf16.msra.mxu0 0
        %1702 = vmatprep.subr.bf16.mxu0 0
        %1703 = vmatpush2.bf16.msra.mxu0 0
        %1704 = vmatprep.subr.bf16.mxu0 0
        %1705 = vmatpush2.bf16.msra.mxu0 0
        %1706 = vmatprep.subr.bf16.mxu0 0
        %1707 = vmatpush2.bf16.msra.mxu0 0
        %1708 = vmatprep.mubr.bf16.mxu0 0
        %1709 = vmatmul.mubr.bf16.gmra.mxu0 %v1624
        %v1710 = vpop.f32.mrf.mxu0
        %v1711 = vadd.f32 0.0, %v1710
        %v1712 = vpop.f32.mrf.mxu0
        %v1713 = vpop.f32.mrf.mxu0
        %v1714 = vpop.f32.mrf.mxu0
        %1715 = vdwg.mxu0
        %v1716 = vadd.f32 %v1609, %v1670
        %v1717 = vadd.f32 %v1610, %v1672
        %v1718 = vadd.f32 %v1611, %v1711
        %s1719 = scalar_lea.vmem %s1, 56
        %v1720 = vld [vmem:[%s1719] sm:$0xf]
        %1721 = vrot.lane.b32.xlu0 %v229, 92
        %v1722 = vpop.permute.xlu0 %1721
        %1723 = vrot.lane.b32.xlu0 %v230, 92
        %v1724 = vpop.permute.xlu0 %1723
        %1725 = vrot.lane.b32.xlu0 %v231, 92
        %v1726 = vpop.permute.xlu0 %1725
        %vm1727 = vcmask 752640
        %v1728 = vsel %vm1727, %v1722, %v1724
        %v1729 = vsel %vm1727, %v1724, %v1726
        %v1731 = vsel %vm247, %v1720, 0
        %v1734 = vsel %vm251, %v1728, 0
        %v1737 = vsel %vm251, %v1729, 0
        %v1740 = vsel %vm251, %v1726, 0
        %1742 = vmatprep.subr.bf16.mxu0 0
        %1743 = vmatpush1.bf16.msra.mxu0 0
        %1744 = vmatprep.subr.bf16.mxu0 0
        %1745 = vmatpush1.bf16.msra.mxu0 0
        %1746 = vmatprep.subr.bf16.mxu0 0
        %1747 = vmatpush1.bf16.msra.mxu0 0
        %1748 = vmatprep.subr.bf16.mxu0 0
        %1749 = vmatpush1.bf16.msra.mxu0 0
        %1750 = vmatprep.subr.bf16.mxu0 0
        %1751 = vmatpush1.bf16.msra.mxu0 0
        %1752 = vmatprep.subr.bf16.mxu0 0
        %1753 = vmatpush1.bf16.msra.mxu0 0
        %1754 = vmatprep.subr.bf16.mxu0 0
        %1755 = vmatpush1.bf16.msra.mxu0 0
        %1756 = vmatprep.subr.bf16.mxu0 %v1737
        %1757 = vmatpush1.bf16.msra.mxu0 %v1734
        %1758 = vmatprep.subr.bf16.mxu0 0
        %1759 = vmatpush2.bf16.msra.mxu0 0
        %1760 = vmatprep.subr.bf16.mxu0 0
        %1761 = vmatpush2.bf16.msra.mxu0 0
        %1762 = vmatprep.subr.bf16.mxu0 0
        %1763 = vmatpush2.bf16.msra.mxu0 0
        %1764 = vmatprep.subr.bf16.mxu0 0
        %1765 = vmatpush2.bf16.msra.mxu0 0
        %1766 = vmatprep.subr.bf16.mxu0 0
        %1767 = vmatpush2.bf16.msra.mxu0 0
        %1768 = vmatprep.subr.bf16.mxu0 0
        %1769 = vmatpush2.bf16.msra.mxu0 0
        %1770 = vmatprep.subr.bf16.mxu0 0
        %1771 = vmatpush2.bf16.msra.mxu0 0
        %1772 = vmatprep.subr.bf16.mxu0 0
        %1773 = vmatpush2.bf16.msra.mxu0 0
        %1774 = vmatprep.mubr.bf16.mxu0 0
        %1775 = vmatmul.mubr.bf16.gmra.mxu0 %v1731
        %v1776 = vpop.f32.mrf.mxu0
        %v1777 = vadd.f32 0.0, %v1776
        %v1778 = vpop.f32.mrf.mxu0
        %v1779 = vadd.f32 0.0, %v1778
        %v1780 = vpop.f32.mrf.mxu0
        %v1781 = vpop.f32.mrf.mxu0
        %1782 = vdwg.mxu0
        %1783 = vmatprep.subr.bf16.mxu0 0
        %1784 = vmatpush1.bf16.msra.mxu0 0
        %1785 = vmatprep.subr.bf16.mxu0 0
        %1786 = vmatpush1.bf16.msra.mxu0 0
        %1787 = vmatprep.subr.bf16.mxu0 0
        %1788 = vmatpush1.bf16.msra.mxu0 0
        %1789 = vmatprep.subr.bf16.mxu0 0
        %1790 = vmatpush1.bf16.msra.mxu0 0
        %1791 = vmatprep.subr.bf16.mxu0 0
        %1792 = vmatpush1.bf16.msra.mxu0 0
        %1793 = vmatprep.subr.bf16.mxu0 0
        %1794 = vmatpush1.bf16.msra.mxu0 0
        %1795 = vmatprep.subr.bf16.mxu0 0
        %1796 = vmatpush1.bf16.msra.mxu0 0
        %1797 = vmatprep.subr.bf16.mxu0 0
        %1798 = vmatpush1.bf16.msra.mxu0 %v1740
        %1799 = vmatprep.subr.bf16.mxu0 0
        %1800 = vmatpush2.bf16.msra.mxu0 0
        %1801 = vmatprep.subr.bf16.mxu0 0
        %1802 = vmatpush2.bf16.msra.mxu0 0
        %1803 = vmatprep.subr.bf16.mxu0 0
        %1804 = vmatpush2.bf16.msra.mxu0 0
        %1805 = vmatprep.subr.bf16.mxu0 0
        %1806 = vmatpush2.bf16.msra.mxu0 0
        %1807 = vmatprep.subr.bf16.mxu0 0
        %1808 = vmatpush2.bf16.msra.mxu0 0
        %1809 = vmatprep.subr.bf16.mxu0 0
        %1810 = vmatpush2.bf16.msra.mxu0 0
        %1811 = vmatprep.subr.bf16.mxu0 0
        %1812 = vmatpush2.bf16.msra.mxu0 0
        %1813 = vmatprep.subr.bf16.mxu0 0
        %1814 = vmatpush2.bf16.msra.mxu0 0
        %1815 = vmatprep.mubr.bf16.mxu0 0
        %1816 = vmatmul.mubr.bf16.gmra.mxu0 %v1731
        %v1817 = vpop.f32.mrf.mxu0
        %v1818 = vadd.f32 0.0, %v1817
        %v1819 = vpop.f32.mrf.mxu0
        %v1820 = vpop.f32.mrf.mxu0
        %v1821 = vpop.f32.mrf.mxu0
        %1822 = vdwg.mxu0
        %v1823 = vadd.f32 %v1716, %v1777
        %v1824 = vadd.f32 %v1717, %v1779
        %v1825 = vadd.f32 %v1718, %v1818
        %s1826 = scalar_lea.vmem %s1, 60
        %v1827 = vld [vmem:[%s1826] sm:$0xf]
        %1828 = vrot.lane.b32.xlu0 %v229, 80
        %v1829 = vpop.permute.xlu0 %1828
        %1830 = vrot.lane.b32.xlu0 %v230, 80
        %v1831 = vpop.permute.xlu0 %1830
        %1832 = vrot.lane.b32.xlu0 %v231, 80
        %v1833 = vpop.permute.xlu0 %1832
        %vm1834 = vcmask 654336
        %v1835 = vsel %vm1834, %v1829, %v1831
        %v1836 = vsel %vm1834, %v1831, %v1833
        %v1838 = vsel %vm247, %v1827, 0
        %v1841 = vsel %vm251, %v1835, 0
        %v1844 = vsel %vm251, %v1836, 0
        %v1847 = vsel %vm251, %v1833, 0
        %1849 = vmatprep.subr.bf16.mxu0 0
        %1850 = vmatpush1.bf16.msra.mxu0 0
        %1851 = vmatprep.subr.bf16.mxu0 0
        %1852 = vmatpush1.bf16.msra.mxu0 0
        %1853 = vmatprep.subr.bf16.mxu0 0
        %1854 = vmatpush1.bf16.msra.mxu0 0
        %1855 = vmatprep.subr.bf16.mxu0 0
        %1856 = vmatpush1.bf16.msra.mxu0 0
        %1857 = vmatprep.subr.bf16.mxu0 0
        %1858 = vmatpush1.bf16.msra.mxu0 0
        %1859 = vmatprep.subr.bf16.mxu0 0
        %1860 = vmatpush1.bf16.msra.mxu0 0
        %1861 = vmatprep.subr.bf16.mxu0 0
        %1862 = vmatpush1.bf16.msra.mxu0 0
        %1863 = vmatprep.subr.bf16.mxu0 %v1844
        %1864 = vmatpush1.bf16.msra.mxu0 %v1841
        %1865 = vmatprep.subr.bf16.mxu0 0
        %1866 = vmatpush2.bf16.msra.mxu0 0
        %1867 = vmatprep.subr.bf16.mxu0 0
        %1868 = vmatpush2.bf16.msra.mxu0 0
        %1869 = vmatprep.subr.bf16.mxu0 0
        %1870 = vmatpush2.bf16.msra.mxu0 0
        %1871 = vmatprep.subr.bf16.mxu0 0
        %1872 = vmatpush2.bf16.msra.mxu0 0
        %1873 = vmatprep.subr.bf16.mxu0 0
        %1874 = vmatpush2.bf16.msra.mxu0 0
        %1875 = vmatprep.subr.bf16.mxu0 0
        %1876 = vmatpush2.bf16.msra.mxu0 0
        %1877 = vmatprep.subr.bf16.mxu0 0
        %1878 = vmatpush2.bf16.msra.mxu0 0
        %1879 = vmatprep.subr.bf16.mxu0 0
        %1880 = vmatpush2.bf16.msra.mxu0 0
        %1881 = vmatprep.mubr.bf16.mxu0 0
        %1882 = vmatmul.mubr.bf16.gmra.mxu0 %v1838
        %v1883 = vpop.f32.mrf.mxu0
        %v1884 = vadd.f32 0.0, %v1883
        %v1885 = vpop.f32.mrf.mxu0
        %v1886 = vadd.f32 0.0, %v1885
        %v1887 = vpop.f32.mrf.mxu0
        %v1888 = vpop.f32.mrf.mxu0
        %1889 = vdwg.mxu0
        %1890 = vmatprep.subr.bf16.mxu0 0
        %1891 = vmatpush1.bf16.msra.mxu0 0
        %1892 = vmatprep.subr.bf16.mxu0 0
        %1893 = vmatpush1.bf16.msra.mxu0 0
        %1894 = vmatprep.subr.bf16.mxu0 0
        %1895 = vmatpush1.bf16.msra.mxu0 0
        %1896 = vmatprep.subr.bf16.mxu0 0
        %1897 = vmatpush1.bf16.msra.mxu0 0
        %1898 = vmatprep.subr.bf16.mxu0 0
        %1899 = vmatpush1.bf16.msra.mxu0 0
        %1900 = vmatprep.subr.bf16.mxu0 0
        %1901 = vmatpush1.bf16.msra.mxu0 0
        %1902 = vmatprep.subr.bf16.mxu0 0
        %1903 = vmatpush1.bf16.msra.mxu0 0
        %1904 = vmatprep.subr.bf16.mxu0 0
        %1905 = vmatpush1.bf16.msra.mxu0 %v1847
        %1906 = vmatprep.subr.bf16.mxu0 0
        %1907 = vmatpush2.bf16.msra.mxu0 0
        %1908 = vmatprep.subr.bf16.mxu0 0
        %1909 = vmatpush2.bf16.msra.mxu0 0
        %1910 = vmatprep.subr.bf16.mxu0 0
        %1911 = vmatpush2.bf16.msra.mxu0 0
        %1912 = vmatprep.subr.bf16.mxu0 0
        %1913 = vmatpush2.bf16.msra.mxu0 0
        %1914 = vmatprep.subr.bf16.mxu0 0
        %1915 = vmatpush2.bf16.msra.mxu0 0
        %1916 = vmatprep.subr.bf16.mxu0 0
        %1917 = vmatpush2.bf16.msra.mxu0 0
        %1918 = vmatprep.subr.bf16.mxu0 0
        %1919 = vmatpush2.bf16.msra.mxu0 0
        %1920 = vmatprep.subr.bf16.mxu0 0
        %1921 = vmatpush2.bf16.msra.mxu0 0
        %1922 = vmatprep.mubr.bf16.mxu0 0
        %1923 = vmatmul.mubr.bf16.gmra.mxu0 %v1838
        %v1924 = vpop.f32.mrf.mxu0
        %v1925 = vadd.f32 0.0, %v1924
        %v1926 = vpop.f32.mrf.mxu0
        %v1927 = vpop.f32.mrf.mxu0
        %v1928 = vpop.f32.mrf.mxu0
        %1929 = vdwg.mxu0
        %v1930 = vadd.f32 %v1823, %v1884
        %v1931 = vadd.f32 %v1824, %v1886
        %v1932 = vadd.f32 %v1825, %v1925
        %s1933 = scalar_lea.vmem %s1, 64
        %v1934 = vld [vmem:[%s1933] sm:$0xf]
        %1935 = vrot.lane.b32.xlu0 %v229, 79
        %v1936 = vpop.permute.xlu0 %1935
        %1937 = vrot.lane.b32.xlu0 %v230, 79
        %v1938 = vpop.permute.xlu0 %1937
        %1939 = vrot.lane.b32.xlu0 %v231, 79
        %v1940 = vpop.permute.xlu0 %1939
        %vm1941 = vcmask 646144
        %v1942 = vsel %vm1941, %v1936, %v1938
        %v1943 = vsel %vm1941, %v1938, %v1940
        %v1945 = vsel %vm247, %v1934, 0
        %v1948 = vsel %vm251, %v1942, 0
        %v1951 = vsel %vm251, %v1943, 0
        %v1954 = vsel %vm251, %v1940, 0
        %1956 = vmatprep.subr.bf16.mxu0 0
        %1957 = vmatpush1.bf16.msra.mxu0 0
        %1958 = vmatprep.subr.bf16.mxu0 0
        %1959 = vmatpush1.bf16.msra.mxu0 0
        %1960 = vmatprep.subr.bf16.mxu0 0
        %1961 = vmatpush1.bf16.msra.mxu0 0
        %1962 = vmatprep.subr.bf16.mxu0 0
        %1963 = vmatpush1.bf16.msra.mxu0 0
        %1964 = vmatprep.subr.bf16.mxu0 0
        %1965 = vmatpush1.bf16.msra.mxu0 0
        %1966 = vmatprep.subr.bf16.mxu0 0
        %1967 = vmatpush1.bf16.msra.mxu0 0
        %1968 = vmatprep.subr.bf16.mxu0 0
        %1969 = vmatpush1.bf16.msra.mxu0 0
        %1970 = vmatprep.subr.bf16.mxu0 %v1951
        %1971 = vmatpush1.bf16.msra.mxu0 %v1948
        %1972 = vmatprep.subr.bf16.mxu0 0
        %1973 = vmatpush2.bf16.msra.mxu0 0
        %1974 = vmatprep.subr.bf16.mxu0 0
        %1975 = vmatpush2.bf16.msra.mxu0 0
        %1976 = vmatprep.subr.bf16.mxu0 0
        %1977 = vmatpush2.bf16.msra.mxu0 0
        %1978 = vmatprep.subr.bf16.mxu0 0
        %1979 = vmatpush2.bf16.msra.mxu0 0
        %1980 = vmatprep.subr.bf16.mxu0 0
        %1981 = vmatpush2.bf16.msra.mxu0 0
        %1982 = vmatprep.subr.bf16.mxu0 0
        %1983 = vmatpush2.bf16.msra.mxu0 0
        %1984 = vmatprep.subr.bf16.mxu0 0
        %1985 = vmatpush2.bf16.msra.mxu0 0
        %1986 = vmatprep.subr.bf16.mxu0 0
        %1987 = vmatpush2.bf16.msra.mxu0 0
        %1988 = vmatprep.mubr.bf16.mxu0 0
        %1989 = vmatmul.mubr.bf16.gmra.mxu0 %v1945
        %v1990 = vpop.f32.mrf.mxu0
        %v1991 = vadd.f32 0.0, %v1990
        %v1992 = vpop.f32.mrf.mxu0
        %v1993 = vadd.f32 0.0, %v1992
        %v1994 = vpop.f32.mrf.mxu0
        %v1995 = vpop.f32.mrf.mxu0
        %1996 = vdwg.mxu0
        %1997 = vmatprep.subr.bf16.mxu0 0
        %1998 = vmatpush1.bf16.msra.mxu0 0
        %1999 = vmatprep.subr.bf16.mxu0 0
        %2000 = vmatpush1.bf16.msra.mxu0 0
        %2001 = vmatprep.subr.bf16.mxu0 0
        %2002 = vmatpush1.bf16.msra.mxu0 0
        %2003 = vmatprep.subr.bf16.mxu0 0
        %2004 = vmatpush1.bf16.msra.mxu0 0
        %2005 = vmatprep.subr.bf16.mxu0 0
        %2006 = vmatpush1.bf16.msra.mxu0 0
        %2007 = vmatprep.subr.bf16.mxu0 0
        %2008 = vmatpush1.bf16.msra.mxu0 0
        %2009 = vmatprep.subr.bf16.mxu0 0
        %2010 = vmatpush1.bf16.msra.mxu0 0
        %2011 = vmatprep.subr.bf16.mxu0 0
        %2012 = vmatpush1.bf16.msra.mxu0 %v1954
        %2013 = vmatprep.subr.bf16.mxu0 0
        %2014 = vmatpush2.bf16.msra.mxu0 0
        %2015 = vmatprep.subr.bf16.mxu0 0
        %2016 = vmatpush2.bf16.msra.mxu0 0
        %2017 = vmatprep.subr.bf16.mxu0 0
        %2018 = vmatpush2.bf16.msra.mxu0 0
        %2019 = vmatprep.subr.bf16.mxu0 0
        %2020 = vmatpush2.bf16.msra.mxu0 0
        %2021 = vmatprep.subr.bf16.mxu0 0
        %2022 = vmatpush2.bf16.msra.mxu0 0
        %2023 = vmatprep.subr.bf16.mxu0 0
        %2024 = vmatpush2.bf16.msra.mxu0 0
        %2025 = vmatprep.subr.bf16.mxu0 0
        %2026 = vmatpush2.bf16.msra.mxu0 0
        %2027 = vmatprep.subr.bf16.mxu0 0
        %2028 = vmatpush2.bf16.msra.mxu0 0
        %2029 = vmatprep.mubr.bf16.mxu0 0
        %2030 = vmatmul.mubr.bf16.gmra.mxu0 %v1945
        %v2031 = vpop.f32.mrf.mxu0
        %v2032 = vadd.f32 0.0, %v2031
        %v2033 = vpop.f32.mrf.mxu0
        %v2034 = vpop.f32.mrf.mxu0
        %v2035 = vpop.f32.mrf.mxu0
        %2036 = vdwg.mxu0
        %v2037 = vadd.f32 %v1930, %v1991
        %v2038 = vadd.f32 %v1931, %v1993
        %v2039 = vadd.f32 %v1932, %v2032
        %s2040 = scalar_lea.vmem %s1, 68
        %v2041 = vld [vmem:[%s2040] sm:$0xf]
        %2042 = vrot.lane.b32.xlu0 %v229, 78
        %v2043 = vpop.permute.xlu0 %2042
        %2044 = vrot.lane.b32.xlu0 %v230, 78
        %v2045 = vpop.permute.xlu0 %2044
        %2046 = vrot.lane.b32.xlu0 %v231, 78
        %v2047 = vpop.permute.xlu0 %2046
        %vm2048 = vcmask 637952
        %v2049 = vsel %vm2048, %v2043, %v2045
        %v2050 = vsel %vm2048, %v2045, %v2047
        %v2052 = vsel %vm247, %v2041, 0
        %v2055 = vsel %vm251, %v2049, 0
        %v2058 = vsel %vm251, %v2050, 0
        %v2061 = vsel %vm251, %v2047, 0
        %2063 = vmatprep.subr.bf16.mxu0 0
        %2064 = vmatpush1.bf16.msra.mxu0 0
        %2065 = vmatprep.subr.bf16.mxu0 0
        %2066 = vmatpush1.bf16.msra.mxu0 0
        %2067 = vmatprep.subr.bf16.mxu0 0
        %2068 = vmatpush1.bf16.msra.mxu0 0
        %2069 = vmatprep.subr.bf16.mxu0 0
        %2070 = vmatpush1.bf16.msra.mxu0 0
        %2071 = vmatprep.subr.bf16.mxu0 0
        %2072 = vmatpush1.bf16.msra.mxu0 0
        %2073 = vmatprep.subr.bf16.mxu0 0
        %2074 = vmatpush1.bf16.msra.mxu0 0
        %2075 = vmatprep.subr.bf16.mxu0 0
        %2076 = vmatpush1.bf16.msra.mxu0 0
        %2077 = vmatprep.subr.bf16.mxu0 %v2058
        %2078 = vmatpush1.bf16.msra.mxu0 %v2055
        %2079 = vmatprep.subr.bf16.mxu0 0
        %2080 = vmatpush2.bf16.msra.mxu0 0
        %2081 = vmatprep.subr.bf16.mxu0 0
        %2082 = vmatpush2.bf16.msra.mxu0 0
        %2083 = vmatprep.subr.bf16.mxu0 0
        %2084 = vmatpush2.bf16.msra.mxu0 0
        %2085 = vmatprep.subr.bf16.mxu0 0
        %2086 = vmatpush2.bf16.msra.mxu0 0
        %2087 = vmatprep.subr.bf16.mxu0 0
        %2088 = vmatpush2.bf16.msra.mxu0 0
        %2089 = vmatprep.subr.bf16.mxu0 0
        %2090 = vmatpush2.bf16.msra.mxu0 0
        %2091 = vmatprep.subr.bf16.mxu0 0
        %2092 = vmatpush2.bf16.msra.mxu0 0
        %2093 = vmatprep.subr.bf16.mxu0 0
        %2094 = vmatpush2.bf16.msra.mxu0 0
        %2095 = vmatprep.mubr.bf16.mxu0 0
        %2096 = vmatmul.mubr.bf16.gmra.mxu0 %v2052
        %v2097 = vpop.f32.mrf.mxu0
        %v2098 = vadd.f32 0.0, %v2097
        %v2099 = vpop.f32.mrf.mxu0
        %v2100 = vadd.f32 0.0, %v2099
        %v2101 = vpop.f32.mrf.mxu0
        %v2102 = vpop.f32.mrf.mxu0
        %2103 = vdwg.mxu0
        %2104 = vmatprep.subr.bf16.mxu0 0
        %2105 = vmatpush1.bf16.msra.mxu0 0
        %2106 = vmatprep.subr.bf16.mxu0 0
        %2107 = vmatpush1.bf16.msra.mxu0 0
        %2108 = vmatprep.subr.bf16.mxu0 0
        %2109 = vmatpush1.bf16.msra.mxu0 0
        %2110 = vmatprep.subr.bf16.mxu0 0
        %2111 = vmatpush1.bf16.msra.mxu0 0
        %2112 = vmatprep.subr.bf16.mxu0 0
        %2113 = vmatpush1.bf16.msra.mxu0 0
        %2114 = vmatprep.subr.bf16.mxu0 0
        %2115 = vmatpush1.bf16.msra.mxu0 0
        %2116 = vmatprep.subr.bf16.mxu0 0
        %2117 = vmatpush1.bf16.msra.mxu0 0
        %2118 = vmatprep.subr.bf16.mxu0 0
        %2119 = vmatpush1.bf16.msra.mxu0 %v2061
        %2120 = vmatprep.subr.bf16.mxu0 0
        %2121 = vmatpush2.bf16.msra.mxu0 0
        %2122 = vmatprep.subr.bf16.mxu0 0
        %2123 = vmatpush2.bf16.msra.mxu0 0
        %2124 = vmatprep.subr.bf16.mxu0 0
        %2125 = vmatpush2.bf16.msra.mxu0 0
        %2126 = vmatprep.subr.bf16.mxu0 0
        %2127 = vmatpush2.bf16.msra.mxu0 0
        %2128 = vmatprep.subr.bf16.mxu0 0
        %2129 = vmatpush2.bf16.msra.mxu0 0
        %2130 = vmatprep.subr.bf16.mxu0 0
        %2131 = vmatpush2.bf16.msra.mxu0 0
        %2132 = vmatprep.subr.bf16.mxu0 0
        %2133 = vmatpush2.bf16.msra.mxu0 0
        %2134 = vmatprep.subr.bf16.mxu0 0
        %2135 = vmatpush2.bf16.msra.mxu0 0
        %2136 = vmatprep.mubr.bf16.mxu0 0
        %2137 = vmatmul.mubr.bf16.gmra.mxu0 %v2052
        %v2138 = vpop.f32.mrf.mxu0
        %v2139 = vadd.f32 0.0, %v2138
        %v2140 = vpop.f32.mrf.mxu0
        %v2141 = vpop.f32.mrf.mxu0
        %v2142 = vpop.f32.mrf.mxu0
        %2143 = vdwg.mxu0
        %v2144 = vadd.f32 %v2037, %v2098
        %v2145 = vadd.f32 %v2038, %v2100
        %v2146 = vadd.f32 %v2039, %v2139
        %s2147 = scalar_lea.vmem %s1, 72
        %v2148 = vld [vmem:[%s2147] sm:$0xf]
        %2149 = vrot.lane.b32.xlu0 %v229, 77
        %v2150 = vpop.permute.xlu0 %2149
        %2151 = vrot.lane.b32.xlu0 %v230, 77
        %v2152 = vpop.permute.xlu0 %2151
        %2153 = vrot.lane.b32.xlu0 %v231, 77
        %v2154 = vpop.permute.xlu0 %2153
        %vm2155 = vcmask 629760
        %v2156 = vsel %vm2155, %v2150, %v2152
        %v2157 = vsel %vm2155, %v2152, %v2154
        %v2159 = vsel %vm247, %v2148, 0
        %v2162 = vsel %vm251, %v2156, 0
        %v2165 = vsel %vm251, %v2157, 0
        %v2168 = vsel %vm251, %v2154, 0
        %2170 = vmatprep.subr.bf16.mxu0 0
        %2171 = vmatpush1.bf16.msra.mxu0 0
        %2172 = vmatprep.subr.bf16.mxu0 0
        %2173 = vmatpush1.bf16.msra.mxu0 0
        %2174 = vmatprep.subr.bf16.mxu0 0
        %2175 = vmatpush1.bf16.msra.mxu0 0
        %2176 = vmatprep.subr.bf16.mxu0 0
        %2177 = vmatpush1.bf16.msra.mxu0 0
        %2178 = vmatprep.subr.bf16.mxu0 0
        %2179 = vmatpush1.bf16.msra.mxu0 0
        %2180 = vmatprep.subr.bf16.mxu0 0
        %2181 = vmatpush1.bf16.msra.mxu0 0
        %2182 = vmatprep.subr.bf16.mxu0 0
        %2183 = vmatpush1.bf16.msra.mxu0 0
        %2184 = vmatprep.subr.bf16.mxu0 %v2165
        %2185 = vmatpush1.bf16.msra.mxu0 %v2162
        %2186 = vmatprep.subr.bf16.mxu0 0
        %2187 = vmatpush2.bf16.msra.mxu0 0
        %2188 = vmatprep.subr.bf16.mxu0 0
        %2189 = vmatpush2.bf16.msra.mxu0 0
        %2190 = vmatprep.subr.bf16.mxu0 0
        %2191 = vmatpush2.bf16.msra.mxu0 0
        %2192 = vmatprep.subr.bf16.mxu0 0
        %2193 = vmatpush2.bf16.msra.mxu0 0
        %2194 = vmatprep.subr.bf16.mxu0 0
        %2195 = vmatpush2.bf16.msra.mxu0 0
        %2196 = vmatprep.subr.bf16.mxu0 0
        %2197 = vmatpush2.bf16.msra.mxu0 0
        %2198 = vmatprep.subr.bf16.mxu0 0
        %2199 = vmatpush2.bf16.msra.mxu0 0
        %2200 = vmatprep.subr.bf16.mxu0 0
        %2201 = vmatpush2.bf16.msra.mxu0 0
        %2202 = vmatprep.mubr.bf16.mxu0 0
        %2203 = vmatmul.mubr.bf16.gmra.mxu0 %v2159
        %v2204 = vpop.f32.mrf.mxu0
        %v2205 = vadd.f32 0.0, %v2204
        %v2206 = vpop.f32.mrf.mxu0
        %v2207 = vadd.f32 0.0, %v2206
        %v2208 = vpop.f32.mrf.mxu0
        %v2209 = vpop.f32.mrf.mxu0
        %2210 = vdwg.mxu0
        %2211 = vmatprep.subr.bf16.mxu0 0
        %2212 = vmatpush1.bf16.msra.mxu0 0
        %2213 = vmatprep.subr.bf16.mxu0 0
        %2214 = vmatpush1.bf16.msra.mxu0 0
        %2215 = vmatprep.subr.bf16.mxu0 0
        %2216 = vmatpush1.bf16.msra.mxu0 0
        %2217 = vmatprep.subr.bf16.mxu0 0
        %2218 = vmatpush1.bf16.msra.mxu0 0
        %2219 = vmatprep.subr.bf16.mxu0 0
        %2220 = vmatpush1.bf16.msra.mxu0 0
        %2221 = vmatprep.subr.bf16.mxu0 0
        %2222 = vmatpush1.bf16.msra.mxu0 0
        %2223 = vmatprep.subr.bf16.mxu0 0
        %2224 = vmatpush1.bf16.msra.mxu0 0
        %2225 = vmatprep.subr.bf16.mxu0 0
        %2226 = vmatpush1.bf16.msra.mxu0 %v2168
        %2227 = vmatprep.subr.bf16.mxu0 0
        %2228 = vmatpush2.bf16.msra.mxu0 0
        %2229 = vmatprep.subr.bf16.mxu0 0
        %2230 = vmatpush2.bf16.msra.mxu0 0
        %2231 = vmatprep.subr.bf16.mxu0 0
        %2232 = vmatpush2.bf16.msra.mxu0 0
        %2233 = vmatprep.subr.bf16.mxu0 0
        %2234 = vmatpush2.bf16.msra.mxu0 0
        %2235 = vmatprep.subr.bf16.mxu0 0
        %2236 = vmatpush2.bf16.msra.mxu0 0
        %2237 = vmatprep.subr.bf16.mxu0 0
        %2238 = vmatpush2.bf16.msra.mxu0 0
        %2239 = vmatprep.subr.bf16.mxu0 0
        %2240 = vmatpush2.bf16.msra.mxu0 0
        %2241 = vmatprep.subr.bf16.mxu0 0
        %2242 = vmatpush2.bf16.msra.mxu0 0
        %2243 = vmatprep.mubr.bf16.mxu0 0
        %2244 = vmatmul.mubr.bf16.gmra.mxu0 %v2159
        %v2245 = vpop.f32.mrf.mxu0
        %v2246 = vadd.f32 0.0, %v2245
        %v2247 = vpop.f32.mrf.mxu0
        %v2248 = vpop.f32.mrf.mxu0
        %v2249 = vpop.f32.mrf.mxu0
        %2250 = vdwg.mxu0
        %v2251 = vadd.f32 %v2144, %v2205
        %v2252 = vadd.f32 %v2145, %v2207
        %v2253 = vadd.f32 %v2146, %v2246
        %s2254 = scalar_lea.vmem %s1, 76
        %v2255 = vld [vmem:[%s2254] sm:$0xf]
        %2256 = vrot.lane.b32.xlu0 %v229, 76
        %v2257 = vpop.permute.xlu0 %2256
        %2258 = vrot.lane.b32.xlu0 %v230, 76
        %v2259 = vpop.permute.xlu0 %2258
        %2260 = vrot.lane.b32.xlu0 %v231, 76
        %v2261 = vpop.permute.xlu0 %2260
        %vm2262 = vcmask 621568
        %v2263 = vsel %vm2262, %v2257, %v2259
        %v2264 = vsel %vm2262, %v2259, %v2261
        %v2266 = vsel %vm247, %v2255, 0
        %v2269 = vsel %vm251, %v2263, 0
        %v2272 = vsel %vm251, %v2264, 0
        %v2275 = vsel %vm251, %v2261, 0
        %2277 = vmatprep.subr.bf16.mxu0 0
        %2278 = vmatpush1.bf16.msra.mxu0 0
        %2279 = vmatprep.subr.bf16.mxu0 0
        %2280 = vmatpush1.bf16.msra.mxu0 0
        %2281 = vmatprep.subr.bf16.mxu0 0
        %2282 = vmatpush1.bf16.msra.mxu0 0
        %2283 = vmatprep.subr.bf16.mxu0 0
        %2284 = vmatpush1.bf16.msra.mxu0 0
        %2285 = vmatprep.subr.bf16.mxu0 0
        %2286 = vmatpush1.bf16.msra.mxu0 0
        %2287 = vmatprep.subr.bf16.mxu0 0
        %2288 = vmatpush1.bf16.msra.mxu0 0
        %2289 = vmatprep.subr.bf16.mxu0 0
        %2290 = vmatpush1.bf16.msra.mxu0 0
        %2291 = vmatprep.subr.bf16.mxu0 %v2272
        %2292 = vmatpush1.bf16.msra.mxu0 %v2269
        %2293 = vmatprep.subr.bf16.mxu0 0
        %2294 = vmatpush2.bf16.msra.mxu0 0
        %2295 = vmatprep.subr.bf16.mxu0 0
        %2296 = vmatpush2.bf16.msra.mxu0 0
        %2297 = vmatprep.subr.bf16.mxu0 0
        %2298 = vmatpush2.bf16.msra.mxu0 0
        %2299 = vmatprep.subr.bf16.mxu0 0
        %2300 = vmatpush2.bf16.msra.mxu0 0
        %2301 = vmatprep.subr.bf16.mxu0 0
        %2302 = vmatpush2.bf16.msra.mxu0 0
        %2303 = vmatprep.subr.bf16.mxu0 0
        %2304 = vmatpush2.bf16.msra.mxu0 0
        %2305 = vmatprep.subr.bf16.mxu0 0
        %2306 = vmatpush2.bf16.msra.mxu0 0
        %2307 = vmatprep.subr.bf16.mxu0 0
        %2308 = vmatpush2.bf16.msra.mxu0 0
        %2309 = vmatprep.mubr.bf16.mxu0 0
        %2310 = vmatmul.mubr.bf16.gmra.mxu0 %v2266
        %v2311 = vpop.f32.mrf.mxu0
        %v2312 = vadd.f32 0.0, %v2311
        %v2313 = vpop.f32.mrf.mxu0
        %v2314 = vadd.f32 0.0, %v2313
        %v2315 = vpop.f32.mrf.mxu0
        %v2316 = vpop.f32.mrf.mxu0
        %2317 = vdwg.mxu0
        %2318 = vmatprep.subr.bf16.mxu0 0
        %2319 = vmatpush1.bf16.msra.mxu0 0
        %2320 = vmatprep.subr.bf16.mxu0 0
        %2321 = vmatpush1.bf16.msra.mxu0 0
        %2322 = vmatprep.subr.bf16.mxu0 0
        %2323 = vmatpush1.bf16.msra.mxu0 0
        %2324 = vmatprep.subr.bf16.mxu0 0
        %2325 = vmatpush1.bf16.msra.mxu0 0
        %2326 = vmatprep.subr.bf16.mxu0 0
        %2327 = vmatpush1.bf16.msra.mxu0 0
        %2328 = vmatprep.subr.bf16.mxu0 0
        %2329 = vmatpush1.bf16.msra.mxu0 0
        %2330 = vmatprep.subr.bf16.mxu0 0
        %2331 = vmatpush1.bf16.msra.mxu0 0
        %2332 = vmatprep.subr.bf16.mxu0 0
        %2333 = vmatpush1.bf16.msra.mxu0 %v2275
        %2334 = vmatprep.subr.bf16.mxu0 0
        %2335 = vmatpush2.bf16.msra.mxu0 0
        %2336 = vmatprep.subr.bf16.mxu0 0
        %2337 = vmatpush2.bf16.msra.mxu0 0
        %2338 = vmatprep.subr.bf16.mxu0 0
        %2339 = vmatpush2.bf16.msra.mxu0 0
        %2340 = vmatprep.subr.bf16.mxu0 0
        %2341 = vmatpush2.bf16.msra.mxu0 0
        %2342 = vmatprep.subr.bf16.mxu0 0
        %2343 = vmatpush2.bf16.msra.mxu0 0
        %2344 = vmatprep.subr.bf16.mxu0 0
        %2345 = vmatpush2.bf16.msra.mxu0 0
        %2346 = vmatprep.subr.bf16.mxu0 0
        %2347 = vmatpush2.bf16.msra.mxu0 0
        %2348 = vmatprep.subr.bf16.mxu0 0
        %2349 = vmatpush2.bf16.msra.mxu0 0
        %2350 = vmatprep.mubr.bf16.mxu0 0
        %2351 = vmatmul.mubr.bf16.gmra.mxu0 %v2266
        %v2352 = vpop.f32.mrf.mxu0
        %v2353 = vadd.f32 0.0, %v2352
        %v2354 = vpop.f32.mrf.mxu0
        %v2355 = vpop.f32.mrf.mxu0
        %v2356 = vpop.f32.mrf.mxu0
        %2357 = vdwg.mxu0
        %v2358 = vadd.f32 %v2251, %v2312
        %v2359 = vadd.f32 %v2252, %v2314
        %v2360 = vadd.f32 %v2253, %v2353
        %s2361 = scalar_lea.vmem %s1, 80
        %v2362 = vld [vmem:[%s2361] sm:$0xf]
        %2363 = vrot.lane.b32.xlu0 %v229, 64
        %v2364 = vpop.permute.xlu0 %2363
        %2365 = vrot.lane.b32.xlu0 %v230, 64
        %v2366 = vpop.permute.xlu0 %2365
        %2367 = vrot.lane.b32.xlu0 %v231, 64
        %v2368 = vpop.permute.xlu0 %2367
        %vm2369 = vcmask 523264
        %v2370 = vsel %vm2369, %v2364, %v2366
        %v2371 = vsel %vm2369, %v2366, %v2368
        %v2373 = vsel %vm247, %v2362, 0
        %v2376 = vsel %vm251, %v2370, 0
        %v2379 = vsel %vm251, %v2371, 0
        %v2382 = vsel %vm251, %v2368, 0
        %2384 = vmatprep.subr.bf16.mxu0 0
        %2385 = vmatpush1.bf16.msra.mxu0 0
        %2386 = vmatprep.subr.bf16.mxu0 0
        %2387 = vmatpush1.bf16.msra.mxu0 0
        %2388 = vmatprep.subr.bf16.mxu0 0
        %2389 = vmatpush1.bf16.msra.mxu0 0
        %2390 = vmatprep.subr.bf16.mxu0 0
        %2391 = vmatpush1.bf16.msra.mxu0 0
        %2392 = vmatprep.subr.bf16.mxu0 0
        %2393 = vmatpush1.bf16.msra.mxu0 0
        %2394 = vmatprep.subr.bf16.mxu0 0
        %2395 = vmatpush1.bf16.msra.mxu0 0
        %2396 = vmatprep.subr.bf16.mxu0 0
        %2397 = vmatpush1.bf16.msra.mxu0 0
        %2398 = vmatprep.subr.bf16.mxu0 %v2379
        %2399 = vmatpush1.bf16.msra.mxu0 %v2376
        %2400 = vmatprep.subr.bf16.mxu0 0
        %2401 = vmatpush2.bf16.msra.mxu0 0
        %2402 = vmatprep.subr.bf16.mxu0 0
        %2403 = vmatpush2.bf16.msra.mxu0 0
        %2404 = vmatprep.subr.bf16.mxu0 0
        %2405 = vmatpush2.bf16.msra.mxu0 0
        %2406 = vmatprep.subr.bf16.mxu0 0
        %2407 = vmatpush2.bf16.msra.mxu0 0
        %2408 = vmatprep.subr.bf16.mxu0 0
        %2409 = vmatpush2.bf16.msra.mxu0 0
        %2410 = vmatprep.subr.bf16.mxu0 0
        %2411 = vmatpush2.bf16.msra.mxu0 0
        %2412 = vmatprep.subr.bf16.mxu0 0
        %2413 = vmatpush2.bf16.msra.mxu0 0
        %2414 = vmatprep.subr.bf16.mxu0 0
        %2415 = vmatpush2.bf16.msra.mxu0 0
        %2416 = vmatprep.mubr.bf16.mxu0 0
        %2417 = vmatmul.mubr.bf16.gmra.mxu0 %v2373
        %v2418 = vpop.f32.mrf.mxu0
        %v2419 = vadd.f32 0.0, %v2418
        %v2420 = vpop.f32.mrf.mxu0
        %v2421 = vadd.f32 0.0, %v2420
        %v2422 = vpop.f32.mrf.mxu0
        %v2423 = vpop.f32.mrf.mxu0
        %2424 = vdwg.mxu0
        %2425 = vmatprep.subr.bf16.mxu0 0
        %2426 = vmatpush1.bf16.msra.mxu0 0
        %2427 = vmatprep.subr.bf16.mxu0 0
        %2428 = vmatpush1.bf16.msra.mxu0 0
        %2429 = vmatprep.subr.bf16.mxu0 0
        %2430 = vmatpush1.bf16.msra.mxu0 0
        %2431 = vmatprep.subr.bf16.mxu0 0
        %2432 = vmatpush1.bf16.msra.mxu0 0
        %2433 = vmatprep.subr.bf16.mxu0 0
        %2434 = vmatpush1.bf16.msra.mxu0 0
        %2435 = vmatprep.subr.bf16.mxu0 0
        %2436 = vmatpush1.bf16.msra.mxu0 0
        %2437 = vmatprep.subr.bf16.mxu0 0
        %2438 = vmatpush1.bf16.msra.mxu0 0
        %2439 = vmatprep.subr.bf16.mxu0 0
        %2440 = vmatpush1.bf16.msra.mxu0 %v2382
        %2441 = vmatprep.subr.bf16.mxu0 0
        %2442 = vmatpush2.bf16.msra.mxu0 0
        %2443 = vmatprep.subr.bf16.mxu0 0
        %2444 = vmatpush2.bf16.msra.mxu0 0
        %2445 = vmatprep.subr.bf16.mxu0 0
        %2446 = vmatpush2.bf16.msra.mxu0 0
        %2447 = vmatprep.subr.bf16.mxu0 0
        %2448 = vmatpush2.bf16.msra.mxu0 0
        %2449 = vmatprep.subr.bf16.mxu0 0
        %2450 = vmatpush2.bf16.msra.mxu0 0
        %2451 = vmatprep.subr.bf16.mxu0 0
        %2452 = vmatpush2.bf16.msra.mxu0 0
        %2453 = vmatprep.subr.bf16.mxu0 0
        %2454 = vmatpush2.bf16.msra.mxu0 0
        %2455 = vmatprep.subr.bf16.mxu0 0
        %2456 = vmatpush2.bf16.msra.mxu0 0
        %2457 = vmatprep.mubr.bf16.mxu0 0
        %2458 = vmatmul.mubr.bf16.gmra.mxu0 %v2373
        %v2459 = vpop.f32.mrf.mxu0
        %v2460 = vadd.f32 0.0, %v2459
        %v2461 = vpop.f32.mrf.mxu0
        %v2462 = vpop.f32.mrf.mxu0
        %v2463 = vpop.f32.mrf.mxu0
        %2464 = vdwg.mxu0
        %v2465 = vadd.f32 %v2358, %v2419
        %v2466 = vadd.f32 %v2359, %v2421
        %v2467 = vadd.f32 %v2360, %v2460
        %s2468 = scalar_lea.vmem %s1, 84
        %v2469 = vld [vmem:[%s2468] sm:$0xf]
        %2470 = vrot.lane.b32.xlu0 %v229, 63
        %v2471 = vpop.permute.xlu0 %2470
        %2472 = vrot.lane.b32.xlu0 %v230, 63
        %v2473 = vpop.permute.xlu0 %2472
        %2474 = vrot.lane.b32.xlu0 %v231, 63
        %v2475 = vpop.permute.xlu0 %2474
        %vm2476 = vcmask 515072
        %v2477 = vsel %vm2476, %v2471, %v2473
        %v2478 = vsel %vm2476, %v2473, %v2475
        %v2480 = vsel %vm247, %v2469, 0
        %v2483 = vsel %vm251, %v2477, 0
        %v2486 = vsel %vm251, %v2478, 0
        %v2489 = vsel %vm251, %v2475, 0
        %2491 = vmatprep.subr.bf16.mxu0 0
        %2492 = vmatpush1.bf16.msra.mxu0 0
        %2493 = vmatprep.subr.bf16.mxu0 0
        %2494 = vmatpush1.bf16.msra.mxu0 0
        %2495 = vmatprep.subr.bf16.mxu0 0
        %2496 = vmatpush1.bf16.msra.mxu0 0
        %2497 = vmatprep.subr.bf16.mxu0 0
        %2498 = vmatpush1.bf16.msra.mxu0 0
        %2499 = vmatprep.subr.bf16.mxu0 0
        %2500 = vmatpush1.bf16.msra.mxu0 0
        %2501 = vmatprep.subr.bf16.mxu0 0
        %2502 = vmatpush1.bf16.msra.mxu0 0
        %2503 = vmatprep.subr.bf16.mxu0 0
        %2504 = vmatpush1.bf16.msra.mxu0 0
        %2505 = vmatprep.subr.bf16.mxu0 %v2486
        %2506 = vmatpush1.bf16.msra.mxu0 %v2483
        %2507 = vmatprep.subr.bf16.mxu0 0
        %2508 = vmatpush2.bf16.msra.mxu0 0
        %2509 = vmatprep.subr.bf16.mxu0 0
        %2510 = vmatpush2.bf16.msra.mxu0 0
        %2511 = vmatprep.subr.bf16.mxu0 0
        %2512 = vmatpush2.bf16.msra.mxu0 0
        %2513 = vmatprep.subr.bf16.mxu0 0
        %2514 = vmatpush2.bf16.msra.mxu0 0
        %2515 = vmatprep.subr.bf16.mxu0 0
        %2516 = vmatpush2.bf16.msra.mxu0 0
        %2517 = vmatprep.subr.bf16.mxu0 0
        %2518 = vmatpush2.bf16.msra.mxu0 0
        %2519 = vmatprep.subr.bf16.mxu0 0
        %2520 = vmatpush2.bf16.msra.mxu0 0
        %2521 = vmatprep.subr.bf16.mxu0 0
        %2522 = vmatpush2.bf16.msra.mxu0 0
        %2523 = vmatprep.mubr.bf16.mxu0 0
        %2524 = vmatmul.mubr.bf16.gmra.mxu0 %v2480
        %v2525 = vpop.f32.mrf.mxu0
        %v2526 = vadd.f32 0.0, %v2525
        %v2527 = vpop.f32.mrf.mxu0
        %v2528 = vadd.f32 0.0, %v2527
        %v2529 = vpop.f32.mrf.mxu0
        %v2530 = vpop.f32.mrf.mxu0
        %2531 = vdwg.mxu0
        %2532 = vmatprep.subr.bf16.mxu0 0
        %2533 = vmatpush1.bf16.msra.mxu0 0
        %2534 = vmatprep.subr.bf16.mxu0 0
        %2535 = vmatpush1.bf16.msra.mxu0 0
        %2536 = vmatprep.subr.bf16.mxu0 0
        %2537 = vmatpush1.bf16.msra.mxu0 0
        %2538 = vmatprep.subr.bf16.mxu0 0
        %2539 = vmatpush1.bf16.msra.mxu0 0
        %2540 = vmatprep.subr.bf16.mxu0 0
        %2541 = vmatpush1.bf16.msra.mxu0 0
        %2542 = vmatprep.subr.bf16.mxu0 0
        %2543 = vmatpush1.bf16.msra.mxu0 0
        %2544 = vmatprep.subr.bf16.mxu0 0
        %2545 = vmatpush1.bf16.msra.mxu0 0
        %2546 = vmatprep.subr.bf16.mxu0 0
        %2547 = vmatpush1.bf16.msra.mxu0 %v2489
        %2548 = vmatprep.subr.bf16.mxu0 0
        %2549 = vmatpush2.bf16.msra.mxu0 0
        %2550 = vmatprep.subr.bf16.mxu0 0
        %2551 = vmatpush2.bf16.msra.mxu0 0
        %2552 = vmatprep.subr.bf16.mxu0 0
        %2553 = vmatpush2.bf16.msra.mxu0 0
        %2554 = vmatprep.subr.bf16.mxu0 0
        %2555 = vmatpush2.bf16.msra.mxu0 0
        %2556 = vmatprep.subr.bf16.mxu0 0
        %2557 = vmatpush2.bf16.msra.mxu0 0
        %2558 = vmatprep.subr.bf16.mxu0 0
        %2559 = vmatpush2.bf16.msra.mxu0 0
        %2560 = vmatprep.subr.bf16.mxu0 0
        %2561 = vmatpush2.bf16.msra.mxu0 0
        %2562 = vmatprep.subr.bf16.mxu0 0
        %2563 = vmatpush2.bf16.msra.mxu0 0
        %2564 = vmatprep.mubr.bf16.mxu0 0
        %2565 = vmatmul.mubr.bf16.gmra.mxu0 %v2480
        %v2566 = vpop.f32.mrf.mxu0
        %v2567 = vadd.f32 0.0, %v2566
        %v2568 = vpop.f32.mrf.mxu0
        %v2569 = vpop.f32.mrf.mxu0
        %v2570 = vpop.f32.mrf.mxu0
        %2571 = vdwg.mxu0
        %v2572 = vadd.f32 %v2465, %v2526
        %v2573 = vadd.f32 %v2466, %v2528
        %v2574 = vadd.f32 %v2467, %v2567
        %s2575 = scalar_lea.vmem %s1, 88
        %v2576 = vld [vmem:[%s2575] sm:$0xf]
        %2577 = vrot.lane.b32.xlu0 %v229, 62
        %v2578 = vpop.permute.xlu0 %2577
        %2579 = vrot.lane.b32.xlu0 %v230, 62
        %v2580 = vpop.permute.xlu0 %2579
        %2581 = vrot.lane.b32.xlu0 %v231, 62
        %v2582 = vpop.permute.xlu0 %2581
        %vm2583 = vcmask 506880
        %v2584 = vsel %vm2583, %v2578, %v2580
        %v2585 = vsel %vm2583, %v2580, %v2582
        %v2587 = vsel %vm247, %v2576, 0
        %v2590 = vsel %vm251, %v2584, 0
        %v2593 = vsel %vm251, %v2585, 0
        %v2596 = vsel %vm251, %v2582, 0
        %2598 = vmatprep.subr.bf16.mxu0 0
        %2599 = vmatpush1.bf16.msra.mxu0 0
        %2600 = vmatprep.subr.bf16.mxu0 0
        %2601 = vmatpush1.bf16.msra.mxu0 0
        %2602 = vmatprep.subr.bf16.mxu0 0
        %2603 = vmatpush1.bf16.msra.mxu0 0
        %2604 = vmatprep.subr.bf16.mxu0 0
        %2605 = vmatpush1.bf16.msra.mxu0 0
        %2606 = vmatprep.subr.bf16.mxu0 0
        %2607 = vmatpush1.bf16.msra.mxu0 0
        %2608 = vmatprep.subr.bf16.mxu0 0
        %2609 = vmatpush1.bf16.msra.mxu0 0
        %2610 = vmatprep.subr.bf16.mxu0 0
        %2611 = vmatpush1.bf16.msra.mxu0 0
        %2612 = vmatprep.subr.bf16.mxu0 %v2593
        %2613 = vmatpush1.bf16.msra.mxu0 %v2590
        %2614 = vmatprep.subr.bf16.mxu0 0
        %2615 = vmatpush2.bf16.msra.mxu0 0
        %2616 = vmatprep.subr.bf16.mxu0 0
        %2617 = vmatpush2.bf16.msra.mxu0 0
        %2618 = vmatprep.subr.bf16.mxu0 0
        %2619 = vmatpush2.bf16.msra.mxu0 0
        %2620 = vmatprep.subr.bf16.mxu0 0
        %2621 = vmatpush2.bf16.msra.mxu0 0
        %2622 = vmatprep.subr.bf16.mxu0 0
        %2623 = vmatpush2.bf16.msra.mxu0 0
        %2624 = vmatprep.subr.bf16.mxu0 0
        %2625 = vmatpush2.bf16.msra.mxu0 0
        %2626 = vmatprep.subr.bf16.mxu0 0
        %2627 = vmatpush2.bf16.msra.mxu0 0
        %2628 = vmatprep.subr.bf16.mxu0 0
        %2629 = vmatpush2.bf16.msra.mxu0 0
        %2630 = vmatprep.mubr.bf16.mxu0 0
        %2631 = vmatmul.mubr.bf16.gmra.mxu0 %v2587
        %v2632 = vpop.f32.mrf.mxu0
        %v2633 = vadd.f32 0.0, %v2632
        %v2634 = vpop.f32.mrf.mxu0
        %v2635 = vadd.f32 0.0, %v2634
        %v2636 = vpop.f32.mrf.mxu0
        %v2637 = vpop.f32.mrf.mxu0
        %2638 = vdwg.mxu0
        %2639 = vmatprep.subr.bf16.mxu0 0
        %2640 = vmatpush1.bf16.msra.mxu0 0
        %2641 = vmatprep.subr.bf16.mxu0 0
        %2642 = vmatpush1.bf16.msra.mxu0 0
        %2643 = vmatprep.subr.bf16.mxu0 0
        %2644 = vmatpush1.bf16.msra.mxu0 0
        %2645 = vmatprep.subr.bf16.mxu0 0
        %2646 = vmatpush1.bf16.msra.mxu0 0
        %2647 = vmatprep.subr.bf16.mxu0 0
        %2648 = vmatpush1.bf16.msra.mxu0 0
        %2649 = vmatprep.subr.bf16.mxu0 0
        %2650 = vmatpush1.bf16.msra.mxu0 0
        %2651 = vmatprep.subr.bf16.mxu0 0
        %2652 = vmatpush1.bf16.msra.mxu0 0
        %2653 = vmatprep.subr.bf16.mxu0 0
        %2654 = vmatpush1.bf16.msra.mxu0 %v2596
        %2655 = vmatprep.subr.bf16.mxu0 0
        %2656 = vmatpush2.bf16.msra.mxu0 0
        %2657 = vmatprep.subr.bf16.mxu0 0
        %2658 = vmatpush2.bf16.msra.mxu0 0
        %2659 = vmatprep.subr.bf16.mxu0 0
        %2660 = vmatpush2.bf16.msra.mxu0 0
        %2661 = vmatprep.subr.bf16.mxu0 0
        %2662 = vmatpush2.bf16.msra.mxu0 0
        %2663 = vmatprep.subr.bf16.mxu0 0
        %2664 = vmatpush2.bf16.msra.mxu0 0
        %2665 = vmatprep.subr.bf16.mxu0 0
        %2666 = vmatpush2.bf16.msra.mxu0 0
        %2667 = vmatprep.subr.bf16.mxu0 0
        %2668 = vmatpush2.bf16.msra.mxu0 0
        %2669 = vmatprep.subr.bf16.mxu0 0
        %2670 = vmatpush2.bf16.msra.mxu0 0
        %2671 = vmatprep.mubr.bf16.mxu0 0
        %2672 = vmatmul.mubr.bf16.gmra.mxu0 %v2587
        %v2673 = vpop.f32.mrf.mxu0
        %v2674 = vadd.f32 0.0, %v2673
        %v2675 = vpop.f32.mrf.mxu0
        %v2676 = vpop.f32.mrf.mxu0
        %v2677 = vpop.f32.mrf.mxu0
        %2678 = vdwg.mxu0
        %v2679 = vadd.f32 %v2572, %v2633
        %v2680 = vadd.f32 %v2573, %v2635
        %v2681 = vadd.f32 %v2574, %v2674
        %s2682 = scalar_lea.vmem %s1, 92
        %v2683 = vld [vmem:[%s2682] sm:$0xf]
        %2684 = vrot.lane.b32.xlu0 %v229, 61
        %v2685 = vpop.permute.xlu0 %2684
        %2686 = vrot.lane.b32.xlu0 %v230, 61
        %v2687 = vpop.permute.xlu0 %2686
        %2688 = vrot.lane.b32.xlu0 %v231, 61
        %v2689 = vpop.permute.xlu0 %2688
        %vm2690 = vcmask 498688
        %v2691 = vsel %vm2690, %v2685, %v2687
        %v2692 = vsel %vm2690, %v2687, %v2689
        %v2694 = vsel %vm247, %v2683, 0
        %v2697 = vsel %vm251, %v2691, 0
        %v2700 = vsel %vm251, %v2692, 0
        %v2703 = vsel %vm251, %v2689, 0
        %2705 = vmatprep.subr.bf16.mxu0 0
        %2706 = vmatpush1.bf16.msra.mxu0 0
        %2707 = vmatprep.subr.bf16.mxu0 0
        %2708 = vmatpush1.bf16.msra.mxu0 0
        %2709 = vmatprep.subr.bf16.mxu0 0
        %2710 = vmatpush1.bf16.msra.mxu0 0
        %2711 = vmatprep.subr.bf16.mxu0 0
        %2712 = vmatpush1.bf16.msra.mxu0 0
        %2713 = vmatprep.subr.bf16.mxu0 0
        %2714 = vmatpush1.bf16.msra.mxu0 0
        %2715 = vmatprep.subr.bf16.mxu0 0
        %2716 = vmatpush1.bf16.msra.mxu0 0
        %2717 = vmatprep.subr.bf16.mxu0 0
        %2718 = vmatpush1.bf16.msra.mxu0 0
        %2719 = vmatprep.subr.bf16.mxu0 %v2700
        %2720 = vmatpush1.bf16.msra.mxu0 %v2697
        %2721 = vmatprep.subr.bf16.mxu0 0
        %2722 = vmatpush2.bf16.msra.mxu0 0
        %2723 = vmatprep.subr.bf16.mxu0 0
        %2724 = vmatpush2.bf16.msra.mxu0 0
        %2725 = vmatprep.subr.bf16.mxu0 0
        %2726 = vmatpush2.bf16.msra.mxu0 0
        %2727 = vmatprep.subr.bf16.mxu0 0
        %2728 = vmatpush2.bf16.msra.mxu0 0
        %2729 = vmatprep.subr.bf16.mxu0 0
        %2730 = vmatpush2.bf16.msra.mxu0 0
        %2731 = vmatprep.subr.bf16.mxu0 0
        %2732 = vmatpush2.bf16.msra.mxu0 0
        %2733 = vmatprep.subr.bf16.mxu0 0
        %2734 = vmatpush2.bf16.msra.mxu0 0
        %2735 = vmatprep.subr.bf16.mxu0 0
        %2736 = vmatpush2.bf16.msra.mxu0 0
        %2737 = vmatprep.mubr.bf16.mxu0 0
        %2738 = vmatmul.mubr.bf16.gmra.mxu0 %v2694
        %v2739 = vpop.f32.mrf.mxu0
        %v2740 = vadd.f32 0.0, %v2739
        %v2741 = vpop.f32.mrf.mxu0
        %v2742 = vadd.f32 0.0, %v2741
        %v2743 = vpop.f32.mrf.mxu0
        %v2744 = vpop.f32.mrf.mxu0
        %2745 = vdwg.mxu0
        %2746 = vmatprep.subr.bf16.mxu0 0
        %2747 = vmatpush1.bf16.msra.mxu0 0
        %2748 = vmatprep.subr.bf16.mxu0 0
        %2749 = vmatpush1.bf16.msra.mxu0 0
        %2750 = vmatprep.subr.bf16.mxu0 0
        %2751 = vmatpush1.bf16.msra.mxu0 0
        %2752 = vmatprep.subr.bf16.mxu0 0
        %2753 = vmatpush1.bf16.msra.mxu0 0
        %2754 = vmatprep.subr.bf16.mxu0 0
        %2755 = vmatpush1.bf16.msra.mxu0 0
        %2756 = vmatprep.subr.bf16.mxu0 0
        %2757 = vmatpush1.bf16.msra.mxu0 0
        %2758 = vmatprep.subr.bf16.mxu0 0
        %2759 = vmatpush1.bf16.msra.mxu0 0
        %2760 = vmatprep.subr.bf16.mxu0 0
        %2761 = vmatpush1.bf16.msra.mxu0 %v2703
        %2762 = vmatprep.subr.bf16.mxu0 0
        %2763 = vmatpush2.bf16.msra.mxu0 0
        %2764 = vmatprep.subr.bf16.mxu0 0
        %2765 = vmatpush2.bf16.msra.mxu0 0
        %2766 = vmatprep.subr.bf16.mxu0 0
        %2767 = vmatpush2.bf16.msra.mxu0 0
        %2768 = vmatprep.subr.bf16.mxu0 0
        %2769 = vmatpush2.bf16.msra.mxu0 0
        %2770 = vmatprep.subr.bf16.mxu0 0
        %2771 = vmatpush2.bf16.msra.mxu0 0
        %2772 = vmatprep.subr.bf16.mxu0 0
        %2773 = vmatpush2.bf16.msra.mxu0 0
        %2774 = vmatprep.subr.bf16.mxu0 0
        %2775 = vmatpush2.bf16.msra.mxu0 0
        %2776 = vmatprep.subr.bf16.mxu0 0
        %2777 = vmatpush2.bf16.msra.mxu0 0
        %2778 = vmatprep.mubr.bf16.mxu0 0
        %2779 = vmatmul.mubr.bf16.gmra.mxu0 %v2694
        %v2780 = vpop.f32.mrf.mxu0
        %v2781 = vadd.f32 0.0, %v2780
        %v2782 = vpop.f32.mrf.mxu0
        %v2783 = vpop.f32.mrf.mxu0
        %v2784 = vpop.f32.mrf.mxu0
        %2785 = vdwg.mxu0
        %v2786 = vadd.f32 %v2679, %v2740
        %v2787 = vadd.f32 %v2680, %v2742
        %v2788 = vadd.f32 %v2681, %v2781
        %s2789 = scalar_lea.vmem %s1, 96
        %v2790 = vld [vmem:[%s2789] sm:$0xf]
        %2791 = vrot.lane.b32.xlu0 %v229, 60
        %v2792 = vpop.permute.xlu0 %2791
        %2793 = vrot.lane.b32.xlu0 %v230, 60
        %v2794 = vpop.permute.xlu0 %2793
        %2795 = vrot.lane.b32.xlu0 %v231, 60
        %v2796 = vpop.permute.xlu0 %2795
        %vm2797 = vcmask 490496
        %v2798 = vsel %vm2797, %v2792, %v2794
        %v2799 = vsel %vm2797, %v2794, %v2796
        %v2801 = vsel %vm247, %v2790, 0
        %v2804 = vsel %vm251, %v2798, 0
        %v2807 = vsel %vm251, %v2799, 0
        %v2810 = vsel %vm251, %v2796, 0
        %2812 = vmatprep.subr.bf16.mxu0 0
        %2813 = vmatpush1.bf16.msra.mxu0 0
        %2814 = vmatprep.subr.bf16.mxu0 0
        %2815 = vmatpush1.bf16.msra.mxu0 0
        %2816 = vmatprep.subr.bf16.mxu0 0
        %2817 = vmatpush1.bf16.msra.mxu0 0
        %2818 = vmatprep.subr.bf16.mxu0 0
        %2819 = vmatpush1.bf16.msra.mxu0 0
        %2820 = vmatprep.subr.bf16.mxu0 0
        %2821 = vmatpush1.bf16.msra.mxu0 0
        %2822 = vmatprep.subr.bf16.mxu0 0
        %2823 = vmatpush1.bf16.msra.mxu0 0
        %2824 = vmatprep.subr.bf16.mxu0 0
        %2825 = vmatpush1.bf16.msra.mxu0 0
        %2826 = vmatprep.subr.bf16.mxu0 %v2807
        %2827 = vmatpush1.bf16.msra.mxu0 %v2804
        %2828 = vmatprep.subr.bf16.mxu0 0
        %2829 = vmatpush2.bf16.msra.mxu0 0
        %2830 = vmatprep.subr.bf16.mxu0 0
        %2831 = vmatpush2.bf16.msra.mxu0 0
        %2832 = vmatprep.subr.bf16.mxu0 0
        %2833 = vmatpush2.bf16.msra.mxu0 0
        %2834 = vmatprep.subr.bf16.mxu0 0
        %2835 = vmatpush2.bf16.msra.mxu0 0
        %2836 = vmatprep.subr.bf16.mxu0 0
        %2837 = vmatpush2.bf16.msra.mxu0 0
        %2838 = vmatprep.subr.bf16.mxu0 0
        %2839 = vmatpush2.bf16.msra.mxu0 0
        %2840 = vmatprep.subr.bf16.mxu0 0
        %2841 = vmatpush2.bf16.msra.mxu0 0
        %2842 = vmatprep.subr.bf16.mxu0 0
        %2843 = vmatpush2.bf16.msra.mxu0 0
        %2844 = vmatprep.mubr.bf16.mxu0 0
        %2845 = vmatmul.mubr.bf16.gmra.mxu0 %v2801
        %v2846 = vpop.f32.mrf.mxu0
        %v2847 = vadd.f32 0.0, %v2846
        %v2848 = vpop.f32.mrf.mxu0
        %v2849 = vadd.f32 0.0, %v2848
        %v2850 = vpop.f32.mrf.mxu0
        %v2851 = vpop.f32.mrf.mxu0
        %2852 = vdwg.mxu0
        %2853 = vmatprep.subr.bf16.mxu0 0
        %2854 = vmatpush1.bf16.msra.mxu0 0
        %2855 = vmatprep.subr.bf16.mxu0 0
        %2856 = vmatpush1.bf16.msra.mxu0 0
        %2857 = vmatprep.subr.bf16.mxu0 0
        %2858 = vmatpush1.bf16.msra.mxu0 0
        %2859 = vmatprep.subr.bf16.mxu0 0
        %2860 = vmatpush1.bf16.msra.mxu0 0
        %2861 = vmatprep.subr.bf16.mxu0 0
        %2862 = vmatpush1.bf16.msra.mxu0 0
        %2863 = vmatprep.subr.bf16.mxu0 0
        %2864 = vmatpush1.bf16.msra.mxu0 0
        %2865 = vmatprep.subr.bf16.mxu0 0
        %2866 = vmatpush1.bf16.msra.mxu0 0
        %2867 = vmatprep.subr.bf16.mxu0 0
        %2868 = vmatpush1.bf16.msra.mxu0 %v2810
        %2869 = vmatprep.subr.bf16.mxu0 0
        %2870 = vmatpush2.bf16.msra.mxu0 0
        %2871 = vmatprep.subr.bf16.mxu0 0
        %2872 = vmatpush2.bf16.msra.mxu0 0
        %2873 = vmatprep.subr.bf16.mxu0 0
        %2874 = vmatpush2.bf16.msra.mxu0 0
        %2875 = vmatprep.subr.bf16.mxu0 0
        %2876 = vmatpush2.bf16.msra.mxu0 0
        %2877 = vmatprep.subr.bf16.mxu0 0
        %2878 = vmatpush2.bf16.msra.mxu0 0
        %2879 = vmatprep.subr.bf16.mxu0 0
        %2880 = vmatpush2.bf16.msra.mxu0 0
        %2881 = vmatprep.subr.bf16.mxu0 0
        %2882 = vmatpush2.bf16.msra.mxu0 0
        %2883 = vmatprep.subr.bf16.mxu0 0
        %2884 = vmatpush2.bf16.msra.mxu0 0
        %2885 = vmatprep.mubr.bf16.mxu0 0
        %2886 = vmatmul.mubr.bf16.gmra.mxu0 %v2801
        %v2887 = vpop.f32.mrf.mxu0
        %v2888 = vadd.f32 0.0, %v2887
        %v2889 = vpop.f32.mrf.mxu0
        %v2890 = vpop.f32.mrf.mxu0
        %v2891 = vpop.f32.mrf.mxu0
        %2892 = vdwg.mxu0
        %v2893 = vadd.f32 %v2786, %v2847
        %v2894 = vadd.f32 %v2787, %v2849
        %v2895 = vadd.f32 %v2788, %v2888
        %v2896 = vld [vmem:[%s2] sm:$0xff]
        %2898 = vset.pattern.permute.xlu0 0
        %2899 = vperm.xlu0 %2898, %v2896
        %v2900 = vpop.permute.xlu0 %2899
        %v2902 = vadd.f32 %v2893, %v2900
        %v2903 = vadd.f32 %v2894, %v2900
        %v2904 = vadd.f32 %v2895, %v2900
        %v2905 = vmax.f32 %v2902, 0.0
        %v2906 = vmax.f32 %v2903, 0.0
        %v2907 = vmax.f32 %v2904, 0.0
        %v2908 = vpack.c.bf16 %v2905, %v2905
        %v2909 = vpack.c.bf16 %v2906, %v2906
        %v2910 = vpack.c.bf16 %v2907, %v2907
        %v2911 = vld [vmem:[%s3] sm:$0x3]
        %s2912 = scalar_lea.vmem %s3, 2
        %v2913 = vld [vmem:[%s2912] sm:$0x3]
        %2917 = vrot.lane.b32.xlu0 %v2908, 127
        %v2918 = vpop.permute.xlu0 %2917
        %2919 = vrot.lane.b32.xlu0 %v2909, 127
        %v2920 = vpop.permute.xlu0 %2919
        %2921 = vrot.lane.b32.xlu0 %v2910, 127
        %v2922 = vpop.permute.xlu0 %2921
        %v2923 = vsel %vm244, %v2918, %v2920
        %v2924 = vsel %vm244, %v2920, %v2922
        %v2926 = vsel %vm247, %v2913, 0
        %v2929 = vsel %vm251, %v2923, 0
        %v2932 = vsel %vm251, %v2924, 0
        %2934 = vmatprep.subr.bf16.mxu0 0
        %2935 = vmatpush1.bf16.msra.mxu0 0
        %2936 = vmatprep.subr.bf16.mxu0 0
        %2937 = vmatpush1.bf16.msra.mxu0 0
        %2938 = vmatprep.subr.bf16.mxu0 0
        %2939 = vmatpush1.bf16.msra.mxu0 0
        %2940 = vmatprep.subr.bf16.mxu0 0
        %2941 = vmatpush1.bf16.msra.mxu0 0
        %2942 = vmatprep.subr.bf16.mxu0 0
        %2943 = vmatpush1.bf16.msra.mxu0 0
        %2944 = vmatprep.subr.bf16.mxu0 0
        %2945 = vmatpush1.bf16.msra.mxu0 0
        %2946 = vmatprep.subr.bf16.mxu0 0
        %2947 = vmatpush1.bf16.msra.mxu0 0
        %2948 = vmatprep.subr.bf16.mxu0 %v2932
        %2949 = vmatpush1.bf16.msra.mxu0 %v2929
        %2950 = vmatprep.subr.bf16.mxu0 0
        %2951 = vmatpush2.bf16.msra.mxu0 0
        %2952 = vmatprep.subr.bf16.mxu0 0
        %2953 = vmatpush2.bf16.msra.mxu0 0
        %2954 = vmatprep.subr.bf16.mxu0 0
        %2955 = vmatpush2.bf16.msra.mxu0 0
        %2956 = vmatprep.subr.bf16.mxu0 0
        %2957 = vmatpush2.bf16.msra.mxu0 0
        %2958 = vmatprep.subr.bf16.mxu0 0
        %2959 = vmatpush2.bf16.msra.mxu0 0
        %2960 = vmatprep.subr.bf16.mxu0 0
        %2961 = vmatpush2.bf16.msra.mxu0 0
        %2962 = vmatprep.subr.bf16.mxu0 0
        %2963 = vmatpush2.bf16.msra.mxu0 0
        %2964 = vmatprep.subr.bf16.mxu0 0
        %2965 = vmatpush2.bf16.msra.mxu0 0
        %2966 = vmatprep.mubr.bf16.mxu0 0
        %2967 = vmatmul.mubr.bf16.gmra.mxu0 %v2926
        %v2968 = vpop.f32.mrf.mxu0
        %v2969 = vadd.f32 0.0, %v2968
        %v2970 = vpop.f32.mrf.mxu0
        %v2971 = vadd.f32 0.0, %v2970
        %v2972 = vpop.f32.mrf.mxu0
        %v2973 = vpop.f32.mrf.mxu0
        %2974 = vdwg.mxu0
        %v2976 = vsel %vm247, %v2911, 0
        %v2979 = vsel %vm251, %v2908, 0
        %v2982 = vsel %vm251, %v2909, 0
        %2984 = vmatprep.subr.bf16.mxu0 0
        %2985 = vmatpush1.bf16.msra.mxu0 0
        %2986 = vmatprep.subr.bf16.mxu0 0
        %2987 = vmatpush1.bf16.msra.mxu0 0
        %2988 = vmatprep.subr.bf16.mxu0 0
        %2989 = vmatpush1.bf16.msra.mxu0 0
        %2990 = vmatprep.subr.bf16.mxu0 0
        %2991 = vmatpush1.bf16.msra.mxu0 0
        %2992 = vmatprep.subr.bf16.mxu0 0
        %2993 = vmatpush1.bf16.msra.mxu0 0
        %2994 = vmatprep.subr.bf16.mxu0 0
        %2995 = vmatpush1.bf16.msra.mxu0 0
        %2996 = vmatprep.subr.bf16.mxu0 0
        %2997 = vmatpush1.bf16.msra.mxu0 0
        %2998 = vmatprep.subr.bf16.mxu0 %v2982
        %2999 = vmatpush1.bf16.msra.mxu0 %v2979
        %3000 = vmatprep.subr.bf16.mxu0 0
        %3001 = vmatpush2.bf16.msra.mxu0 0
        %3002 = vmatprep.subr.bf16.mxu0 0
        %3003 = vmatpush2.bf16.msra.mxu0 0
        %3004 = vmatprep.subr.bf16.mxu0 0
        %3005 = vmatpush2.bf16.msra.mxu0 0
        %3006 = vmatprep.subr.bf16.mxu0 0
        %3007 = vmatpush2.bf16.msra.mxu0 0
        %3008 = vmatprep.subr.bf16.mxu0 0
        %3009 = vmatpush2.bf16.msra.mxu0 0
        %3010 = vmatprep.subr.bf16.mxu0 0
        %3011 = vmatpush2.bf16.msra.mxu0 0
        %3012 = vmatprep.subr.bf16.mxu0 0
        %3013 = vmatpush2.bf16.msra.mxu0 0
        %3014 = vmatprep.subr.bf16.mxu0 0
        %3015 = vmatpush2.bf16.msra.mxu0 0
        %3016 = vmatprep.mubr.bf16.mxu0 0
        %3017 = vmatmul.mubr.bf16.gmra.mxu0 %v2976
        %v3018 = vpop.f32.mrf.mxu0
        %v3019 = vadd.f32 %v2969, %v3018
        %v3020 = vpop.f32.mrf.mxu0
        %v3021 = vadd.f32 %v2971, %v3020
        %v3022 = vpop.f32.mrf.mxu0
        %v3023 = vpop.f32.mrf.mxu0
        %3024 = vdwg.mxu0
        %s3025 = scalar_lea.vmem %s3, 4
        %v3026 = vld [vmem:[%s3025] sm:$0x3]
        %3027 = vrot.lane.b32.xlu0 %v2908, 126
        %v3028 = vpop.permute.xlu0 %3027
        %3029 = vrot.lane.b32.xlu0 %v2909, 126
        %v3030 = vpop.permute.xlu0 %3029
        %3031 = vrot.lane.b32.xlu0 %v2910, 126
        %v3032 = vpop.permute.xlu0 %3031
        %v3033 = vsel %vm443, %v3028, %v3030
        %v3034 = vsel %vm443, %v3030, %v3032
        %v3036 = vsel %vm247, %v3026, 0
        %v3039 = vsel %vm251, %v3033, 0
        %v3042 = vsel %vm251, %v3034, 0
        %3044 = vmatprep.subr.bf16.mxu0 0
        %3045 = vmatpush1.bf16.msra.mxu0 0
        %3046 = vmatprep.subr.bf16.mxu0 0
        %3047 = vmatpush1.bf16.msra.mxu0 0
        %3048 = vmatprep.subr.bf16.mxu0 0
        %3049 = vmatpush1.bf16.msra.mxu0 0
        %3050 = vmatprep.subr.bf16.mxu0 0
        %3051 = vmatpush1.bf16.msra.mxu0 0
        %3052 = vmatprep.subr.bf16.mxu0 0
        %3053 = vmatpush1.bf16.msra.mxu0 0
        %3054 = vmatprep.subr.bf16.mxu0 0
        %3055 = vmatpush1.bf16.msra.mxu0 0
        %3056 = vmatprep.subr.bf16.mxu0 0
        %3057 = vmatpush1.bf16.msra.mxu0 0
        %3058 = vmatprep.subr.bf16.mxu0 %v3042
        %3059 = vmatpush1.bf16.msra.mxu0 %v3039
        %3060 = vmatprep.subr.bf16.mxu0 0
        %3061 = vmatpush2.bf16.msra.mxu0 0
        %3062 = vmatprep.subr.bf16.mxu0 0
        %3063 = vmatpush2.bf16.msra.mxu0 0
        %3064 = vmatprep.subr.bf16.mxu0 0
        %3065 = vmatpush2.bf16.msra.mxu0 0
        %3066 = vmatprep.subr.bf16.mxu0 0
        %3067 = vmatpush2.bf16.msra.mxu0 0
        %3068 = vmatprep.subr.bf16.mxu0 0
        %3069 = vmatpush2.bf16.msra.mxu0 0
        %3070 = vmatprep.subr.bf16.mxu0 0
        %3071 = vmatpush2.bf16.msra.mxu0 0
        %3072 = vmatprep.subr.bf16.mxu0 0
        %3073 = vmatpush2.bf16.msra.mxu0 0
        %3074 = vmatprep.subr.bf16.mxu0 0
        %3075 = vmatpush2.bf16.msra.mxu0 0
        %3076 = vmatprep.mubr.bf16.mxu0 0
        %3077 = vmatmul.mubr.bf16.gmra.mxu0 %v3036
        %v3078 = vpop.f32.mrf.mxu0
        %v3079 = vadd.f32 0.0, %v3078
        %v3080 = vpop.f32.mrf.mxu0
        %v3081 = vadd.f32 0.0, %v3080
        %v3082 = vpop.f32.mrf.mxu0
        %v3083 = vpop.f32.mrf.mxu0
        %3084 = vdwg.mxu0
        %v3085 = vadd.f32 %v3019, %v3079
        %v3086 = vadd.f32 %v3021, %v3081
        %s3087 = scalar_lea.vmem %s3, 6
        %v3088 = vld [vmem:[%s3087] sm:$0x3]
        %3089 = vrot.lane.b32.xlu0 %v2908, 112
        %v3090 = vpop.permute.xlu0 %3089
        %3091 = vrot.lane.b32.xlu0 %v2909, 112
        %v3092 = vpop.permute.xlu0 %3091
        %3093 = vrot.lane.b32.xlu0 %v2910, 112
        %v3094 = vpop.permute.xlu0 %3093
        %v3095 = vsel %vm764, %v3090, %v3092
        %v3096 = vsel %vm764, %v3092, %v3094
        %v3098 = vsel %vm247, %v3088, 0
        %v3101 = vsel %vm251, %v3095, 0
        %v3104 = vsel %vm251, %v3096, 0
        %3106 = vmatprep.subr.bf16.mxu0 0
        %3107 = vmatpush1.bf16.msra.mxu0 0
        %3108 = vmatprep.subr.bf16.mxu0 0
        %3109 = vmatpush1.bf16.msra.mxu0 0
        %3110 = vmatprep.subr.bf16.mxu0 0
        %3111 = vmatpush1.bf16.msra.mxu0 0
        %3112 = vmatprep.subr.bf16.mxu0 0
        %3113 = vmatpush1.bf16.msra.mxu0 0
        %3114 = vmatprep.subr.bf16.mxu0 0
        %3115 = vmatpush1.bf16.msra.mxu0 0
        %3116 = vmatprep.subr.bf16.mxu0 0
        %3117 = vmatpush1.bf16.msra.mxu0 0
        %3118 = vmatprep.subr.bf16.mxu0 0
        %3119 = vmatpush1.bf16.msra.mxu0 0
        %3120 = vmatprep.subr.bf16.mxu0 %v3104
        %3121 = vmatpush1.bf16.msra.mxu0 %v3101
        %3122 = vmatprep.subr.bf16.mxu0 0
        %3123 = vmatpush2.bf16.msra.mxu0 0
        %3124 = vmatprep.subr.bf16.mxu0 0
        %3125 = vmatpush2.bf16.msra.mxu0 0
        %3126 = vmatprep.subr.bf16.mxu0 0
        %3127 = vmatpush2.bf16.msra.mxu0 0
        %3128 = vmatprep.subr.bf16.mxu0 0
        %3129 = vmatpush2.bf16.msra.mxu0 0
        %3130 = vmatprep.subr.bf16.mxu0 0
        %3131 = vmatpush2.bf16.msra.mxu0 0
        %3132 = vmatprep.subr.bf16.mxu0 0
        %3133 = vmatpush2.bf16.msra.mxu0 0
        %3134 = vmatprep.subr.bf16.mxu0 0
        %3135 = vmatpush2.bf16.msra.mxu0 0
        %3136 = vmatprep.subr.bf16.mxu0 0
        %3137 = vmatpush2.bf16.msra.mxu0 0
        %3138 = vmatprep.mubr.bf16.mxu0 0
        %3139 = vmatmul.mubr.bf16.gmra.mxu0 %v3098
        %v3140 = vpop.f32.mrf.mxu0
        %v3141 = vadd.f32 0.0, %v3140
        %v3142 = vpop.f32.mrf.mxu0
        %v3143 = vadd.f32 0.0, %v3142
        %v3144 = vpop.f32.mrf.mxu0
        %v3145 = vpop.f32.mrf.mxu0
        %3146 = vdwg.mxu0
        %v3147 = vadd.f32 %v3085, %v3141
        %v3148 = vadd.f32 %v3086, %v3143
        %s3149 = scalar_lea.vmem %s3, 8
        %v3150 = vld [vmem:[%s3149] sm:$0x3]
        %3151 = vrot.lane.b32.xlu0 %v2908, 111
        %v3152 = vpop.permute.xlu0 %3151
        %3153 = vrot.lane.b32.xlu0 %v2909, 111
        %v3154 = vpop.permute.xlu0 %3153
        %3155 = vrot.lane.b32.xlu0 %v2910, 111
        %v3156 = vpop.permute.xlu0 %3155
        %v3157 = vsel %vm871, %v3152, %v3154
        %v3158 = vsel %vm871, %v3154, %v3156
        %v3160 = vsel %vm247, %v3150, 0
        %v3163 = vsel %vm251, %v3157, 0
        %v3166 = vsel %vm251, %v3158, 0
        %3168 = vmatprep.subr.bf16.mxu0 0
        %3169 = vmatpush1.bf16.msra.mxu0 0
        %3170 = vmatprep.subr.bf16.mxu0 0
        %3171 = vmatpush1.bf16.msra.mxu0 0
        %3172 = vmatprep.subr.bf16.mxu0 0
        %3173 = vmatpush1.bf16.msra.mxu0 0
        %3174 = vmatprep.subr.bf16.mxu0 0
        %3175 = vmatpush1.bf16.msra.mxu0 0
        %3176 = vmatprep.subr.bf16.mxu0 0
        %3177 = vmatpush1.bf16.msra.mxu0 0
        %3178 = vmatprep.subr.bf16.mxu0 0
        %3179 = vmatpush1.bf16.msra.mxu0 0
        %3180 = vmatprep.subr.bf16.mxu0 0
        %3181 = vmatpush1.bf16.msra.mxu0 0
        %3182 = vmatprep.subr.bf16.mxu0 %v3166
        %3183 = vmatpush1.bf16.msra.mxu0 %v3163
        %3184 = vmatprep.subr.bf16.mxu0 0
        %3185 = vmatpush2.bf16.msra.mxu0 0
        %3186 = vmatprep.subr.bf16.mxu0 0
        %3187 = vmatpush2.bf16.msra.mxu0 0
        %3188 = vmatprep.subr.bf16.mxu0 0
        %3189 = vmatpush2.bf16.msra.mxu0 0
        %3190 = vmatprep.subr.bf16.mxu0 0
        %3191 = vmatpush2.bf16.msra.mxu0 0
        %3192 = vmatprep.subr.bf16.mxu0 0
        %3193 = vmatpush2.bf16.msra.mxu0 0
        %3194 = vmatprep.subr.bf16.mxu0 0
        %3195 = vmatpush2.bf16.msra.mxu0 0
        %3196 = vmatprep.subr.bf16.mxu0 0
        %3197 = vmatpush2.bf16.msra.mxu0 0
        %3198 = vmatprep.subr.bf16.mxu0 0
        %3199 = vmatpush2.bf16.msra.mxu0 0
        %3200 = vmatprep.mubr.bf16.mxu0 0
        %3201 = vmatmul.mubr.bf16.gmra.mxu0 %v3160
        %v3202 = vpop.f32.mrf.mxu0
        %v3203 = vadd.f32 0.0, %v3202
        %v3204 = vpop.f32.mrf.mxu0
        %v3205 = vadd.f32 0.0, %v3204
        %v3206 = vpop.f32.mrf.mxu0
        %v3207 = vpop.f32.mrf.mxu0
        %3208 = vdwg.mxu0
        %v3209 = vadd.f32 %v3147, %v3203
        %v3210 = vadd.f32 %v3148, %v3205
        %s3211 = scalar_lea.vmem %s3, 10
        %v3212 = vld [vmem:[%s3211] sm:$0x3]
        %3213 = vrot.lane.b32.xlu0 %v2908, 110
        %v3214 = vpop.permute.xlu0 %3213
        %3215 = vrot.lane.b32.xlu0 %v2909, 110
        %v3216 = vpop.permute.xlu0 %3215
        %3217 = vrot.lane.b32.xlu0 %v2910, 110
        %v3218 = vpop.permute.xlu0 %3217
        %v3219 = vsel %vm978, %v3214, %v3216
        %v3220 = vsel %vm978, %v3216, %v3218
        %v3222 = vsel %vm247, %v3212, 0
        %v3225 = vsel %vm251, %v3219, 0
        %v3228 = vsel %vm251, %v3220, 0
        %3230 = vmatprep.subr.bf16.mxu0 0
        %3231 = vmatpush1.bf16.msra.mxu0 0
        %3232 = vmatprep.subr.bf16.mxu0 0
        %3233 = vmatpush1.bf16.msra.mxu0 0
        %3234 = vmatprep.subr.bf16.mxu0 0
        %3235 = vmatpush1.bf16.msra.mxu0 0
        %3236 = vmatprep.subr.bf16.mxu0 0
        %3237 = vmatpush1.bf16.msra.mxu0 0
        %3238 = vmatprep.subr.bf16.mxu0 0
        %3239 = vmatpush1.bf16.msra.mxu0 0
        %3240 = vmatprep.subr.bf16.mxu0 0
        %3241 = vmatpush1.bf16.msra.mxu0 0
        %3242 = vmatprep.subr.bf16.mxu0 0
        %3243 = vmatpush1.bf16.msra.mxu0 0
        %3244 = vmatprep.subr.bf16.mxu0 %v3228
        %3245 = vmatpush1.bf16.msra.mxu0 %v3225
        %3246 = vmatprep.subr.bf16.mxu0 0
        %3247 = vmatpush2.bf16.msra.mxu0 0
        %3248 = vmatprep.subr.bf16.mxu0 0
        %3249 = vmatpush2.bf16.msra.mxu0 0
        %3250 = vmatprep.subr.bf16.mxu0 0
        %3251 = vmatpush2.bf16.msra.mxu0 0
        %3252 = vmatprep.subr.bf16.mxu0 0
        %3253 = vmatpush2.bf16.msra.mxu0 0
        %3254 = vmatprep.subr.bf16.mxu0 0
        %3255 = vmatpush2.bf16.msra.mxu0 0
        %3256 = vmatprep.subr.bf16.mxu0 0
        %3257 = vmatpush2.bf16.msra.mxu0 0
        %3258 = vmatprep.subr.bf16.mxu0 0
        %3259 = vmatpush2.bf16.msra.mxu0 0
        %3260 = vmatprep.subr.bf16.mxu0 0
        %3261 = vmatpush2.bf16.msra.mxu0 0
        %3262 = vmatprep.mubr.bf16.mxu0 0
        %3263 = vmatmul.mubr.bf16.gmra.mxu0 %v3222
        %v3264 = vpop.f32.mrf.mxu0
        %v3265 = vadd.f32 0.0, %v3264
        %v3266 = vpop.f32.mrf.mxu0
        %v3267 = vadd.f32 0.0, %v3266
        %v3268 = vpop.f32.mrf.mxu0
        %v3269 = vpop.f32.mrf.mxu0
        %3270 = vdwg.mxu0
        %v3271 = vadd.f32 %v3209, %v3265
        %v3272 = vadd.f32 %v3210, %v3267
        %s3273 = scalar_lea.vmem %s3, 12
        %v3274 = vld [vmem:[%s3273] sm:$0x3]
        %3275 = vrot.lane.b32.xlu0 %v2908, 96
        %v3276 = vpop.permute.xlu0 %3275
        %3277 = vrot.lane.b32.xlu0 %v2909, 96
        %v3278 = vpop.permute.xlu0 %3277
        %3279 = vrot.lane.b32.xlu0 %v2910, 96
        %v3280 = vpop.permute.xlu0 %3279
        %v3281 = vsel %vm1299, %v3276, %v3278
        %v3282 = vsel %vm1299, %v3278, %v3280
        %v3284 = vsel %vm247, %v3274, 0
        %v3287 = vsel %vm251, %v3281, 0
        %v3290 = vsel %vm251, %v3282, 0
        %3292 = vmatprep.subr.bf16.mxu0 0
        %3293 = vmatpush1.bf16.msra.mxu0 0
        %3294 = vmatprep.subr.bf16.mxu0 0
        %3295 = vmatpush1.bf16.msra.mxu0 0
        %3296 = vmatprep.subr.bf16.mxu0 0
        %3297 = vmatpush1.bf16.msra.mxu0 0
        %3298 = vmatprep.subr.bf16.mxu0 0
        %3299 = vmatpush1.bf16.msra.mxu0 0
        %3300 = vmatprep.subr.bf16.mxu0 0
        %3301 = vmatpush1.bf16.msra.mxu0 0
        %3302 = vmatprep.subr.bf16.mxu0 0
        %3303 = vmatpush1.bf16.msra.mxu0 0
        %3304 = vmatprep.subr.bf16.mxu0 0
        %3305 = vmatpush1.bf16.msra.mxu0 0
        %3306 = vmatprep.subr.bf16.mxu0 %v3290
        %3307 = vmatpush1.bf16.msra.mxu0 %v3287
        %3308 = vmatprep.subr.bf16.mxu0 0
        %3309 = vmatpush2.bf16.msra.mxu0 0
        %3310 = vmatprep.subr.bf16.mxu0 0
        %3311 = vmatpush2.bf16.msra.mxu0 0
        %3312 = vmatprep.subr.bf16.mxu0 0
        %3313 = vmatpush2.bf16.msra.mxu0 0
        %3314 = vmatprep.subr.bf16.mxu0 0
        %3315 = vmatpush2.bf16.msra.mxu0 0
        %3316 = vmatprep.subr.bf16.mxu0 0
        %3317 = vmatpush2.bf16.msra.mxu0 0
        %3318 = vmatprep.subr.bf16.mxu0 0
        %3319 = vmatpush2.bf16.msra.mxu0 0
        %3320 = vmatprep.subr.bf16.mxu0 0
        %3321 = vmatpush2.bf16.msra.mxu0 0
        %3322 = vmatprep.subr.bf16.mxu0 0
        %3323 = vmatpush2.bf16.msra.mxu0 0
        %3324 = vmatprep.mubr.bf16.mxu0 0
        %3325 = vmatmul.mubr.bf16.gmra.mxu0 %v3284
        %v3326 = vpop.f32.mrf.mxu0
        %v3327 = vadd.f32 0.0, %v3326
        %v3328 = vpop.f32.mrf.mxu0
        %v3329 = vadd.f32 0.0, %v3328
        %v3330 = vpop.f32.mrf.mxu0
        %v3331 = vpop.f32.mrf.mxu0
        %3332 = vdwg.mxu0
        %v3333 = vadd.f32 %v3271, %v3327
        %v3334 = vadd.f32 %v3272, %v3329
        %s3335 = scalar_lea.vmem %s3, 14
        %v3336 = vld [vmem:[%s3335] sm:$0x3]
        %3337 = vrot.lane.b32.xlu0 %v2908, 95
        %v3338 = vpop.permute.xlu0 %3337
        %3339 = vrot.lane.b32.xlu0 %v2909, 95
        %v3340 = vpop.permute.xlu0 %3339
        %3341 = vrot.lane.b32.xlu0 %v2910, 95
        %v3342 = vpop.permute.xlu0 %3341
        %v3343 = vsel %vm1406, %v3338, %v3340
        %v3344 = vsel %vm1406, %v3340, %v3342
        %v3346 = vsel %vm247, %v3336, 0
        %v3349 = vsel %vm251, %v3343, 0
        %v3352 = vsel %vm251, %v3344, 0
        %3354 = vmatprep.subr.bf16.mxu0 0
        %3355 = vmatpush1.bf16.msra.mxu0 0
        %3356 = vmatprep.subr.bf16.mxu0 0
        %3357 = vmatpush1.bf16.msra.mxu0 0
        %3358 = vmatprep.subr.bf16.mxu0 0
        %3359 = vmatpush1.bf16.msra.mxu0 0
        %3360 = vmatprep.subr.bf16.mxu0 0
        %3361 = vmatpush1.bf16.msra.mxu0 0
        %3362 = vmatprep.subr.bf16.mxu0 0
        %3363 = vmatpush1.bf16.msra.mxu0 0
        %3364 = vmatprep.subr.bf16.mxu0 0
        %3365 = vmatpush1.bf16.msra.mxu0 0
        %3366 = vmatprep.subr.bf16.mxu0 0
        %3367 = vmatpush1.bf16.msra.mxu0 0
        %3368 = vmatprep.subr.bf16.mxu0 %v3352
        %3369 = vmatpush1.bf16.msra.mxu0 %v3349
        %3370 = vmatprep.subr.bf16.mxu0 0
        %3371 = vmatpush2.bf16.msra.mxu0 0
        %3372 = vmatprep.subr.bf16.mxu0 0
        %3373 = vmatpush2.bf16.msra.mxu0 0
        %3374 = vmatprep.subr.bf16.mxu0 0
        %3375 = vmatpush2.bf16.msra.mxu0 0
        %3376 = vmatprep.subr.bf16.mxu0 0
        %3377 = vmatpush2.bf16.msra.mxu0 0
        %3378 = vmatprep.subr.bf16.mxu0 0
        %3379 = vmatpush2.bf16.msra.mxu0 0
        %3380 = vmatprep.subr.bf16.mxu0 0
        %3381 = vmatpush2.bf16.msra.mxu0 0
        %3382 = vmatprep.subr.bf16.mxu0 0
        %3383 = vmatpush2.bf16.msra.mxu0 0
        %3384 = vmatprep.subr.bf16.mxu0 0
        %3385 = vmatpush2.bf16.msra.mxu0 0
        %3386 = vmatprep.mubr.bf16.mxu0 0
        %3387 = vmatmul.mubr.bf16.gmra.mxu0 %v3346
        %v3388 = vpop.f32.mrf.mxu0
        %v3389 = vadd.f32 0.0, %v3388
        %v3390 = vpop.f32.mrf.mxu0
        %v3391 = vadd.f32 0.0, %v3390
        %v3392 = vpop.f32.mrf.mxu0
        %v3393 = vpop.f32.mrf.mxu0
        %3394 = vdwg.mxu0
        %v3395 = vadd.f32 %v3333, %v3389
        %v3396 = vadd.f32 %v3334, %v3391
        %s3397 = scalar_lea.vmem %s3, 16
        %v3398 = vld [vmem:[%s3397] sm:$0x3]
        %3399 = vrot.lane.b32.xlu0 %v2908, 94
        %v3400 = vpop.permute.xlu0 %3399
        %3401 = vrot.lane.b32.xlu0 %v2909, 94
        %v3402 = vpop.permute.xlu0 %3401
        %3403 = vrot.lane.b32.xlu0 %v2910, 94
        %v3404 = vpop.permute.xlu0 %3403
        %v3405 = vsel %vm1513, %v3400, %v3402
        %v3406 = vsel %vm1513, %v3402, %v3404
        %v3408 = vsel %vm247, %v3398, 0
        %v3411 = vsel %vm251, %v3405, 0
        %v3414 = vsel %vm251, %v3406, 0
        %3416 = vmatprep.subr.bf16.mxu0 0
        %3417 = vmatpush1.bf16.msra.mxu0 0
        %3418 = vmatprep.subr.bf16.mxu0 0
        %3419 = vmatpush1.bf16.msra.mxu0 0
        %3420 = vmatprep.subr.bf16.mxu0 0
        %3421 = vmatpush1.bf16.msra.mxu0 0
        %3422 = vmatprep.subr.bf16.mxu0 0
        %3423 = vmatpush1.bf16.msra.mxu0 0
        %3424 = vmatprep.subr.bf16.mxu0 0
        %3425 = vmatpush1.bf16.msra.mxu0 0
        %3426 = vmatprep.subr.bf16.mxu0 0
        %3427 = vmatpush1.bf16.msra.mxu0 0
        %3428 = vmatprep.subr.bf16.mxu0 0
        %3429 = vmatpush1.bf16.msra.mxu0 0
        %3430 = vmatprep.subr.bf16.mxu0 %v3414
        %3431 = vmatpush1.bf16.msra.mxu0 %v3411
        %3432 = vmatprep.subr.bf16.mxu0 0
        %3433 = vmatpush2.bf16.msra.mxu0 0
        %3434 = vmatprep.subr.bf16.mxu0 0
        %3435 = vmatpush2.bf16.msra.mxu0 0
        %3436 = vmatprep.subr.bf16.mxu0 0
        %3437 = vmatpush2.bf16.msra.mxu0 0
        %3438 = vmatprep.subr.bf16.mxu0 0
        %3439 = vmatpush2.bf16.msra.mxu0 0
        %3440 = vmatprep.subr.bf16.mxu0 0
        %3441 = vmatpush2.bf16.msra.mxu0 0
        %3442 = vmatprep.subr.bf16.mxu0 0
        %3443 = vmatpush2.bf16.msra.mxu0 0
        %3444 = vmatprep.subr.bf16.mxu0 0
        %3445 = vmatpush2.bf16.msra.mxu0 0
        %3446 = vmatprep.subr.bf16.mxu0 0
        %3447 = vmatpush2.bf16.msra.mxu0 0
        %3448 = vmatprep.mubr.bf16.mxu0 0
        %3449 = vmatmul.mubr.bf16.gmra.mxu0 %v3408
        %v3450 = vpop.f32.mrf.mxu0
        %v3451 = vadd.f32 0.0, %v3450
        %v3452 = vpop.f32.mrf.mxu0
        %v3453 = vadd.f32 0.0, %v3452
        %v3454 = vpop.f32.mrf.mxu0
        %v3455 = vpop.f32.mrf.mxu0
        %3456 = vdwg.mxu0
        %v3457 = vadd.f32 %v3395, %v3451
        %v3458 = vadd.f32 %v3396, %v3453
        %v3459 = vld [vmem:[%s4] sm:$0xf]
        %3461 = vset.pattern.permute.xlu0 0
        %3462 = vperm.xlu0 %3461, %v3459
        %v3463 = vpop.permute.xlu0 %3462
        %v3465 = vadd.f32 %v3457, %v3463
        %v3466 = vadd.f32 %v3458, %v3463
        %v3469 = vrot.slane %v2902, 4
        %v3470 = vrot.slane %v2903, 4
        %v3473 = vadd.f32 %v3465, %v3469
        %v3474 = vadd.f32 %v3466, %v3470
        %v3475 = vmax.f32 %v3473, 0.0
        %v3476 = vmax.f32 %v3474, 0.0
        %v3479 = vcombine.low %v3475, %v3476
        %3481 = vst [vmem:[%s217] sm:$0xff] %v3479
        %s3482 = sand.u32 %s137, 1
        %s3483 = scalar_lea.sflag [#allocation3], %s3482
        %s3484 = sand.u32 %s137, 1
        %s3485 = smul.addr %s3484, 8
        %s3486 = scalar_lea.vmem [#allocation2], %s3485
        // Predicated region
        $region41: #{tpu_custom_call.1} parent=39 // pred_check
          %p3487 = pneg %p147
        $region42: #{tpu_custom_call.1} parent=39 // pred_check_branch
          %3489 = sbr.rel (%p3487) target = $region44
        $region43: #{tpu_custom_call.1} parent=39 // pred_region
          %s3491 = ssub.s32 128, 128
          %3492 = vsyncadd %s3483, %s3491
          %s3493 = smul.addr %s19, 2
          %s3494 = smul.addr %s3493, 64
          %s3495 = scalar_lea.hbm %s5, %s3494
          %s3497 = sshll.u32 %s3486, 4
          %s3498 = int_to_ptr.vmem [resolvable:$true] %s3497
          %3500 = dma.vmem_to_hbm [thread:$0]  %s3498, 128, %s3495, %s3483
        $region44: #{tpu_custom_call.1} parent=39 // pred_fallthru
          _
      $region40: #{tpu_custom_call.1} parent=5 // pred_fallthru
        _
      %p3501 = scmp.le.s32.totalorder 2, %s14
      // Predicated region
      $region45: #{tpu_custom_call.1} parent=5 // pred_check
        %p3502 = pneg %p3501
      $region46: #{tpu_custom_call.1} parent=5 // pred_check_branch
        %3504 = sbr.rel (%p3502) target = $region48
      $region47: #{tpu_custom_call.1} parent=5 // pred_region
        %s3505 = ssub.s32 %s14, 2
        // Predicated region
        $region49: #{tpu_custom_call.1} parent=47 // pred_check
          %p3506 = pneg %p153
        $region50: #{tpu_custom_call.1} parent=47 // pred_check_branch
          %3508 = sbr.rel (%p3506) target = $region52
        $region51: #{tpu_custom_call.1} parent=47 // pred_region
          %s3509 = sand.u32 %s138, 1
          %s3510 = scalar_lea.sflag [#allocation3], %s3509
          %s3511 = sand.u32 %s138, 1
          %s3512 = smul.addr %s3511, 8
          %s3513 = scalar_lea.vmem [#allocation2], %s3512
          %3514 = dma.done %s3510, 128
        $region52: #{tpu_custom_call.1} parent=47 // pred_fallthru
          _
      $region48: #{tpu_custom_call.1} parent=5 // pred_fallthru
        _
    $region6: #{tpu_custom_call.1} parent=1 // loop_footer
      %s18 = sadd.s32 1, %s14
    $region7: #{tpu_custom_call.1} parent=1 // loop_footer_branch
      %13 = sbr.rel target = $region3
    $region8: #{tpu_custom_call.1} parent=1 // loop_exit
      _
    %3515 = vsyncpa [#allocation3], 1
    %s3516 = scalar_lea.sflag [#allocation3], 1
    %3517 = vsyncpa %s3516, 1

</llo_original>
